<compile_context>
chip_gen: v7x
topology: tpu7x:2x2x1
jax: 0.10.0
libtpu: 0.0.40
codegen_flags: <defaults>
</compile_context>

<pallas_src>
import functools

import jax
import jax.numpy as jnp
from jax import lax
from jax.experimental import pallas as pl
from jax.experimental.pallas import tpu as pltpu

BN_EPS = 1e-5
SUB = 8  # sublane group; each conv tap occupies SUB rows so the per-chunk concat is tile-aligned


def _conv_bn_sub_relu_kernel(x_ref, w_ref, gamma_ref, beta_ref, o_ref, buf_ref,
                             *, width, chunk):
    """Fused Conv2d(3x3, stride 1, pad 1) + BatchNorm(batch stats) + (x - 2) + ReLU.

    x_ref:     (Cin, H*W)            input, pre-flattened (N == 1 folded out)
    w_ref:     (Cout, 9*SUB)         tap-major weights; tap t uses columns [t*SUB, t*SUB+Cin)
    gamma_ref: (Cout, 1)             BN weight
    beta_ref:  (Cout, 1)             BN bias
    o_ref:     (Cout, H*W)           output (lane-dense); also holds raw conv between passes
    buf_ref:   (SUB, 2*MARGIN+H*W)   zero-margined flat copy of x (scratch)
    """
    Cin, HW = x_ref.shape
    Cout = o_ref.shape[0]
    LBUF = buf_ref.shape[1]
    MARGIN = (LBUF - HW) // 2
    n_chunks = HW // chunk

    # ---- stage input: zero ONLY the margins + unused sublane rows (trimmed zero-fill) ----
    buf_ref[:, 0:MARGIN] = jnp.zeros((SUB, MARGIN), jnp.float32)
    buf_ref[:, MARGIN + HW:LBUF] = jnp.zeros((SUB, MARGIN), jnp.float32)
    buf_ref[0:Cin, MARGIN:MARGIN + HW] = x_ref[...]                       # data rows
    buf_ref[Cin:SUB, MARGIN:MARGIN + HW] = jnp.zeros((SUB - Cin, HW), jnp.float32)

    # ---- column masks for dx = +/-1 taps (chunk % width == 0 => identical for every chunk) ----
    col = lax.broadcasted_iota(jnp.int32, (SUB, chunk), 1)
    if (width & (width - 1)) == 0:
        cmod = col & (width - 1)       # cheap path, width is a power of two here
    else:
        cmod = col % width             # generic fallback
    mask_l = cmod > 0                  # valid output lanes for kx == -1 taps
    mask_r = cmod < (width - 1)        # valid output lanes for kx == +1 taps

    w72 = w_ref[...]                   # (Cout, 72), hoisted once

    # ---- pass 1: conv (single K=72 MXU dot per chunk) + one-pass BN statistics ----
    s_acc = jnp.zeros((Cout, 1), jnp.float32)
    q_acc = jnp.zeros((Cout, 1), jnp.float32)
    for c in range(n_chunks):
        base = MARGIN + c * chunk
        taps = []
        for t in range(9):
            dy, dx = t // 3 - 1, t % 3 - 1
            start = base + dy * width + dx
            tap = buf_ref[:, start:start + chunk]      # (SUB, chunk); dy OOB rows hit zero margins
            if dx == 1:
                tap = jnp.where(mask_r, tap, 0.0)
            elif dx == -1:
                tap = jnp.where(mask_l, tap, 0.0)
            taps.append(tap)
        # tile-aligned (8-row) pieces -> value-level concat, no VMEM round trip
        patch = jnp.concatenate(taps, axis=0)          # (72, chunk)
        acc = jnp.dot(w72, patch, preferred_element_type=jnp.float32)     # (Cout, chunk)
        s_acc = s_acc + jnp.sum(acc, axis=1, keepdims=True)
        q_acc = q_acc + jnp.sum(acc * acc, axis=1, keepdims=True)
        o_ref[:, c * chunk:(c + 1) * chunk] = acc      # raw conv; normalized in pass 2

    # ---- BatchNorm (training-mode batch statistics) + (-2.0) + ReLU, fully folded ----
    # Conv bias cancels exactly: (conv+b) - mean(conv+b) == conv - mean(conv); var unchanged.
    inv_cnt = 1.0 / HW
    mean = s_acc * inv_cnt
    var = q_acc * inv_cnt - mean * mean
    scale = gamma_ref[...] * lax.rsqrt(var + BN_EPS)          # (Cout, 1)
    shift = beta_ref[...] - 2.0 - mean * scale                # (Cout, 1), mean folded in
    scale_b = jnp.broadcast_to(scale, (Cout, chunk))          # hoisted broadcasts
    shift_b = jnp.broadcast_to(shift, (Cout, chunk))
    for c in range(n_chunks):
        acc = o_ref[:, c * chunk:(c + 1) * chunk]
        o_ref[:, c * chunk:(c + 1) * chunk] = jnp.maximum(acc * scale_b + shift_b, 0.0)


@jax.jit
def conv_bn_sub_relu(x_nchw, w_oihw, bias, gamma, beta):
    """NCHW in / NCHW out wrapper around the fused Pallas kernel (N must be 1)."""
    N, Cin, H, W = x_nchw.shape
    Cout = w_oihw.shape[0]
    assert N == 1, "kernel handles N == 1 (module spec); TODO(synk): grid over batch for N > 1"
    assert Cin <= SUB
    HW = H * W
    assert HW % 128 == 0, "lane-dense layout assumes H*W is a multiple of 128"
    MARGIN = -(-(W + 1) // 128) * 128          # >= W + 1, lane-tile aligned
    LBUF = 2 * MARGIN + HW

    # lane-chunk size: multiple of W (mask reuse) and divisor of HW; fallback = whole row span
    chunk = HW
    for cand in (512, 256, 128):
        if HW % cand == 0 and cand % W == 0:
            chunk = cand
            break

    x_flat = x_nchw.reshape(Cin, HW).astype(jnp.float32)        # free bitcast (contiguous NCHW)
    # (Cout, Cin, 3, 3) -> (Cout, ky, kx, Cin) -> pad Cin -> SUB -> (Cout, 72)   [tiny HLO]
    w_t = jnp.transpose(w_oihw.astype(jnp.float32), (0, 2, 3, 1))
    w72 = jnp.pad(w_t, ((0, 0), (0, 0), (0, 0), (0, SUB - Cin))).reshape(Cout, 9 * SUB)
    g2 = gamma.reshape(Cout, 1).astype(jnp.float32)
    b2 = beta.reshape(Cout, 1).astype(jnp.float32)
    _ = bias  # conv bias cancels exactly under training-mode batch norm (see kernel comment)

    kernel = functools.partial(_conv_bn_sub_relu_kernel, width=W, chunk=chunk)
    out = pl.pallas_call(
        kernel,
        out_shape=jax.ShapeDtypeStruct((Cout, HW), jnp.float32),
        in_specs=[pl.BlockSpec(memory_space=pltpu.MemorySpace.VMEM)] * 4,
        out_specs=pl.BlockSpec(memory_space=pltpu.MemorySpace.VMEM),
        scratch_shapes=[
            pltpu.VMEM((SUB, LBUF), jnp.float32),      # zero-margined flat input buffer
        ],
    )(x_flat, w72, g2, b2)

    return out.reshape(N, Cout, H, W)                  # pure reshape, no transpose HLO


def reference_jax(x_nchw, w_oihw, bias, gamma, beta):
    """Pure-JAX reference for correctness checking (includes the conv bias explicitly)."""
    y = lax.conv_general_dilated(
        x_nchw.astype(jnp.float32), w_oihw.astype(jnp.float32),
        window_strides=(1, 1), padding=((1, 1), (1, 1)),
        dimension_numbers=("NCHW", "OIHW", "NCHW"))
    y = y + bias.reshape(1, -1, 1, 1)
    mean = jnp.mean(y, axis=(0, 2, 3), keepdims=True)
    var = jnp.mean((y - mean) ** 2, axis=(0, 2, 3), keepdims=True)
    y = (y - mean) * lax.rsqrt(var + BN_EPS)
    y = y * gamma.reshape(1, -1, 1, 1) + beta.reshape(1, -1, 1, 1)
    return jnp.maximum(y - 2.0, 0.0)


if __name__ == "__main__":
    key = jax.random.PRNGKey(0)
    k_x, k_w, k_b = jax.random.split(key, 3)

    # Shapes implied by the module: x1 = torch.randn(1, 3, 64, 64), Conv2d(3, 8, 3, padding=1)
    N, Cin, H, W = 1, 3, 64, 64
    Cout, K = 8, 3

    x = jax.random.normal(k_x, (N, Cin, H, W), dtype=jnp.float32)

    fan_in = Cin * K * K
    bound = 1.0 / (fan_in ** 0.5)
    w = jax.random.uniform(k_w, (Cout, Cin, K, K), minval=-bound, maxval=bound,
                           dtype=jnp.float32)
    b = jax.random.uniform(k_b, (Cout,), minval=-bound, maxval=bound, dtype=jnp.float32)
    gamma = jnp.ones((Cout,), dtype=jnp.float32)   # BatchNorm2d weight init
    beta = jnp.zeros((Cout,), dtype=jnp.float32)   # BatchNorm2d bias init

    out = jax.block_until_ready(conv_bn_sub_relu(x, w, b, gamma, beta))
    ref = jax.block_until_ready(reference_jax(x, w, b, gamma, beta))

    assert out.shape == (N, Cout, H, W), out.shape
    max_err = float(jnp.max(jnp.abs(out - ref)))
    assert jnp.allclose(out, ref, atol=1e-4, rtol=1e-4), max_err

    print("KERNEL_OK")
</pallas_src>

<mosaic_0001>
module attributes {stable_mosaic.version = 11 : i64} {
  func.func @_conv_bn_sub_relu_kernel(%arg0: memref<3x4096xf32, #tpu.memory_space<vmem>>, %arg1: memref<8x72xf32, #tpu.memory_space<vmem>>, %arg2: memref<8x1xf32, #tpu.memory_space<vmem>>, %arg3: memref<8x1xf32, #tpu.memory_space<vmem>>, %arg4: memref<8x4096xf32, #tpu.memory_space<vmem>>, %arg5: memref<8x4352xf32, #tpu.memory_space<vmem>>) attributes {dimension_semantics = [], scalar_prefetch = 0 : i64, scratch_operands = 1 : i64, tpu.core_type = #tpu.core_type<tc>} {
    %cst = arith.constant 0.000000e+00 : f32
    %0 = vector.broadcast %cst : f32 to vector<8x128xf32>
    %c0 = arith.constant 0 : index
    %c0_0 = arith.constant 0 : index
    %1 = vector.load %arg5[%c0, %c0_0] : memref<8x4352xf32, #tpu.memory_space<vmem>>, vector<8x128xf32>
    tpu.vector_store %arg5[%c0, %c0_0], %0 {strides = array<i32>} : memref<8x4352xf32, #tpu.memory_space<vmem>>, vector<8x128xf32>,
    %cst_1 = arith.constant 0.000000e+00 : f32
    %2 = vector.broadcast %cst_1 : f32 to vector<8x128xf32>
    %c0_2 = arith.constant 0 : index
    %c4224 = arith.constant 4224 : index
    %3 = vector.load %arg5[%c0_2, %c4224] : memref<8x4352xf32, #tpu.memory_space<vmem>>, vector<8x128xf32>
    tpu.vector_store %arg5[%c0_2, %c4224], %2 {strides = array<i32>} : memref<8x4352xf32, #tpu.memory_space<vmem>>, vector<8x128xf32>,
    %c0_3 = arith.constant 0 : index
    %c0_4 = arith.constant 0 : index
    %4 = vector.load %arg0[%c0_3, %c0_4] : memref<3x4096xf32, #tpu.memory_space<vmem>>, vector<3x4096xf32>
    %c0_5 = arith.constant 0 : index
    %c128 = arith.constant 128 : index
    %5 = vector.load %arg5[%c0_5, %c128] : memref<8x4352xf32, #tpu.memory_space<vmem>>, vector<3x4096xf32>
    tpu.vector_store %arg5[%c0_5, %c128], %4 {strides = array<i32>} : memref<8x4352xf32, #tpu.memory_space<vmem>>, vector<3x4096xf32>,
    %cst_6 = arith.constant 0.000000e+00 : f32
    %6 = vector.broadcast %cst_6 : f32 to vector<5x4096xf32>
    %c3 = arith.constant 3 : index
    %c128_7 = arith.constant 128 : index
    %7 = vector.load %arg5[%c3, %c128_7] : memref<8x4352xf32, #tpu.memory_space<vmem>>, vector<5x4096xf32>
    tpu.vector_store %arg5[%c3, %c128_7], %6 {strides = array<i32>} : memref<8x4352xf32, #tpu.memory_space<vmem>>, vector<5x4096xf32>,
    %8 = tpu.iota {dimensions = array<i32: 1>} : vector<8x512xi32>
    %c63_i32 = arith.constant 63 : i32
    %9 = vector.broadcast %c63_i32 : i32 to vector<8x512xi32>
    %10 = arith.andi %8, %9 : vector<8x512xi32>
    %c0_i32 = arith.constant 0 : i32
    %11 = vector.broadcast %c0_i32 : i32 to vector<8x512xi32>
    %12 = arith.cmpi sgt, %10, %11 : vector<8x512xi32>
    %c63_i32_8 = arith.constant 63 : i32
    %13 = vector.broadcast %c63_i32_8 : i32 to vector<8x512xi32>
    %14 = arith.cmpi slt, %10, %13 : vector<8x512xi32>
    %c0_9 = arith.constant 0 : index
    %c0_10 = arith.constant 0 : index
    %15 = vector.load %arg1[%c0_9, %c0_10] : memref<8x72xf32, #tpu.memory_space<vmem>>, vector<8x72xf32>
    %cst_11 = arith.constant 0.000000e+00 : f32
    %16 = vector.broadcast %cst_11 : f32 to vector<8x1xf32>
    %cst_12 = arith.constant 0.000000e+00 : f32
    %17 = vector.broadcast %cst_12 : f32 to vector<8x1xf32>
    %c0_13 = arith.constant 0 : index
    %c63 = arith.constant 63 : index
    %18 = vector.load %arg5[%c0_13, %c63] : memref<8x4352xf32, #tpu.memory_space<vmem>>, vector<8x512xf32>
    %cst_14 = arith.constant 0.000000e+00 : f32
    %19 = vector.broadcast %cst_14 : f32 to vector<8x512xf32>
    %20 = arith.select %12, %18, %19 : vector<8x512xi1>, vector<8x512xf32>
    %c0_15 = arith.constant 0 : index
    %c64 = arith.constant 64 : index
    %21 = vector.load %arg5[%c0_15, %c64] : memref<8x4352xf32, #tpu.memory_space<vmem>>, vector<8x512xf32>
    %c0_16 = arith.constant 0 : index
    %c65 = arith.constant 65 : index
    %22 = vector.load %arg5[%c0_16, %c65] : memref<8x4352xf32, #tpu.memory_space<vmem>>, vector<8x512xf32>
    %cst_17 = arith.constant 0.000000e+00 : f32
    %23 = vector.broadcast %cst_17 : f32 to vector<8x512xf32>
    %24 = arith.select %14, %22, %23 : vector<8x512xi1>, vector<8x512xf32>
    %c0_18 = arith.constant 0 : index
    %c127 = arith.constant 127 : index
    %25 = vector.load %arg5[%c0_18, %c127] : memref<8x4352xf32, #tpu.memory_space<vmem>>, vector<8x512xf32>
    %cst_19 = arith.constant 0.000000e+00 : f32
    %26 = vector.broadcast %cst_19 : f32 to vector<8x512xf32>
    %27 = arith.select %12, %25, %26 : vector<8x512xi1>, vector<8x512xf32>
    %c0_20 = arith.constant 0 : index
    %c128_21 = arith.constant 128 : index
    %28 = vector.load %arg5[%c0_20, %c128_21] : memref<8x4352xf32, #tpu.memory_space<vmem>>, vector<8x512xf32>
    %c0_22 = arith.constant 0 : index
    %c129 = arith.constant 129 : index
    %29 = vector.load %arg5[%c0_22, %c129] : memref<8x4352xf32, #tpu.memory_space<vmem>>, vector<8x512xf32>
    %cst_23 = arith.constant 0.000000e+00 : f32
    %30 = vector.broadcast %cst_23 : f32 to vector<8x512xf32>
    %31 = arith.select %14, %29, %30 : vector<8x512xi1>, vector<8x512xf32>
    %c0_24 = arith.constant 0 : index
    %c191 = arith.constant 191 : index
    %32 = vector.load %arg5[%c0_24, %c191] : memref<8x4352xf32, #tpu.memory_space<vmem>>, vector<8x512xf32>
    %cst_25 = arith.constant 0.000000e+00 : f32
    %33 = vector.broadcast %cst_25 : f32 to vector<8x512xf32>
    %34 = arith.select %12, %32, %33 : vector<8x512xi1>, vector<8x512xf32>
    %c0_26 = arith.constant 0 : index
    %c192 = arith.constant 192 : index
    %35 = vector.load %arg5[%c0_26, %c192] : memref<8x4352xf32, #tpu.memory_space<vmem>>, vector<8x512xf32>
    %c0_27 = arith.constant 0 : index
    %c193 = arith.constant 193 : index
    %36 = vector.load %arg5[%c0_27, %c193] : memref<8x4352xf32, #tpu.memory_space<vmem>>, vector<8x512xf32>
    %cst_28 = arith.constant 0.000000e+00 : f32
    %37 = vector.broadcast %cst_28 : f32 to vector<8x512xf32>
    %38 = arith.select %14, %36, %37 : vector<8x512xi1>, vector<8x512xf32>
    %39 = tpu.concatenate %20, %21, %24, %27, %28, %31, %34, %35, %38 in 0 : vector<8x512xf32>, vector<8x512xf32>, vector<8x512xf32>, vector<8x512xf32>, vector<8x512xf32>, vector<8x512xf32>, vector<8x512xf32>, vector<8x512xf32>, vector<8x512xf32> -> vector<72x512xf32>
    %cst_29 = arith.constant dense<0.000000e+00> : vector<8x512xf32>
    %40 = tpu.matmul %15, %39, %cst_29 {dimension_numbers = #tpu.dot_dimension_numbers<[1], [0], [0], [1], [0, 0, 1, 1], [], []>} : vector<8x72xf32>, vector<72x512xf32>, vector<8x512xf32> -> vector<8x512xf32>
    %cst_30 = arith.constant dense<0.000000e+00> : vector<8xf32>
    %41 = vector.multi_reduction <add>, %40, %cst_30 [1] : vector<8x512xf32> to vector<8xf32>
    %42 = vector.shape_cast %41 : vector<8xf32> to vector<8x1xf32>
    %43 = arith.addf %16, %42 : vector<8x1xf32>
    %44 = arith.mulf %40, %40 : vector<8x512xf32>
    %cst_31 = arith.constant dense<0.000000e+00> : vector<8xf32>
    %45 = vector.multi_reduction <add>, %44, %cst_31 [1] : vector<8x512xf32> to vector<8xf32>
    %46 = vector.shape_cast %45 : vector<8xf32> to vector<8x1xf32>
    %47 = arith.addf %17, %46 : vector<8x1xf32>
    %c0_32 = arith.constant 0 : index
    %c0_33 = arith.constant 0 : index
    %48 = vector.load %arg4[%c0_32, %c0_33] : memref<8x4096xf32, #tpu.memory_space<vmem>>, vector<8x512xf32>
    tpu.vector_store %arg4[%c0_32, %c0_33], %40 {strides = array<i32>} : memref<8x4096xf32, #tpu.memory_space<vmem>>, vector<8x512xf32>,
    %c0_34 = arith.constant 0 : index
    %c575 = arith.constant 575 : index
    %49 = vector.load %arg5[%c0_34, %c575] : memref<8x4352xf32, #tpu.memory_space<vmem>>, vector<8x512xf32>
    %cst_35 = arith.constant 0.000000e+00 : f32
    %50 = vector.broadcast %cst_35 : f32 to vector<8x512xf32>
    %51 = arith.select %12, %49, %50 : vector<8x512xi1>, vector<8x512xf32>
    %c0_36 = arith.constant 0 : index
    %c576 = arith.constant 576 : index
    %52 = vector.load %arg5[%c0_36, %c576] : memref<8x4352xf32, #tpu.memory_space<vmem>>, vector<8x512xf32>
    %c0_37 = arith.constant 0 : index
    %c577 = arith.constant 577 : index
    %53 = vector.load %arg5[%c0_37, %c577] : memref<8x4352xf32, #tpu.memory_space<vmem>>, vector<8x512xf32>
    %cst_38 = arith.constant 0.000000e+00 : f32
    %54 = vector.broadcast %cst_38 : f32 to vector<8x512xf32>
    %55 = arith.select %14, %53, %54 : vector<8x512xi1>, vector<8x512xf32>
    %c0_39 = arith.constant 0 : index
    %c639 = arith.constant 639 : index
    %56 = vector.load %arg5[%c0_39, %c639] : memref<8x4352xf32, #tpu.memory_space<vmem>>, vector<8x512xf32>
    %cst_40 = arith.constant 0.000000e+00 : f32
    %57 = vector.broadcast %cst_40 : f32 to vector<8x512xf32>
    %58 = arith.select %12, %56, %57 : vector<8x512xi1>, vector<8x512xf32>
    %c0_41 = arith.constant 0 : index
    %c640 = arith.constant 640 : index
    %59 = vector.load %arg5[%c0_41, %c640] : memref<8x4352xf32, #tpu.memory_space<vmem>>, vector<8x512xf32>
    %c0_42 = arith.constant 0 : index
    %c641 = arith.constant 641 : index
    %60 = vector.load %arg5[%c0_42, %c641] : memref<8x4352xf32, #tpu.memory_space<vmem>>, vector<8x512xf32>
    %cst_43 = arith.constant 0.000000e+00 : f32
    %61 = vector.broadcast %cst_43 : f32 to vector<8x512xf32>
    %62 = arith.select %14, %60, %61 : vector<8x512xi1>, vector<8x512xf32>
    %c0_44 = arith.constant 0 : index
    %c703 = arith.constant 703 : index
    %63 = vector.load %arg5[%c0_44, %c703] : memref<8x4352xf32, #tpu.memory_space<vmem>>, vector<8x512xf32>
    %cst_45 = arith.constant 0.000000e+00 : f32
    %64 = vector.broadcast %cst_45 : f32 to vector<8x512xf32>
    %65 = arith.select %12, %63, %64 : vector<8x512xi1>, vector<8x512xf32>
    %c0_46 = arith.constant 0 : index
    %c704 = arith.constant 704 : index
    %66 = vector.load %arg5[%c0_46, %c704] : memref<8x4352xf32, #tpu.memory_space<vmem>>, vector<8x512xf32>
    %c0_47 = arith.constant 0 : index
    %c705 = arith.constant 705 : index
    %67 = vector.load %arg5[%c0_47, %c705] : memref<8x4352xf32, #tpu.memory_space<vmem>>, vector<8x512xf32>
    %cst_48 = arith.constant 0.000000e+00 : f32
    %68 = vector.broadcast %cst_48 : f32 to vector<8x512xf32>
    %69 = arith.select %14, %67, %68 : vector<8x512xi1>, vector<8x512xf32>
    %70 = tpu.concatenate %51, %52, %55, %58, %59, %62, %65, %66, %69 in 0 : vector<8x512xf32>, vector<8x512xf32>, vector<8x512xf32>, vector<8x512xf32>, vector<8x512xf32>, vector<8x512xf32>, vector<8x512xf32>, vector<8x512xf32>, vector<8x512xf32> -> vector<72x512xf32>
    %cst_49 = arith.constant dense<0.000000e+00> : vector<8x512xf32>
    %71 = tpu.matmul %15, %70, %cst_49 {dimension_numbers = #tpu.dot_dimension_numbers<[1], [0], [0], [1], [0, 0, 1, 1], [], []>} : vector<8x72xf32>, vector<72x512xf32>, vector<8x512xf32> -> vector<8x512xf32>
    %cst_50 = arith.constant dense<0.000000e+00> : vector<8xf32>
    %72 = vector.multi_reduction <add>, %71, %cst_50 [1] : vector<8x512xf32> to vector<8xf32>
    %73 = vector.shape_cast %72 : vector<8xf32> to vector<8x1xf32>
    %74 = arith.addf %43, %73 : vector<8x1xf32>
    %75 = arith.mulf %71, %71 : vector<8x512xf32>
    %cst_51 = arith.constant dense<0.000000e+00> : vector<8xf32>
    %76 = vector.multi_reduction <add>, %75, %cst_51 [1] : vector<8x512xf32> to vector<8xf32>
    %77 = vector.shape_cast %76 : vector<8xf32> to vector<8x1xf32>
    %78 = arith.addf %47, %77 : vector<8x1xf32>
    %c0_52 = arith.constant 0 : index
    %c512 = arith.constant 512 : index
    %79 = vector.load %arg4[%c0_52, %c512] : memref<8x4096xf32, #tpu.memory_space<vmem>>, vector<8x512xf32>
    tpu.vector_store %arg4[%c0_52, %c512], %71 {strides = array<i32>} : memref<8x4096xf32, #tpu.memory_space<vmem>>, vector<8x512xf32>,
    %c0_53 = arith.constant 0 : index
    %c1087 = arith.constant 1087 : index
    %80 = vector.load %arg5[%c0_53, %c1087] : memref<8x4352xf32, #tpu.memory_space<vmem>>, vector<8x512xf32>
    %cst_54 = arith.constant 0.000000e+00 : f32
    %81 = vector.broadcast %cst_54 : f32 to vector<8x512xf32>
    %82 = arith.select %12, %80, %81 : vector<8x512xi1>, vector<8x512xf32>
    %c0_55 = arith.constant 0 : index
    %c1088 = arith.constant 1088 : index
    %83 = vector.load %arg5[%c0_55, %c1088] : memref<8x4352xf32, #tpu.memory_space<vmem>>, vector<8x512xf32>
    %c0_56 = arith.constant 0 : index
    %c1089 = arith.constant 1089 : index
    %84 = vector.load %arg5[%c0_56, %c1089] : memref<8x4352xf32, #tpu.memory_space<vmem>>, vector<8x512xf32>
    %cst_57 = arith.constant 0.000000e+00 : f32
    %85 = vector.broadcast %cst_57 : f32 to vector<8x512xf32>
    %86 = arith.select %14, %84, %85 : vector<8x512xi1>, vector<8x512xf32>
    %c0_58 = arith.constant 0 : index
    %c1151 = arith.constant 1151 : index
    %87 = vector.load %arg5[%c0_58, %c1151] : memref<8x4352xf32, #tpu.memory_space<vmem>>, vector<8x512xf32>
    %cst_59 = arith.constant 0.000000e+00 : f32
    %88 = vector.broadcast %cst_59 : f32 to vector<8x512xf32>
    %89 = arith.select %12, %87, %88 : vector<8x512xi1>, vector<8x512xf32>
    %c0_60 = arith.constant 0 : index
    %c1152 = arith.constant 1152 : index
    %90 = vector.load %arg5[%c0_60, %c1152] : memref<8x4352xf32, #tpu.memory_space<vmem>>, vector<8x512xf32>
    %c0_61 = arith.constant 0 : index
    %c1153 = arith.constant 1153 : index
    %91 = vector.load %arg5[%c0_61, %c1153] : memref<8x4352xf32, #tpu.memory_space<vmem>>, vector<8x512xf32>
    %cst_62 = arith.constant 0.000000e+00 : f32
    %92 = vector.broadcast %cst_62 : f32 to vector<8x512xf32>
    %93 = arith.select %14, %91, %92 : vector<8x512xi1>, vector<8x512xf32>
    %c0_63 = arith.constant 0 : index
    %c1215 = arith.constant 1215 : index
    %94 = vector.load %arg5[%c0_63, %c1215] : memref<8x4352xf32, #tpu.memory_space<vmem>>, vector<8x512xf32>
    %cst_64 = arith.constant 0.000000e+00 : f32
    %95 = vector.broadcast %cst_64 : f32 to vector<8x512xf32>
    %96 = arith.select %12, %94, %95 : vector<8x512xi1>, vector<8x512xf32>
    %c0_65 = arith.constant 0 : index
    %c1216 = arith.constant 1216 : index
    %97 = vector.load %arg5[%c0_65, %c1216] : memref<8x4352xf32, #tpu.memory_space<vmem>>, vector<8x512xf32>
    %c0_66 = arith.constant 0 : index
    %c1217 = arith.constant 1217 : index
    %98 = vector.load %arg5[%c0_66, %c1217] : memref<8x4352xf32, #tpu.memory_space<vmem>>, vector<8x512xf32>
    %cst_67 = arith.constant 0.000000e+00 : f32
    %99 = vector.broadcast %cst_67 : f32 to vector<8x512xf32>
    %100 = arith.select %14, %98, %99 : vector<8x512xi1>, vector<8x512xf32>
    %101 = tpu.concatenate %82, %83, %86, %89, %90, %93, %96, %97, %100 in 0 : vector<8x512xf32>, vector<8x512xf32>, vector<8x512xf32>, vector<8x512xf32>, vector<8x512xf32>, vector<8x512xf32>, vector<8x512xf32>, vector<8x512xf32>, vector<8x512xf32> -> vector<72x512xf32>
    %cst_68 = arith.constant dense<0.000000e+00> : vector<8x512xf32>
    %102 = tpu.matmul %15, %101, %cst_68 {dimension_numbers = #tpu.dot_dimension_numbers<[1], [0], [0], [1], [0, 0, 1, 1], [], []>} : vector<8x72xf32>, vector<72x512xf32>, vector<8x512xf32> -> vector<8x512xf32>
    %cst_69 = arith.constant dense<0.000000e+00> : vector<8xf32>
    %103 = vector.multi_reduction <add>, %102, %cst_69 [1] : vector<8x512xf32> to vector<8xf32>
    %104 = vector.shape_cast %103 : vector<8xf32> to vector<8x1xf32>
    %105 = arith.addf %74, %104 : vector<8x1xf32>
    %106 = arith.mulf %102, %102 : vector<8x512xf32>
    %cst_70 = arith.constant dense<0.000000e+00> : vector<8xf32>
    %107 = vector.multi_reduction <add>, %106, %cst_70 [1] : vector<8x512xf32> to vector<8xf32>
    %108 = vector.shape_cast %107 : vector<8xf32> to vector<8x1xf32>
    %109 = arith.addf %78, %108 : vector<8x1xf32>
    %c0_71 = arith.constant 0 : index
    %c1024 = arith.constant 1024 : index
    %110 = vector.load %arg4[%c0_71, %c1024] : memref<8x4096xf32, #tpu.memory_space<vmem>>, vector<8x512xf32>
    tpu.vector_store %arg4[%c0_71, %c1024], %102 {strides = array<i32>} : memref<8x4096xf32, #tpu.memory_space<vmem>>, vector<8x512xf32>,
    %c0_72 = arith.constant 0 : index
    %c1599 = arith.constant 1599 : index
    %111 = vector.load %arg5[%c0_72, %c1599] : memref<8x4352xf32, #tpu.memory_space<vmem>>, vector<8x512xf32>
    %cst_73 = arith.constant 0.000000e+00 : f32
    %112 = vector.broadcast %cst_73 : f32 to vector<8x512xf32>
    %113 = arith.select %12, %111, %112 : vector<8x512xi1>, vector<8x512xf32>
    %c0_74 = arith.constant 0 : index
    %c1600 = arith.constant 1600 : index
    %114 = vector.load %arg5[%c0_74, %c1600] : memref<8x4352xf32, #tpu.memory_space<vmem>>, vector<8x512xf32>
    %c0_75 = arith.constant 0 : index
    %c1601 = arith.constant 1601 : index
    %115 = vector.load %arg5[%c0_75, %c1601] : memref<8x4352xf32, #tpu.memory_space<vmem>>, vector<8x512xf32>
    %cst_76 = arith.constant 0.000000e+00 : f32
    %116 = vector.broadcast %cst_76 : f32 to vector<8x512xf32>
    %117 = arith.select %14, %115, %116 : vector<8x512xi1>, vector<8x512xf32>
    %c0_77 = arith.constant 0 : index
    %c1663 = arith.constant 1663 : index
    %118 = vector.load %arg5[%c0_77, %c1663] : memref<8x4352xf32, #tpu.memory_space<vmem>>, vector<8x512xf32>
    %cst_78 = arith.constant 0.000000e+00 : f32
    %119 = vector.broadcast %cst_78 : f32 to vector<8x512xf32>
    %120 = arith.select %12, %118, %119 : vector<8x512xi1>, vector<8x512xf32>
    %c0_79 = arith.constant 0 : index
    %c1664 = arith.constant 1664 : index
    %121 = vector.load %arg5[%c0_79, %c1664] : memref<8x4352xf32, #tpu.memory_space<vmem>>, vector<8x512xf32>
    %c0_80 = arith.constant 0 : index
    %c1665 = arith.constant 1665 : index
    %122 = vector.load %arg5[%c0_80, %c1665] : memref<8x4352xf32, #tpu.memory_space<vmem>>, vector<8x512xf32>
    %cst_81 = arith.constant 0.000000e+00 : f32
    %123 = vector.broadcast %cst_81 : f32 to vector<8x512xf32>
    %124 = arith.select %14, %122, %123 : vector<8x512xi1>, vector<8x512xf32>
    %c0_82 = arith.constant 0 : index
    %c1727 = arith.constant 1727 : index
    %125 = vector.load %arg5[%c0_82, %c1727] : memref<8x4352xf32, #tpu.memory_space<vmem>>, vector<8x512xf32>
    %cst_83 = arith.constant 0.000000e+00 : f32
    %126 = vector.broadcast %cst_83 : f32 to vector<8x512xf32>
    %127 = arith.select %12, %125, %126 : vector<8x512xi1>, vector<8x512xf32>
    %c0_84 = arith.constant 0 : index
    %c1728 = arith.constant 1728 : index
    %128 = vector.load %arg5[%c0_84, %c1728] : memref<8x4352xf32, #tpu.memory_space<vmem>>, vector<8x512xf32>
    %c0_85 = arith.constant 0 : index
    %c1729 = arith.constant 1729 : index
    %129 = vector.load %arg5[%c0_85, %c1729] : memref<8x4352xf32, #tpu.memory_space<vmem>>, vector<8x512xf32>
    %cst_86 = arith.constant 0.000000e+00 : f32
    %130 = vector.broadcast %cst_86 : f32 to vector<8x512xf32>
    %131 = arith.select %14, %129, %130 : vector<8x512xi1>, vector<8x512xf32>
    %132 = tpu.concatenate %113, %114, %117, %120, %121, %124, %127, %128, %131 in 0 : vector<8x512xf32>, vector<8x512xf32>, vector<8x512xf32>, vector<8x512xf32>, vector<8x512xf32>, vector<8x512xf32>, vector<8x512xf32>, vector<8x512xf32>, vector<8x512xf32> -> vector<72x512xf32>
    %cst_87 = arith.constant dense<0.000000e+00> : vector<8x512xf32>
    %133 = tpu.matmul %15, %132, %cst_87 {dimension_numbers = #tpu.dot_dimension_numbers<[1], [0], [0], [1], [0, 0, 1, 1], [], []>} : vector<8x72xf32>, vector<72x512xf32>, vector<8x512xf32> -> vector<8x512xf32>
    %cst_88 = arith.constant dense<0.000000e+00> : vector<8xf32>
    %134 = vector.multi_reduction <add>, %133, %cst_88 [1] : vector<8x512xf32> to vector<8xf32>
    %135 = vector.shape_cast %134 : vector<8xf32> to vector<8x1xf32>
    %136 = arith.addf %105, %135 : vector<8x1xf32>
    %137 = arith.mulf %133, %133 : vector<8x512xf32>
    %cst_89 = arith.constant dense<0.000000e+00> : vector<8xf32>
    %138 = vector.multi_reduction <add>, %137, %cst_89 [1] : vector<8x512xf32> to vector<8xf32>
    %139 = vector.shape_cast %138 : vector<8xf32> to vector<8x1xf32>
    %140 = arith.addf %109, %139 : vector<8x1xf32>
    %c0_90 = arith.constant 0 : index
    %c1536 = arith.constant 1536 : index
    %141 = vector.load %arg4[%c0_90, %c1536] : memref<8x4096xf32, #tpu.memory_space<vmem>>, vector<8x512xf32>
    tpu.vector_store %arg4[%c0_90, %c1536], %133 {strides = array<i32>} : memref<8x4096xf32, #tpu.memory_space<vmem>>, vector<8x512xf32>,
    %c0_91 = arith.constant 0 : index
    %c2111 = arith.constant 2111 : index
    %142 = vector.load %arg5[%c0_91, %c2111] : memref<8x4352xf32, #tpu.memory_space<vmem>>, vector<8x512xf32>
    %cst_92 = arith.constant 0.000000e+00 : f32
    %143 = vector.broadcast %cst_92 : f32 to vector<8x512xf32>
    %144 = arith.select %12, %142, %143 : vector<8x512xi1>, vector<8x512xf32>
    %c0_93 = arith.constant 0 : index
    %c2112 = arith.constant 2112 : index
    %145 = vector.load %arg5[%c0_93, %c2112] : memref<8x4352xf32, #tpu.memory_space<vmem>>, vector<8x512xf32>
    %c0_94 = arith.constant 0 : index
    %c2113 = arith.constant 2113 : index
    %146 = vector.load %arg5[%c0_94, %c2113] : memref<8x4352xf32, #tpu.memory_space<vmem>>, vector<8x512xf32>
    %cst_95 = arith.constant 0.000000e+00 : f32
    %147 = vector.broadcast %cst_95 : f32 to vector<8x512xf32>
    %148 = arith.select %14, %146, %147 : vector<8x512xi1>, vector<8x512xf32>
    %c0_96 = arith.constant 0 : index
    %c2175 = arith.constant 2175 : index
    %149 = vector.load %arg5[%c0_96, %c2175] : memref<8x4352xf32, #tpu.memory_space<vmem>>, vector<8x512xf32>
    %cst_97 = arith.constant 0.000000e+00 : f32
    %150 = vector.broadcast %cst_97 : f32 to vector<8x512xf32>
    %151 = arith.select %12, %149, %150 : vector<8x512xi1>, vector<8x512xf32>
    %c0_98 = arith.constant 0 : index
    %c2176 = arith.constant 2176 : index
    %152 = vector.load %arg5[%c0_98, %c2176] : memref<8x4352xf32, #tpu.memory_space<vmem>>, vector<8x512xf32>
    %c0_99 = arith.constant 0 : index
    %c2177 = arith.constant 2177 : index
    %153 = vector.load %arg5[%c0_99, %c2177] : memref<8x4352xf32, #tpu.memory_space<vmem>>, vector<8x512xf32>
    %cst_100 = arith.constant 0.000000e+00 : f32
    %154 = vector.broadcast %cst_100 : f32 to vector<8x512xf32>
    %155 = arith.select %14, %153, %154 : vector<8x512xi1>, vector<8x512xf32>
    %c0_101 = arith.constant 0 : index
    %c2239 = arith.constant 2239 : index
    %156 = vector.load %arg5[%c0_101, %c2239] : memref<8x4352xf32, #tpu.memory_space<vmem>>, vector<8x512xf32>
    %cst_102 = arith.constant 0.000000e+00 : f32
    %157 = vector.broadcast %cst_102 : f32 to vector<8x512xf32>
    %158 = arith.select %12, %156, %157 : vector<8x512xi1>, vector<8x512xf32>
    %c0_103 = arith.constant 0 : index
    %c2240 = arith.constant 2240 : index
    %159 = vector.load %arg5[%c0_103, %c2240] : memref<8x4352xf32, #tpu.memory_space<vmem>>, vector<8x512xf32>
    %c0_104 = arith.constant 0 : index
    %c2241 = arith.constant 2241 : index
    %160 = vector.load %arg5[%c0_104, %c2241] : memref<8x4352xf32, #tpu.memory_space<vmem>>, vector<8x512xf32>
    %cst_105 = arith.constant 0.000000e+00 : f32
    %161 = vector.broadcast %cst_105 : f32 to vector<8x512xf32>
    %162 = arith.select %14, %160, %161 : vector<8x512xi1>, vector<8x512xf32>
    %163 = tpu.concatenate %144, %145, %148, %151, %152, %155, %158, %159, %162 in 0 : vector<8x512xf32>, vector<8x512xf32>, vector<8x512xf32>, vector<8x512xf32>, vector<8x512xf32>, vector<8x512xf32>, vector<8x512xf32>, vector<8x512xf32>, vector<8x512xf32> -> vector<72x512xf32>
    %cst_106 = arith.constant dense<0.000000e+00> : vector<8x512xf32>
    %164 = tpu.matmul %15, %163, %cst_106 {dimension_numbers = #tpu.dot_dimension_numbers<[1], [0], [0], [1], [0, 0, 1, 1], [], []>} : vector<8x72xf32>, vector<72x512xf32>, vector<8x512xf32> -> vector<8x512xf32>
    %cst_107 = arith.constant dense<0.000000e+00> : vector<8xf32>
    %165 = vector.multi_reduction <add>, %164, %cst_107 [1] : vector<8x512xf32> to vector<8xf32>
    %166 = vector.shape_cast %165 : vector<8xf32> to vector<8x1xf32>
    %167 = arith.addf %136, %166 : vector<8x1xf32>
    %168 = arith.mulf %164, %164 : vector<8x512xf32>
    %cst_108 = arith.constant dense<0.000000e+00> : vector<8xf32>
    %169 = vector.multi_reduction <add>, %168, %cst_108 [1] : vector<8x512xf32> to vector<8xf32>
    %170 = vector.shape_cast %169 : vector<8xf32> to vector<8x1xf32>
    %171 = arith.addf %140, %170 : vector<8x1xf32>
    %c0_109 = arith.constant 0 : index
    %c2048 = arith.constant 2048 : index
    %172 = vector.load %arg4[%c0_109, %c2048] : memref<8x4096xf32, #tpu.memory_space<vmem>>, vector<8x512xf32>
    tpu.vector_store %arg4[%c0_109, %c2048], %164 {strides = array<i32>} : memref<8x4096xf32, #tpu.memory_space<vmem>>, vector<8x512xf32>,
    %c0_110 = arith.constant 0 : index
    %c2623 = arith.constant 2623 : index
    %173 = vector.load %arg5[%c0_110, %c2623] : memref<8x4352xf32, #tpu.memory_space<vmem>>, vector<8x512xf32>
    %cst_111 = arith.constant 0.000000e+00 : f32
    %174 = vector.broadcast %cst_111 : f32 to vector<8x512xf32>
    %175 = arith.select %12, %173, %174 : vector<8x512xi1>, vector<8x512xf32>
    %c0_112 = arith.constant 0 : index
    %c2624 = arith.constant 2624 : index
    %176 = vector.load %arg5[%c0_112, %c2624] : memref<8x4352xf32, #tpu.memory_space<vmem>>, vector<8x512xf32>
    %c0_113 = arith.constant 0 : index
    %c2625 = arith.constant 2625 : index
    %177 = vector.load %arg5[%c0_113, %c2625] : memref<8x4352xf32, #tpu.memory_space<vmem>>, vector<8x512xf32>
    %cst_114 = arith.constant 0.000000e+00 : f32
    %178 = vector.broadcast %cst_114 : f32 to vector<8x512xf32>
    %179 = arith.select %14, %177, %178 : vector<8x512xi1>, vector<8x512xf32>
    %c0_115 = arith.constant 0 : index
    %c2687 = arith.constant 2687 : index
    %180 = vector.load %arg5[%c0_115, %c2687] : memref<8x4352xf32, #tpu.memory_space<vmem>>, vector<8x512xf32>
    %cst_116 = arith.constant 0.000000e+00 : f32
    %181 = vector.broadcast %cst_116 : f32 to vector<8x512xf32>
    %182 = arith.select %12, %180, %181 : vector<8x512xi1>, vector<8x512xf32>
    %c0_117 = arith.constant 0 : index
    %c2688 = arith.constant 2688 : index
    %183 = vector.load %arg5[%c0_117, %c2688] : memref<8x4352xf32, #tpu.memory_space<vmem>>, vector<8x512xf32>
    %c0_118 = arith.constant 0 : index
    %c2689 = arith.constant 2689 : index
    %184 = vector.load %arg5[%c0_118, %c2689] : memref<8x4352xf32, #tpu.memory_space<vmem>>, vector<8x512xf32>
    %cst_119 = arith.constant 0.000000e+00 : f32
    %185 = vector.broadcast %cst_119 : f32 to vector<8x512xf32>
    %186 = arith.select %14, %184, %185 : vector<8x512xi1>, vector<8x512xf32>
    %c0_120 = arith.constant 0 : index
    %c2751 = arith.constant 2751 : index
    %187 = vector.load %arg5[%c0_120, %c2751] : memref<8x4352xf32, #tpu.memory_space<vmem>>, vector<8x512xf32>
    %cst_121 = arith.constant 0.000000e+00 : f32
    %188 = vector.broadcast %cst_121 : f32 to vector<8x512xf32>
    %189 = arith.select %12, %187, %188 : vector<8x512xi1>, vector<8x512xf32>
    %c0_122 = arith.constant 0 : index
    %c2752 = arith.constant 2752 : index
    %190 = vector.load %arg5[%c0_122, %c2752] : memref<8x4352xf32, #tpu.memory_space<vmem>>, vector<8x512xf32>
    %c0_123 = arith.constant 0 : index
    %c2753 = arith.constant 2753 : index
    %191 = vector.load %arg5[%c0_123, %c2753] : memref<8x4352xf32, #tpu.memory_space<vmem>>, vector<8x512xf32>
    %cst_124 = arith.constant 0.000000e+00 : f32
    %192 = vector.broadcast %cst_124 : f32 to vector<8x512xf32>
    %193 = arith.select %14, %191, %192 : vector<8x512xi1>, vector<8x512xf32>
    %194 = tpu.concatenate %175, %176, %179, %182, %183, %186, %189, %190, %193 in 0 : vector<8x512xf32>, vector<8x512xf32>, vector<8x512xf32>, vector<8x512xf32>, vector<8x512xf32>, vector<8x512xf32>, vector<8x512xf32>, vector<8x512xf32>, vector<8x512xf32> -> vector<72x512xf32>
    %cst_125 = arith.constant dense<0.000000e+00> : vector<8x512xf32>
    %195 = tpu.matmul %15, %194, %cst_125 {dimension_numbers = #tpu.dot_dimension_numbers<[1], [0], [0], [1], [0, 0, 1, 1], [], []>} : vector<8x72xf32>, vector<72x512xf32>, vector<8x512xf32> -> vector<8x512xf32>
    %cst_126 = arith.constant dense<0.000000e+00> : vector<8xf32>
    %196 = vector.multi_reduction <add>, %195, %cst_126 [1] : vector<8x512xf32> to vector<8xf32>
    %197 = vector.shape_cast %196 : vector<8xf32> to vector<8x1xf32>
    %198 = arith.addf %167, %197 : vector<8x1xf32>
    %199 = arith.mulf %195, %195 : vector<8x512xf32>
    %cst_127 = arith.constant dense<0.000000e+00> : vector<8xf32>
    %200 = vector.multi_reduction <add>, %199, %cst_127 [1] : vector<8x512xf32> to vector<8xf32>
    %201 = vector.shape_cast %200 : vector<8xf32> to vector<8x1xf32>
    %202 = arith.addf %171, %201 : vector<8x1xf32>
    %c0_128 = arith.constant 0 : index
    %c2560 = arith.constant 2560 : index
    %203 = vector.load %arg4[%c0_128, %c2560] : memref<8x4096xf32, #tpu.memory_space<vmem>>, vector<8x512xf32>
    tpu.vector_store %arg4[%c0_128, %c2560], %195 {strides = array<i32>} : memref<8x4096xf32, #tpu.memory_space<vmem>>, vector<8x512xf32>,
    %c0_129 = arith.constant 0 : index
    %c3135 = arith.constant 3135 : index
    %204 = vector.load %arg5[%c0_129, %c3135] : memref<8x4352xf32, #tpu.memory_space<vmem>>, vector<8x512xf32>
    %cst_130 = arith.constant 0.000000e+00 : f32
    %205 = vector.broadcast %cst_130 : f32 to vector<8x512xf32>
    %206 = arith.select %12, %204, %205 : vector<8x512xi1>, vector<8x512xf32>
    %c0_131 = arith.constant 0 : index
    %c3136 = arith.constant 3136 : index
    %207 = vector.load %arg5[%c0_131, %c3136] : memref<8x4352xf32, #tpu.memory_space<vmem>>, vector<8x512xf32>
    %c0_132 = arith.constant 0 : index
    %c3137 = arith.constant 3137 : index
    %208 = vector.load %arg5[%c0_132, %c3137] : memref<8x4352xf32, #tpu.memory_space<vmem>>, vector<8x512xf32>
    %cst_133 = arith.constant 0.000000e+00 : f32
    %209 = vector.broadcast %cst_133 : f32 to vector<8x512xf32>
    %210 = arith.select %14, %208, %209 : vector<8x512xi1>, vector<8x512xf32>
    %c0_134 = arith.constant 0 : index
    %c3199 = arith.constant 3199 : index
    %211 = vector.load %arg5[%c0_134, %c3199] : memref<8x4352xf32, #tpu.memory_space<vmem>>, vector<8x512xf32>
    %cst_135 = arith.constant 0.000000e+00 : f32
    %212 = vector.broadcast %cst_135 : f32 to vector<8x512xf32>
    %213 = arith.select %12, %211, %212 : vector<8x512xi1>, vector<8x512xf32>
    %c0_136 = arith.constant 0 : index
    %c3200 = arith.constant 3200 : index
    %214 = vector.load %arg5[%c0_136, %c3200] : memref<8x4352xf32, #tpu.memory_space<vmem>>, vector<8x512xf32>
    %c0_137 = arith.constant 0 : index
    %c3201 = arith.constant 3201 : index
    %215 = vector.load %arg5[%c0_137, %c3201] : memref<8x4352xf32, #tpu.memory_space<vmem>>, vector<8x512xf32>
    %cst_138 = arith.constant 0.000000e+00 : f32
    %216 = vector.broadcast %cst_138 : f32 to vector<8x512xf32>
    %217 = arith.select %14, %215, %216 : vector<8x512xi1>, vector<8x512xf32>
    %c0_139 = arith.constant 0 : index
    %c3263 = arith.constant 3263 : index
    %218 = vector.load %arg5[%c0_139, %c3263] : memref<8x4352xf32, #tpu.memory_space<vmem>>, vector<8x512xf32>
    %cst_140 = arith.constant 0.000000e+00 : f32
    %219 = vector.broadcast %cst_140 : f32 to vector<8x512xf32>
    %220 = arith.select %12, %218, %219 : vector<8x512xi1>, vector<8x512xf32>
    %c0_141 = arith.constant 0 : index
    %c3264 = arith.constant 3264 : index
    %221 = vector.load %arg5[%c0_141, %c3264] : memref<8x4352xf32, #tpu.memory_space<vmem>>, vector<8x512xf32>
    %c0_142 = arith.constant 0 : index
    %c3265 = arith.constant 3265 : index
    %222 = vector.load %arg5[%c0_142, %c3265] : memref<8x4352xf32, #tpu.memory_space<vmem>>, vector<8x512xf32>
    %cst_143 = arith.constant 0.000000e+00 : f32
    %223 = vector.broadcast %cst_143 : f32 to vector<8x512xf32>
    %224 = arith.select %14, %222, %223 : vector<8x512xi1>, vector<8x512xf32>
    %225 = tpu.concatenate %206, %207, %210, %213, %214, %217, %220, %221, %224 in 0 : vector<8x512xf32>, vector<8x512xf32>, vector<8x512xf32>, vector<8x512xf32>, vector<8x512xf32>, vector<8x512xf32>, vector<8x512xf32>, vector<8x512xf32>, vector<8x512xf32> -> vector<72x512xf32>
    %cst_144 = arith.constant dense<0.000000e+00> : vector<8x512xf32>
    %226 = tpu.matmul %15, %225, %cst_144 {dimension_numbers = #tpu.dot_dimension_numbers<[1], [0], [0], [1], [0, 0, 1, 1], [], []>} : vector<8x72xf32>, vector<72x512xf32>, vector<8x512xf32> -> vector<8x512xf32>
    %cst_145 = arith.constant dense<0.000000e+00> : vector<8xf32>
    %227 = vector.multi_reduction <add>, %226, %cst_145 [1] : vector<8x512xf32> to vector<8xf32>
    %228 = vector.shape_cast %227 : vector<8xf32> to vector<8x1xf32>
    %229 = arith.addf %198, %228 : vector<8x1xf32>
    %230 = arith.mulf %226, %226 : vector<8x512xf32>
    %cst_146 = arith.constant dense<0.000000e+00> : vector<8xf32>
    %231 = vector.multi_reduction <add>, %230, %cst_146 [1] : vector<8x512xf32> to vector<8xf32>
    %232 = vector.shape_cast %231 : vector<8xf32> to vector<8x1xf32>
    %233 = arith.addf %202, %232 : vector<8x1xf32>
    %c0_147 = arith.constant 0 : index
    %c3072 = arith.constant 3072 : index
    %234 = vector.load %arg4[%c0_147, %c3072] : memref<8x4096xf32, #tpu.memory_space<vmem>>, vector<8x512xf32>
    tpu.vector_store %arg4[%c0_147, %c3072], %226 {strides = array<i32>} : memref<8x4096xf32, #tpu.memory_space<vmem>>, vector<8x512xf32>,
    %c0_148 = arith.constant 0 : index
    %c3647 = arith.constant 3647 : index
    %235 = vector.load %arg5[%c0_148, %c3647] : memref<8x4352xf32, #tpu.memory_space<vmem>>, vector<8x512xf32>
    %cst_149 = arith.constant 0.000000e+00 : f32
    %236 = vector.broadcast %cst_149 : f32 to vector<8x512xf32>
    %237 = arith.select %12, %235, %236 : vector<8x512xi1>, vector<8x512xf32>
    %c0_150 = arith.constant 0 : index
    %c3648 = arith.constant 3648 : index
    %238 = vector.load %arg5[%c0_150, %c3648] : memref<8x4352xf32, #tpu.memory_space<vmem>>, vector<8x512xf32>
    %c0_151 = arith.constant 0 : index
    %c3649 = arith.constant 3649 : index
    %239 = vector.load %arg5[%c0_151, %c3649] : memref<8x4352xf32, #tpu.memory_space<vmem>>, vector<8x512xf32>
    %cst_152 = arith.constant 0.000000e+00 : f32
    %240 = vector.broadcast %cst_152 : f32 to vector<8x512xf32>
    %241 = arith.select %14, %239, %240 : vector<8x512xi1>, vector<8x512xf32>
    %c0_153 = arith.constant 0 : index
    %c3711 = arith.constant 3711 : index
    %242 = vector.load %arg5[%c0_153, %c3711] : memref<8x4352xf32, #tpu.memory_space<vmem>>, vector<8x512xf32>
    %cst_154 = arith.constant 0.000000e+00 : f32
    %243 = vector.broadcast %cst_154 : f32 to vector<8x512xf32>
    %244 = arith.select %12, %242, %243 : vector<8x512xi1>, vector<8x512xf32>
    %c0_155 = arith.constant 0 : index
    %c3712 = arith.constant 3712 : index
    %245 = vector.load %arg5[%c0_155, %c3712] : memref<8x4352xf32, #tpu.memory_space<vmem>>, vector<8x512xf32>
    %c0_156 = arith.constant 0 : index
    %c3713 = arith.constant 3713 : index
    %246 = vector.load %arg5[%c0_156, %c3713] : memref<8x4352xf32, #tpu.memory_space<vmem>>, vector<8x512xf32>
    %cst_157 = arith.constant 0.000000e+00 : f32
    %247 = vector.broadcast %cst_157 : f32 to vector<8x512xf32>
    %248 = arith.select %14, %246, %247 : vector<8x512xi1>, vector<8x512xf32>
    %c0_158 = arith.constant 0 : index
    %c3775 = arith.constant 3775 : index
    %249 = vector.load %arg5[%c0_158, %c3775] : memref<8x4352xf32, #tpu.memory_space<vmem>>, vector<8x512xf32>
    %cst_159 = arith.constant 0.000000e+00 : f32
    %250 = vector.broadcast %cst_159 : f32 to vector<8x512xf32>
    %251 = arith.select %12, %249, %250 : vector<8x512xi1>, vector<8x512xf32>
    %c0_160 = arith.constant 0 : index
    %c3776 = arith.constant 3776 : index
    %252 = vector.load %arg5[%c0_160, %c3776] : memref<8x4352xf32, #tpu.memory_space<vmem>>, vector<8x512xf32>
    %c0_161 = arith.constant 0 : index
    %c3777 = arith.constant 3777 : index
    %253 = vector.load %arg5[%c0_161, %c3777] : memref<8x4352xf32, #tpu.memory_space<vmem>>, vector<8x512xf32>
    %cst_162 = arith.constant 0.000000e+00 : f32
    %254 = vector.broadcast %cst_162 : f32 to vector<8x512xf32>
    %255 = arith.select %14, %253, %254 : vector<8x512xi1>, vector<8x512xf32>
    %256 = tpu.concatenate %237, %238, %241, %244, %245, %248, %251, %252, %255 in 0 : vector<8x512xf32>, vector<8x512xf32>, vector<8x512xf32>, vector<8x512xf32>, vector<8x512xf32>, vector<8x512xf32>, vector<8x512xf32>, vector<8x512xf32>, vector<8x512xf32> -> vector<72x512xf32>
    %cst_163 = arith.constant dense<0.000000e+00> : vector<8x512xf32>
    %257 = tpu.matmul %15, %256, %cst_163 {dimension_numbers = #tpu.dot_dimension_numbers<[1], [0], [0], [1], [0, 0, 1, 1], [], []>} : vector<8x72xf32>, vector<72x512xf32>, vector<8x512xf32> -> vector<8x512xf32>
    %cst_164 = arith.constant dense<0.000000e+00> : vector<8xf32>
    %258 = vector.multi_reduction <add>, %257, %cst_164 [1] : vector<8x512xf32> to vector<8xf32>
    %259 = vector.shape_cast %258 : vector<8xf32> to vector<8x1xf32>
    %260 = arith.addf %229, %259 : vector<8x1xf32>
    %261 = arith.mulf %257, %257 : vector<8x512xf32>
    %cst_165 = arith.constant dense<0.000000e+00> : vector<8xf32>
    %262 = vector.multi_reduction <add>, %261, %cst_165 [1] : vector<8x512xf32> to vector<8xf32>
    %263 = vector.shape_cast %262 : vector<8xf32> to vector<8x1xf32>
    %264 = arith.addf %233, %263 : vector<8x1xf32>
    %c0_166 = arith.constant 0 : index
    %c3584 = arith.constant 3584 : index
    %265 = vector.load %arg4[%c0_166, %c3584] : memref<8x4096xf32, #tpu.memory_space<vmem>>, vector<8x512xf32>
    tpu.vector_store %arg4[%c0_166, %c3584], %257 {strides = array<i32>} : memref<8x4096xf32, #tpu.memory_space<vmem>>, vector<8x512xf32>,
    %cst_167 = arith.constant 2.44140625E-4 : f32
    %266 = vector.broadcast %cst_167 : f32 to vector<8x1xf32>
    %267 = arith.mulf %260, %266 : vector<8x1xf32>
    %cst_168 = arith.constant 2.44140625E-4 : f32
    %268 = vector.broadcast %cst_168 : f32 to vector<8x1xf32>
    %269 = arith.mulf %264, %268 : vector<8x1xf32>
    %270 = arith.mulf %267, %267 : vector<8x1xf32>
    %271 = arith.subf %269, %270 : vector<8x1xf32>
    %c0_169 = arith.constant 0 : index
    %c0_170 = arith.constant 0 : index
    %272 = vector.load %arg2[%c0_169, %c0_170] : memref<8x1xf32, #tpu.memory_space<vmem>>, vector<8x1xf32>
    %cst_171 = arith.constant 9.99999974E-6 : f32
    %273 = vector.broadcast %cst_171 : f32 to vector<8x1xf32>
    %274 = arith.addf %271, %273 : vector<8x1xf32>
    %275 = math.rsqrt %274 : vector<8x1xf32>
    %276 = arith.mulf %272, %275 : vector<8x1xf32>
    %c0_172 = arith.constant 0 : index
    %c0_173 = arith.constant 0 : index
    %277 = vector.load %arg3[%c0_172, %c0_173] : memref<8x1xf32, #tpu.memory_space<vmem>>, vector<8x1xf32>
    %cst_174 = arith.constant 2.000000e+00 : f32
    %278 = vector.broadcast %cst_174 : f32 to vector<8x1xf32>
    %279 = arith.subf %277, %278 : vector<8x1xf32>
    %280 = arith.mulf %267, %276 : vector<8x1xf32>
    %281 = arith.subf %279, %280 : vector<8x1xf32>
    %282 = vector.shape_cast %276 : vector<8x1xf32> to vector<8x1xf32>
    %283 = vector.broadcast %282 : vector<8x1xf32> to vector<8x512xf32>
    %284 = vector.shape_cast %281 : vector<8x1xf32> to vector<8x1xf32>
    %285 = vector.broadcast %284 : vector<8x1xf32> to vector<8x512xf32>
    %c0_175 = arith.constant 0 : index
    %c0_176 = arith.constant 0 : index
    %286 = vector.load %arg4[%c0_175, %c0_176] : memref<8x4096xf32, #tpu.memory_space<vmem>>, vector<8x512xf32>
    %287 = arith.mulf %286, %283 : vector<8x512xf32>
    %288 = arith.addf %287, %285 : vector<8x512xf32>
    %cst_177 = arith.constant 0.000000e+00 : f32
    %289 = vector.broadcast %cst_177 : f32 to vector<8x512xf32>
    %290 = arith.maximumf %288, %289 : vector<8x512xf32>
    %c0_178 = arith.constant 0 : index
    %c0_179 = arith.constant 0 : index
    %291 = vector.load %arg4[%c0_178, %c0_179] : memref<8x4096xf32, #tpu.memory_space<vmem>>, vector<8x512xf32>
    tpu.vector_store %arg4[%c0_178, %c0_179], %290 {strides = array<i32>} : memref<8x4096xf32, #tpu.memory_space<vmem>>, vector<8x512xf32>,
    %c0_180 = arith.constant 0 : index
    %c512_181 = arith.constant 512 : index
    %292 = vector.load %arg4[%c0_180, %c512_181] : memref<8x4096xf32, #tpu.memory_space<vmem>>, vector<8x512xf32>
    %293 = arith.mulf %292, %283 : vector<8x512xf32>
    %294 = arith.addf %293, %285 : vector<8x512xf32>
    %cst_182 = arith.constant 0.000000e+00 : f32
    %295 = vector.broadcast %cst_182 : f32 to vector<8x512xf32>
    %296 = arith.maximumf %294, %295 : vector<8x512xf32>
    %c0_183 = arith.constant 0 : index
    %c512_184 = arith.constant 512 : index
    %297 = vector.load %arg4[%c0_183, %c512_184] : memref<8x4096xf32, #tpu.memory_space<vmem>>, vector<8x512xf32>
    tpu.vector_store %arg4[%c0_183, %c512_184], %296 {strides = array<i32>} : memref<8x4096xf32, #tpu.memory_space<vmem>>, vector<8x512xf32>,
    %c0_185 = arith.constant 0 : index
    %c1024_186 = arith.constant 1024 : index
    %298 = vector.load %arg4[%c0_185, %c1024_186] : memref<8x4096xf32, #tpu.memory_space<vmem>>, vector<8x512xf32>
    %299 = arith.mulf %298, %283 : vector<8x512xf32>
    %300 = arith.addf %299, %285 : vector<8x512xf32>
    %cst_187 = arith.constant 0.000000e+00 : f32
    %301 = vector.broadcast %cst_187 : f32 to vector<8x512xf32>
    %302 = arith.maximumf %300, %301 : vector<8x512xf32>
    %c0_188 = arith.constant 0 : index
    %c1024_189 = arith.constant 1024 : index
    %303 = vector.load %arg4[%c0_188, %c1024_189] : memref<8x4096xf32, #tpu.memory_space<vmem>>, vector<8x512xf32>
    tpu.vector_store %arg4[%c0_188, %c1024_189], %302 {strides = array<i32>} : memref<8x4096xf32, #tpu.memory_space<vmem>>, vector<8x512xf32>,
    %c0_190 = arith.constant 0 : index
    %c1536_191 = arith.constant 1536 : index
    %304 = vector.load %arg4[%c0_190, %c1536_191] : memref<8x4096xf32, #tpu.memory_space<vmem>>, vector<8x512xf32>
    %305 = arith.mulf %304, %283 : vector<8x512xf32>
    %306 = arith.addf %305, %285 : vector<8x512xf32>
    %cst_192 = arith.constant 0.000000e+00 : f32
    %307 = vector.broadcast %cst_192 : f32 to vector<8x512xf32>
    %308 = arith.maximumf %306, %307 : vector<8x512xf32>
    %c0_193 = arith.constant 0 : index
    %c1536_194 = arith.constant 1536 : index
    %309 = vector.load %arg4[%c0_193, %c1536_194] : memref<8x4096xf32, #tpu.memory_space<vmem>>, vector<8x512xf32>
    tpu.vector_store %arg4[%c0_193, %c1536_194], %308 {strides = array<i32>} : memref<8x4096xf32, #tpu.memory_space<vmem>>, vector<8x512xf32>,
    %c0_195 = arith.constant 0 : index
    %c2048_196 = arith.constant 2048 : index
    %310 = vector.load %arg4[%c0_195, %c2048_196] : memref<8x4096xf32, #tpu.memory_space<vmem>>, vector<8x512xf32>
    %311 = arith.mulf %310, %283 : vector<8x512xf32>
    %312 = arith.addf %311, %285 : vector<8x512xf32>
    %cst_197 = arith.constant 0.000000e+00 : f32
    %313 = vector.broadcast %cst_197 : f32 to vector<8x512xf32>
    %314 = arith.maximumf %312, %313 : vector<8x512xf32>
    %c0_198 = arith.constant 0 : index
    %c2048_199 = arith.constant 2048 : index
    %315 = vector.load %arg4[%c0_198, %c2048_199] : memref<8x4096xf32, #tpu.memory_space<vmem>>, vector<8x512xf32>
    tpu.vector_store %arg4[%c0_198, %c2048_199], %314 {strides = array<i32>} : memref<8x4096xf32, #tpu.memory_space<vmem>>, vector<8x512xf32>,
    %c0_200 = arith.constant 0 : index
    %c2560_201 = arith.constant 2560 : index
    %316 = vector.load %arg4[%c0_200, %c2560_201] : memref<8x4096xf32, #tpu.memory_space<vmem>>, vector<8x512xf32>
    %317 = arith.mulf %316, %283 : vector<8x512xf32>
    %318 = arith.addf %317, %285 : vector<8x512xf32>
    %cst_202 = arith.constant 0.000000e+00 : f32
    %319 = vector.broadcast %cst_202 : f32 to vector<8x512xf32>
    %320 = arith.maximumf %318, %319 : vector<8x512xf32>
    %c0_203 = arith.constant 0 : index
    %c2560_204 = arith.constant 2560 : index
    %321 = vector.load %arg4[%c0_203, %c2560_204] : memref<8x4096xf32, #tpu.memory_space<vmem>>, vector<8x512xf32>
    tpu.vector_store %arg4[%c0_203, %c2560_204], %320 {strides = array<i32>} : memref<8x4096xf32, #tpu.memory_space<vmem>>, vector<8x512xf32>,
    %c0_205 = arith.constant 0 : index
    %c3072_206 = arith.constant 3072 : index
    %322 = vector.load %arg4[%c0_205, %c3072_206] : memref<8x4096xf32, #tpu.memory_space<vmem>>, vector<8x512xf32>
    %323 = arith.mulf %322, %283 : vector<8x512xf32>
    %324 = arith.addf %323, %285 : vector<8x512xf32>
    %cst_207 = arith.constant 0.000000e+00 : f32
    %325 = vector.broadcast %cst_207 : f32 to vector<8x512xf32>
    %326 = arith.maximumf %324, %325 : vector<8x512xf32>
    %c0_208 = arith.constant 0 : index
    %c3072_209 = arith.constant 3072 : index
    %327 = vector.load %arg4[%c0_208, %c3072_209] : memref<8x4096xf32, #tpu.memory_space<vmem>>, vector<8x512xf32>
    tpu.vector_store %arg4[%c0_208, %c3072_209], %326 {strides = array<i32>} : memref<8x4096xf32, #tpu.memory_space<vmem>>, vector<8x512xf32>,
    %c0_210 = arith.constant 0 : index
    %c3584_211 = arith.constant 3584 : index
    %328 = vector.load %arg4[%c0_210, %c3584_211] : memref<8x4096xf32, #tpu.memory_space<vmem>>, vector<8x512xf32>
    %329 = arith.mulf %328, %283 : vector<8x512xf32>
    %330 = arith.addf %329, %285 : vector<8x512xf32>
    %cst_212 = arith.constant 0.000000e+00 : f32
    %331 = vector.broadcast %cst_212 : f32 to vector<8x512xf32>
    %332 = arith.maximumf %330, %331 : vector<8x512xf32>
    %c0_213 = arith.constant 0 : index
    %c3584_214 = arith.constant 3584 : index
    %333 = vector.load %arg4[%c0_213, %c3584_214] : memref<8x4096xf32, #tpu.memory_space<vmem>>, vector<8x512xf32>
    tpu.vector_store %arg4[%c0_213, %c3584_214], %332 {strides = array<i32>} : memref<8x4096xf32, #tpu.memory_space<vmem>>, vector<8x512xf32>,
    return
  }
}

</mosaic_0001>

<llo_original>
// kernel: conv_bn_sub_relu.1
$region0: #{conv_bn_sub_relu.1}
  #allocation0 [shape = 'u32[]', space=smem, size = 0x4, offset = 0x4, fixed_abs, tag = 'smem constant byte address 0x4 - core index']
  #allocation1 [shape = 'u32[144,128]{1,0:T(1,128)}', space=vmem, size = 0x12000, scoped, tag = 'internal scratch']
  #allocation2 [shape = 'f32[8,4352]{1,0:T(8,128)}', space=vmem, size = 0x22000, scoped, tag = 'scratch operand']
  %s0 = inlined_call_operand.vmem [shape: f32[3,4096], index: 0, kind: input, shape index: {}]
  %s1 = inlined_call_operand.vmem [shape: f32[8,72], index: 1, kind: input, shape index: {}]
  %s2 = inlined_call_operand.vmem [shape: f32[8,1], index: 2, kind: input, shape index: {}]
  %s3 = inlined_call_operand.vmem [shape: f32[8,1], index: 3, kind: input, shape index: {}]
  %s4 = inlined_call_operand.vmem [shape: f32[8,4096], index: 4, kind: output, shape index: {}]
  %s5 = sld [smem:[#allocation0]]
  $region26: #{conv_bn_sub_relu.1} parent=0
    _
  %s7 = ssub.s32 1, %s5
  %s8 = scalar_select 0, %s7, %s5
  // Predicated region
  $region2: #{conv_bn_sub_relu.1} parent=0 // pred_check
    _
  $region3: #{conv_bn_sub_relu.1} parent=0 // pred_check_branch
    %10 = sbr.rel (0) target = $region5
  $region4: #{conv_bn_sub_relu.1} parent=0 // pred_region
    _
  $region5: #{conv_bn_sub_relu.1} parent=0 // pred_fallthru
    _
  // Predicated region
  $region6: #{conv_bn_sub_relu.1} parent=0 // pred_check
    _
  $region7: #{conv_bn_sub_relu.1} parent=0 // pred_check_branch
    %12 = sbr.rel (0) target = $region9
  $region8: #{conv_bn_sub_relu.1} parent=0 // pred_region
    _
  $region9: #{conv_bn_sub_relu.1} parent=0 // pred_fallthru
    _
  // Predicated region
  $region10: #{conv_bn_sub_relu.1} parent=0 // pred_check
    _
  $region11: #{conv_bn_sub_relu.1} parent=0 // pred_check_branch
    %14 = sbr.rel (0) target = $region13
  $region12: #{conv_bn_sub_relu.1} parent=0 // pred_region
    _
  $region13: #{conv_bn_sub_relu.1} parent=0 // pred_fallthru
    _
  // Predicated region
  $region14: #{conv_bn_sub_relu.1} parent=0 // pred_check
    _
  $region15: #{conv_bn_sub_relu.1} parent=0 // pred_check_branch
    %16 = sbr.rel (0) target = $region17
  $region16: #{conv_bn_sub_relu.1} parent=0 // pred_region
    _
  $region17: #{conv_bn_sub_relu.1} parent=0 // pred_fallthru
    _
  %17 = vst [vmem:[#allocation2] sm:$0xff] 0.0
  %18 = vst [vmem:[#allocation2 + $0x108] sm:$0xff] 0.0
  %v19 = vld [vmem:[%s0] sm:$0x77]
  %v20 = vld [vmem:[%s0 + $0x8] sm:$0x77]
  %v21 = vld [vmem:[%s0 + $0x10] sm:$0x77]
  %v22 = vld [vmem:[%s0 + $0x18] sm:$0x77]
  %v23 = vld [vmem:[%s0 + $0x20] sm:$0x77]
  %v24 = vld [vmem:[%s0 + $0x28] sm:$0x77]
  %v25 = vld [vmem:[%s0 + $0x30] sm:$0x77]
  %v26 = vld [vmem:[%s0 + $0x38] sm:$0x77]
  %v27 = vld [vmem:[%s0 + $0x40] sm:$0x77]
  %v28 = vld [vmem:[%s0 + $0x48] sm:$0x77]
  %v29 = vld [vmem:[%s0 + $0x50] sm:$0x77]
  %v30 = vld [vmem:[%s0 + $0x58] sm:$0x77]
  %v31 = vld [vmem:[%s0 + $0x60] sm:$0x77]
  %v32 = vld [vmem:[%s0 + $0x68] sm:$0x77]
  %v33 = vld [vmem:[%s0 + $0x70] sm:$0x77]
  %v34 = vld [vmem:[%s0 + $0x78] sm:$0x77]
  %v51 = vcombine.high %v19, %v19
  %v52 = vcombine.high %v20, %v20
  %v53 = vcombine.high %v21, %v21
  %v54 = vcombine.high %v22, %v22
  %v55 = vcombine.high %v23, %v23
  %v56 = vcombine.high %v24, %v24
  %v57 = vcombine.high %v25, %v25
  %v58 = vcombine.high %v26, %v26
  %v59 = vcombine.high %v27, %v27
  %v60 = vcombine.high %v28, %v28
  %v61 = vcombine.high %v29, %v29
  %v62 = vcombine.high %v30, %v30
  %v63 = vcombine.high %v31, %v31
  %v64 = vcombine.high %v32, %v32
  %v65 = vcombine.high %v33, %v33
  %v66 = vcombine.high %v34, %v34
  %83 = vst [vmem:[#allocation2 + $0x8] sm:$0x7] %v19
  %84 = vst [vmem:[#allocation2 + $0x10] sm:$0x7] %v51
  %85 = vst [vmem:[#allocation2 + $0x18] sm:$0x7] %v20
  %86 = vst [vmem:[#allocation2 + $0x20] sm:$0x7] %v52
  %87 = vst [vmem:[#allocation2 + $0x28] sm:$0x7] %v21
  %88 = vst [vmem:[#allocation2 + $0x30] sm:$0x7] %v53
  %89 = vst [vmem:[#allocation2 + $0x38] sm:$0x7] %v22
  %90 = vst [vmem:[#allocation2 + $0x40] sm:$0x7] %v54
  %91 = vst [vmem:[#allocation2 + $0x48] sm:$0x7] %v23
  %92 = vst [vmem:[#allocation2 + $0x50] sm:$0x7] %v55
  %93 = vst [vmem:[#allocation2 + $0x58] sm:$0x7] %v24
  %94 = vst [vmem:[#allocation2 + $0x60] sm:$0x7] %v56
  %95 = vst [vmem:[#allocation2 + $0x68] sm:$0x7] %v25
  %96 = vst [vmem:[#allocation2 + $0x70] sm:$0x7] %v57
  %97 = vst [vmem:[#allocation2 + $0x78] sm:$0x7] %v26
  %98 = vst [vmem:[#allocation2 + $0x80] sm:$0x7] %v58
  %99 = vst [vmem:[#allocation2 + $0x88] sm:$0x7] %v27
  %100 = vst [vmem:[#allocation2 + $0x90] sm:$0x7] %v59
  %101 = vst [vmem:[#allocation2 + $0x98] sm:$0x7] %v28
  %102 = vst [vmem:[#allocation2 + $0xa0] sm:$0x7] %v60
  %103 = vst [vmem:[#allocation2 + $0xa8] sm:$0x7] %v29
  %104 = vst [vmem:[#allocation2 + $0xb0] sm:$0x7] %v61
  %105 = vst [vmem:[#allocation2 + $0xb8] sm:$0x7] %v30
  %106 = vst [vmem:[#allocation2 + $0xc0] sm:$0x7] %v62
  %107 = vst [vmem:[#allocation2 + $0xc8] sm:$0x7] %v31
  %108 = vst [vmem:[#allocation2 + $0xd0] sm:$0x7] %v63
  %109 = vst [vmem:[#allocation2 + $0xd8] sm:$0x7] %v32
  %110 = vst [vmem:[#allocation2 + $0xe0] sm:$0x7] %v64
  %111 = vst [vmem:[#allocation2 + $0xe8] sm:$0x7] %v33
  %112 = vst [vmem:[#allocation2 + $0xf0] sm:$0x7] %v65
  %113 = vst [vmem:[#allocation2 + $0xf8] sm:$0x7] %v34
  %114 = vst [vmem:[#allocation2 + $0x100] sm:$0x7] %v66
  %115 = vst [vmem:[#allocation2 + $0x8] sm:$0xf8] 0.0
  %116 = vst [vmem:[#allocation2 + $0x10] sm:$0xf8] 0.0
  %117 = vst [vmem:[#allocation2 + $0x18] sm:$0xf8] 0.0
  %118 = vst [vmem:[#allocation2 + $0x20] sm:$0xf8] 0.0
  %119 = vst [vmem:[#allocation2 + $0x28] sm:$0xf8] 0.0
  %120 = vst [vmem:[#allocation2 + $0x30] sm:$0xf8] 0.0
  %121 = vst [vmem:[#allocation2 + $0x38] sm:$0xf8] 0.0
  %122 = vst [vmem:[#allocation2 + $0x40] sm:$0xf8] 0.0
  %123 = vst [vmem:[#allocation2 + $0x48] sm:$0xf8] 0.0
  %124 = vst [vmem:[#allocation2 + $0x50] sm:$0xf8] 0.0
  %125 = vst [vmem:[#allocation2 + $0x58] sm:$0xf8] 0.0
  %126 = vst [vmem:[#allocation2 + $0x60] sm:$0xf8] 0.0
  %127 = vst [vmem:[#allocation2 + $0x68] sm:$0xf8] 0.0
  %128 = vst [vmem:[#allocation2 + $0x70] sm:$0xf8] 0.0
  %129 = vst [vmem:[#allocation2 + $0x78] sm:$0xf8] 0.0
  %130 = vst [vmem:[#allocation2 + $0x80] sm:$0xf8] 0.0
  %131 = vst [vmem:[#allocation2 + $0x88] sm:$0xf8] 0.0
  %132 = vst [vmem:[#allocation2 + $0x90] sm:$0xf8] 0.0
  %133 = vst [vmem:[#allocation2 + $0x98] sm:$0xf8] 0.0
  %134 = vst [vmem:[#allocation2 + $0xa0] sm:$0xf8] 0.0
  %135 = vst [vmem:[#allocation2 + $0xa8] sm:$0xf8] 0.0
  %136 = vst [vmem:[#allocation2 + $0xb0] sm:$0xf8] 0.0
  %137 = vst [vmem:[#allocation2 + $0xb8] sm:$0xf8] 0.0
  %138 = vst [vmem:[#allocation2 + $0xc0] sm:$0xf8] 0.0
  %139 = vst [vmem:[#allocation2 + $0xc8] sm:$0xf8] 0.0
  %140 = vst [vmem:[#allocation2 + $0xd0] sm:$0xf8] 0.0
  %141 = vst [vmem:[#allocation2 + $0xd8] sm:$0xf8] 0.0
  %142 = vst [vmem:[#allocation2 + $0xe0] sm:$0xf8] 0.0
  %143 = vst [vmem:[#allocation2 + $0xe8] sm:$0xf8] 0.0
  %144 = vst [vmem:[#allocation2 + $0xf0] sm:$0xf8] 0.0
  %145 = vst [vmem:[#allocation2 + $0xf8] sm:$0xf8] 0.0
  %146 = vst [vmem:[#allocation2 + $0x100] sm:$0xf8] 0.0
  %v147 = vlaneseq
  %v148 = vand.u32 %v147, 127
  %v149 = vadd.s32 %v148, 128
  %v150 = vadd.s32 %v148, 256
  %v151 = vadd.s32 %v148, 384
  %v152 = vand.u32 %v148, 63
  %v153 = vand.u32 %v149, 63
  %v154 = vand.u32 %v150, 63
  %v155 = vand.u32 %v151, 63
  %vm156 = vcmp.gt.s32.totalorder %v152, 0
  %vm157 = vcmp.gt.s32.totalorder %v153, 0
  %vm158 = vcmp.gt.s32.totalorder %v154, 0
  %vm159 = vcmp.gt.s32.totalorder %v155, 0
  %vm160 = vcmp.lt.s32.totalorder %v152, 63
  %vm161 = vcmp.lt.s32.totalorder %v153, 63
  %vm162 = vcmp.lt.s32.totalorder %v154, 63
  %vm163 = vcmp.lt.s32.totalorder %v155, 63
  %v164 = vld [vmem:[%s1] sm:$0xff]
  %v165 = vld [vmem:[#allocation2] sm:$0xff]
  %v166 = vld [vmem:[#allocation2 + $0x8] sm:$0xff]
  %v167 = vld [vmem:[#allocation2 + $0x10] sm:$0xff]
  %v168 = vld [vmem:[#allocation2 + $0x18] sm:$0xff]
  %v169 = vld [vmem:[#allocation2 + $0x20] sm:$0xff]
  %175 = vrot.lane.b32.xlu0 %v165, 65
  %v176 = vpop.permute.xlu0 %175
  %177 = vrot.lane.b32.xlu0 %v166, 65
  %v178 = vpop.permute.xlu0 %177
  %179 = vrot.lane.b32.xlu0 %v167, 65
  %v180 = vpop.permute.xlu0 %179
  %181 = vrot.lane.b32.xlu0 %v168, 65
  %v182 = vpop.permute.xlu0 %181
  %183 = vrot.lane.b32.xlu0 %v169, 65
  %v184 = vpop.permute.xlu0 %183
  %vm185 = vcmask 531456
  %v186 = vsel %vm185, %v176, %v178
  %v187 = vsel %vm185, %v178, %v180
  %v188 = vsel %vm185, %v180, %v182
  %v189 = vsel %vm185, %v182, %v184
  %v194 = vsel %vm156, %v186, 0.0
  %v195 = vsel %vm157, %v187, 0.0
  %v196 = vsel %vm158, %v188, 0.0
  %v197 = vsel %vm159, %v189, 0.0
  %198 = vrot.lane.b32.xlu0 %v165, 63
  %v199 = vpop.permute.xlu0 %198
  %200 = vrot.lane.b32.xlu0 %v166, 63
  %v201 = vpop.permute.xlu0 %200
  %202 = vrot.lane.b32.xlu0 %v167, 63
  %v203 = vpop.permute.xlu0 %202
  %204 = vrot.lane.b32.xlu0 %v168, 63
  %v205 = vpop.permute.xlu0 %204
  %206 = vrot.lane.b32.xlu0 %v169, 63
  %v207 = vpop.permute.xlu0 %206
  %vm208 = vcmask 515072
  %v209 = vsel %vm208, %v199, %v201
  %v210 = vsel %vm208, %v201, %v203
  %v211 = vsel %vm208, %v203, %v205
  %v212 = vsel %vm208, %v205, %v207
  %v217 = vsel %vm160, %v209, 0.0
  %v218 = vsel %vm161, %v210, 0.0
  %v219 = vsel %vm162, %v211, 0.0
  %v220 = vsel %vm163, %v212, 0.0
  %221 = vrot.lane.b32.xlu0 %v165, 1
  %v222 = vpop.permute.xlu0 %221
  %223 = vrot.lane.b32.xlu0 %v166, 1
  %v224 = vpop.permute.xlu0 %223
  %225 = vrot.lane.b32.xlu0 %v167, 1
  %v226 = vpop.permute.xlu0 %225
  %227 = vrot.lane.b32.xlu0 %v168, 1
  %v228 = vpop.permute.xlu0 %227
  %229 = vrot.lane.b32.xlu0 %v169, 1
  %v230 = vpop.permute.xlu0 %229
  %vm231 = vcmask 7168
  %v232 = vsel %vm231, %v222, %v224
  %v233 = vsel %vm231, %v224, %v226
  %v234 = vsel %vm231, %v226, %v228
  %v235 = vsel %vm231, %v228, %v230
  %v240 = vsel %vm156, %v232, 0.0
  %v241 = vsel %vm157, %v233, 0.0
  %v242 = vsel %vm158, %v234, 0.0
  %v243 = vsel %vm159, %v235, 0.0
  %v244 = vld [vmem:[#allocation2 + $0x28] sm:$0xff]
  %246 = vrot.lane.b32.xlu0 %v166, 127
  %v247 = vpop.permute.xlu0 %246
  %248 = vrot.lane.b32.xlu0 %v167, 127
  %v249 = vpop.permute.xlu0 %248
  %250 = vrot.lane.b32.xlu0 %v168, 127
  %v251 = vpop.permute.xlu0 %250
  %252 = vrot.lane.b32.xlu0 %v169, 127
  %v253 = vpop.permute.xlu0 %252
  %254 = vrot.lane.b32.xlu0 %v244, 127
  %v255 = vpop.permute.xlu0 %254
  %vm256 = vcmask 1039360
  %v257 = vsel %vm256, %v247, %v249
  %v258 = vsel %vm256, %v249, %v251
  %v259 = vsel %vm256, %v251, %v253
  %v260 = vsel %vm256, %v253, %v255
  %v265 = vsel %vm160, %v257, 0.0
  %v266 = vsel %vm161, %v258, 0.0
  %v267 = vsel %vm162, %v259, 0.0
  %v268 = vsel %vm163, %v260, 0.0
  %269 = vrot.lane.b32.xlu0 %v244, 65
  %v270 = vpop.permute.xlu0 %269
  %v271 = vsel %vm185, %v184, %v270
  %v273 = vsel %vm156, %v187, 0.0
  %v274 = vsel %vm157, %v188, 0.0
  %v275 = vsel %vm158, %v189, 0.0
  %v276 = vsel %vm159, %v271, 0.0
  %277 = vrot.lane.b32.xlu0 %v244, 63
  %v278 = vpop.permute.xlu0 %277
  %v279 = vsel %vm208, %v207, %v278
  %v281 = vsel %vm160, %v210, 0.0
  %v282 = vsel %vm161, %v211, 0.0
  %v283 = vsel %vm162, %v212, 0.0
  %v284 = vsel %vm163, %v279, 0.0
  %285 = vrot.lane.b32.xlu0 %v165, 64
  %v286 = vpop.permute.xlu0 %285
  %287 = vrot.lane.b32.xlu0 %v166, 64
  %v288 = vpop.permute.xlu0 %287
  %289 = vrot.lane.b32.xlu0 %v167, 64
  %v290 = vpop.permute.xlu0 %289
  %291 = vrot.lane.b32.xlu0 %v168, 64
  %v292 = vpop.permute.xlu0 %291
  %293 = vrot.lane.b32.xlu0 %v169, 64
  %v294 = vpop.permute.xlu0 %293
  %vm295 = vcmask 523264
  %v296 = vsel %vm295, %v286, %v288
  %v297 = vsel %vm295, %v288, %v290
  %v298 = vsel %vm295, %v290, %v292
  %v299 = vsel %vm295, %v292, %v294
  %304 = vrot.lane.b32.xlu0 %v244, 64
  %v305 = vpop.permute.xlu0 %304
  %v306 = vsel %vm295, %v294, %v305
  %vm308 = vcmask 588800
  %v310 = vsel %vm308, %v164, 0
  %312 = vmatprep.subr.mxu0 %v195
  %313 = vmatpush1.msra.mxu0 %v194
  %314 = vmatprep.subr.mxu0 %v297
  %315 = vmatpush1.msra.mxu0 %v296
  %316 = vmatprep.subr.mxu0 %v218
  %317 = vmatpush1.msra.mxu0 %v217
  %318 = vmatprep.subr.mxu0 %v241
  %319 = vmatpush1.msra.mxu0 %v240
  %320 = vmatprep.subr.mxu0 %v167
  %321 = vmatpush1.msra.mxu0 %v166
  %322 = vmatprep.subr.mxu0 %v266
  %323 = vmatpush1.msra.mxu0 %v265
  %324 = vmatprep.subr.mxu0 %v274
  %325 = vmatpush1.msra.mxu0 %v273
  %326 = vmatprep.subr.mxu0 %v298
  %327 = vmatpush1.msra.mxu0 %v297
  %328 = vmatprep.subr.mxu0 %v282
  %329 = vmatpush1.msra.mxu0 %v281
  %330 = vmatprep.subr.mxu0 0.0
  %331 = vmatpush1.msra.mxu0 0.0
  %332 = vmatprep.subr.mxu0 0.0
  %333 = vmatpush1.msra.mxu0 0.0
  %334 = vmatprep.subr.mxu0 0.0
  %335 = vmatpush1.msra.mxu0 0.0
  %336 = vmatprep.subr.mxu0 0.0
  %337 = vmatpush1.msra.mxu0 0.0
  %338 = vmatprep.subr.mxu0 0.0
  %339 = vmatpush1.msra.mxu0 0.0
  %340 = vmatprep.subr.mxu0 0.0
  %341 = vmatpush1.msra.mxu0 0.0
  %342 = vmatprep.subr.mxu0 0.0
  %343 = vmatpush1.msra.mxu0 0.0
  %344 = vmatprep.subr.mxu0 0.0
  %345 = vmatpush1.msra.mxu0 0.0
  %346 = vmatprep.subr.mxu0 0.0
  %347 = vmatpush1.msra.mxu0 0.0
  %348 = vmatprep.subr.mxu0 0.0
  %349 = vmatpush1.msra.mxu0 0.0
  %350 = vmatprep.subr.mxu0 0.0
  %351 = vmatpush1.msra.mxu0 0.0
  %352 = vmatprep.subr.mxu0 0.0
  %353 = vmatpush1.msra.mxu0 0.0
  %354 = vmatprep.subr.mxu0 0.0
  %355 = vmatpush1.msra.mxu0 0.0
  %356 = vmatprep.subr.mxu0 0.0
  %357 = vmatpush1.msra.mxu0 0.0
  %358 = vmatprep.subr.mxu0 0.0
  %359 = vmatpush1.msra.mxu0 0.0
  %360 = vmatprep.subr.mxu0 0.0
  %361 = vmatpush1.msra.mxu0 0.0
  %362 = vmatprep.subr.mxu0 0.0
  %363 = vmatpush1.msra.mxu0 0.0
  %364 = vmatprep.subr.mxu0 0.0
  %365 = vmatpush1.msra.mxu0 0.0
  %366 = vmatprep.subr.mxu0 0.0
  %367 = vmatpush1.msra.mxu0 0.0
  %368 = vmatprep.subr.mxu0 0.0
  %369 = vmatpush1.msra.mxu0 0.0
  %370 = vmatprep.subr.mxu0 0.0
  %371 = vmatpush1.msra.mxu0 0.0
  %372 = vmatprep.subr.mxu0 0.0
  %373 = vmatpush1.msra.mxu0 0.0
  %374 = vmatprep.subr.mxu0 0.0
  %375 = vmatpush1.msra.mxu0 0.0
  %376 = vmatprep.mubr.f32.mxu0 0.0
  %377 = vmatmul.mubr.f32.gmra.mrb[0].mxu0 %v310
  %v378 = vpop.f32.mrb[0].mxu0
  %v379 = vadd.f32 0.0, %v378
  %v380 = vpop.f32.mrb[0].mxu0
  %v381 = vadd.f32 0.0, %v380
  %382 = vdwg.mxu0
  %383 = vmatprep.subr.mxu0 %v197
  %384 = vmatpush1.msra.mxu0 %v196
  %385 = vmatprep.subr.mxu0 %v299
  %386 = vmatpush1.msra.mxu0 %v298
  %387 = vmatprep.subr.mxu0 %v220
  %388 = vmatpush1.msra.mxu0 %v219
  %389 = vmatprep.subr.mxu0 %v243
  %390 = vmatpush1.msra.mxu0 %v242
  %391 = vmatprep.subr.mxu0 %v169
  %392 = vmatpush1.msra.mxu0 %v168
  %393 = vmatprep.subr.mxu0 %v268
  %394 = vmatpush1.msra.mxu0 %v267
  %395 = vmatprep.subr.mxu0 %v276
  %396 = vmatpush1.msra.mxu0 %v275
  %397 = vmatprep.subr.mxu0 %v306
  %398 = vmatpush1.msra.mxu0 %v299
  %399 = vmatprep.subr.mxu0 %v284
  %400 = vmatpush1.msra.mxu0 %v283
  %401 = vmatprep.subr.mxu0 0.0
  %402 = vmatpush1.msra.mxu0 0.0
  %403 = vmatprep.subr.mxu0 0.0
  %404 = vmatpush1.msra.mxu0 0.0
  %405 = vmatprep.subr.mxu0 0.0
  %406 = vmatpush1.msra.mxu0 0.0
  %407 = vmatprep.subr.mxu0 0.0
  %408 = vmatpush1.msra.mxu0 0.0
  %409 = vmatprep.subr.mxu0 0.0
  %410 = vmatpush1.msra.mxu0 0.0
  %411 = vmatprep.subr.mxu0 0.0
  %412 = vmatpush1.msra.mxu0 0.0
  %413 = vmatprep.subr.mxu0 0.0
  %414 = vmatpush1.msra.mxu0 0.0
  %415 = vmatprep.subr.mxu0 0.0
  %416 = vmatpush1.msra.mxu0 0.0
  %417 = vmatprep.subr.mxu0 0.0
  %418 = vmatpush1.msra.mxu0 0.0
  %419 = vmatprep.subr.mxu0 0.0
  %420 = vmatpush1.msra.mxu0 0.0
  %421 = vmatprep.subr.mxu0 0.0
  %422 = vmatpush1.msra.mxu0 0.0
  %423 = vmatprep.subr.mxu0 0.0
  %424 = vmatpush1.msra.mxu0 0.0
  %425 = vmatprep.subr.mxu0 0.0
  %426 = vmatpush1.msra.mxu0 0.0
  %427 = vmatprep.subr.mxu0 0.0
  %428 = vmatpush1.msra.mxu0 0.0
  %429 = vmatprep.subr.mxu0 0.0
  %430 = vmatpush1.msra.mxu0 0.0
  %431 = vmatprep.subr.mxu0 0.0
  %432 = vmatpush1.msra.mxu0 0.0
  %433 = vmatprep.subr.mxu0 0.0
  %434 = vmatpush1.msra.mxu0 0.0
  %435 = vmatprep.subr.mxu0 0.0
  %436 = vmatpush1.msra.mxu0 0.0
  %437 = vmatprep.subr.mxu0 0.0
  %438 = vmatpush1.msra.mxu0 0.0
  %439 = vmatprep.subr.mxu0 0.0
  %440 = vmatpush1.msra.mxu0 0.0
  %441 = vmatprep.subr.mxu0 0.0
  %442 = vmatpush1.msra.mxu0 0.0
  %443 = vmatprep.subr.mxu0 0.0
  %444 = vmatpush1.msra.mxu0 0.0
  %445 = vmatprep.subr.mxu0 0.0
  %446 = vmatpush1.msra.mxu0 0.0
  %447 = vmatprep.mubr.f32.mxu0 0.0
  %448 = vmatmul.mubr.f32.gmra.mrb[0].mxu0 %v310
  %v449 = vpop.f32.mrb[0].mxu0
  %v450 = vadd.f32 0.0, %v449
  %v451 = vpop.f32.mrb[0].mxu0
  %v452 = vadd.f32 0.0, %v451
  %453 = vdwg.mxu0
  %v454 = vadd.f32 %v379, %v381
  %v455 = vadd.f32 %v454, %v450
  %v456 = vadd.f32 %v455, %v452
  %457 = vadd.xlane.f32.xlu0 %v456
  %v458 = vpop.xlane.xlu0 %457
  %v459 = vadd.f32 %v458, 0.0
  %v460 = vmul.f32 %v379, %v379
  %v461 = vmul.f32 %v381, %v381
  %v462 = vmul.f32 %v450, %v450
  %v463 = vmul.f32 %v452, %v452
  %v464 = vadd.f32 %v460, %v461
  %v465 = vadd.f32 %v464, %v462
  %v466 = vadd.f32 %v465, %v463
  %467 = vadd.xlane.f32.xlu0 %v466
  %v468 = vpop.xlane.xlu0 %467
  %v469 = vadd.f32 %v468, 0.0
  %470 = vst [vmem:[%s4] sm:$0xff] %v379
  %471 = vst [vmem:[%s4 + $0x8] sm:$0xff] %v381
  %472 = vst [vmem:[%s4 + $0x10] sm:$0xff] %v450
  %473 = vst [vmem:[%s4 + $0x18] sm:$0xff] %v452
  %v474 = vld [vmem:[#allocation2 + $0x20] sm:$0xff]
  %v475 = vld [vmem:[#allocation2 + $0x28] sm:$0xff]
  %v476 = vld [vmem:[#allocation2 + $0x30] sm:$0xff]
  %v477 = vld [vmem:[#allocation2 + $0x38] sm:$0xff]
  %v478 = vld [vmem:[#allocation2 + $0x40] sm:$0xff]
  %484 = vrot.lane.b32.xlu0 %v474, 65
  %v485 = vpop.permute.xlu0 %484
  %486 = vrot.lane.b32.xlu0 %v475, 65
  %v487 = vpop.permute.xlu0 %486
  %488 = vrot.lane.b32.xlu0 %v476, 65
  %v489 = vpop.permute.xlu0 %488
  %490 = vrot.lane.b32.xlu0 %v477, 65
  %v491 = vpop.permute.xlu0 %490
  %492 = vrot.lane.b32.xlu0 %v478, 65
  %v493 = vpop.permute.xlu0 %492
  %v494 = vsel %vm185, %v485, %v487
  %v495 = vsel %vm185, %v487, %v489
  %v496 = vsel %vm185, %v489, %v491
  %v497 = vsel %vm185, %v491, %v493
  %v502 = vsel %vm156, %v494, 0.0
  %v503 = vsel %vm157, %v495, 0.0
  %v504 = vsel %vm158, %v496, 0.0
  %v505 = vsel %vm159, %v497, 0.0
  %506 = vrot.lane.b32.xlu0 %v474, 63
  %v507 = vpop.permute.xlu0 %506
  %508 = vrot.lane.b32.xlu0 %v475, 63
  %v509 = vpop.permute.xlu0 %508
  %510 = vrot.lane.b32.xlu0 %v476, 63
  %v511 = vpop.permute.xlu0 %510
  %512 = vrot.lane.b32.xlu0 %v477, 63
  %v513 = vpop.permute.xlu0 %512
  %514 = vrot.lane.b32.xlu0 %v478, 63
  %v515 = vpop.permute.xlu0 %514
  %v516 = vsel %vm208, %v507, %v509
  %v517 = vsel %vm208, %v509, %v511
  %v518 = vsel %vm208, %v511, %v513
  %v519 = vsel %vm208, %v513, %v515
  %v524 = vsel %vm160, %v516, 0.0
  %v525 = vsel %vm161, %v517, 0.0
  %v526 = vsel %vm162, %v518, 0.0
  %v527 = vsel %vm163, %v519, 0.0
  %528 = vrot.lane.b32.xlu0 %v474, 1
  %v529 = vpop.permute.xlu0 %528
  %530 = vrot.lane.b32.xlu0 %v475, 1
  %v531 = vpop.permute.xlu0 %530
  %532 = vrot.lane.b32.xlu0 %v476, 1
  %v533 = vpop.permute.xlu0 %532
  %534 = vrot.lane.b32.xlu0 %v477, 1
  %v535 = vpop.permute.xlu0 %534
  %536 = vrot.lane.b32.xlu0 %v478, 1
  %v537 = vpop.permute.xlu0 %536
  %v538 = vsel %vm231, %v529, %v531
  %v539 = vsel %vm231, %v531, %v533
  %v540 = vsel %vm231, %v533, %v535
  %v541 = vsel %vm231, %v535, %v537
  %v546 = vsel %vm156, %v538, 0.0
  %v547 = vsel %vm157, %v539, 0.0
  %v548 = vsel %vm158, %v540, 0.0
  %v549 = vsel %vm159, %v541, 0.0
  %v550 = vld [vmem:[#allocation2 + $0x48] sm:$0xff]
  %552 = vrot.lane.b32.xlu0 %v475, 127
  %v553 = vpop.permute.xlu0 %552
  %554 = vrot.lane.b32.xlu0 %v476, 127
  %v555 = vpop.permute.xlu0 %554
  %556 = vrot.lane.b32.xlu0 %v477, 127
  %v557 = vpop.permute.xlu0 %556
  %558 = vrot.lane.b32.xlu0 %v478, 127
  %v559 = vpop.permute.xlu0 %558
  %560 = vrot.lane.b32.xlu0 %v550, 127
  %v561 = vpop.permute.xlu0 %560
  %v562 = vsel %vm256, %v553, %v555
  %v563 = vsel %vm256, %v555, %v557
  %v564 = vsel %vm256, %v557, %v559
  %v565 = vsel %vm256, %v559, %v561
  %v570 = vsel %vm160, %v562, 0.0
  %v571 = vsel %vm161, %v563, 0.0
  %v572 = vsel %vm162, %v564, 0.0
  %v573 = vsel %vm163, %v565, 0.0
  %574 = vrot.lane.b32.xlu0 %v550, 65
  %v575 = vpop.permute.xlu0 %574
  %v576 = vsel %vm185, %v493, %v575
  %v578 = vsel %vm156, %v495, 0.0
  %v579 = vsel %vm157, %v496, 0.0
  %v580 = vsel %vm158, %v497, 0.0
  %v581 = vsel %vm159, %v576, 0.0
  %582 = vrot.lane.b32.xlu0 %v550, 63
  %v583 = vpop.permute.xlu0 %582
  %v584 = vsel %vm208, %v515, %v583
  %v586 = vsel %vm160, %v517, 0.0
  %v587 = vsel %vm161, %v518, 0.0
  %v588 = vsel %vm162, %v519, 0.0
  %v589 = vsel %vm163, %v584, 0.0
  %590 = vrot.lane.b32.xlu0 %v474, 64
  %v591 = vpop.permute.xlu0 %590
  %592 = vrot.lane.b32.xlu0 %v475, 64
  %v593 = vpop.permute.xlu0 %592
  %594 = vrot.lane.b32.xlu0 %v476, 64
  %v595 = vpop.permute.xlu0 %594
  %596 = vrot.lane.b32.xlu0 %v477, 64
  %v597 = vpop.permute.xlu0 %596
  %598 = vrot.lane.b32.xlu0 %v478, 64
  %v599 = vpop.permute.xlu0 %598
  %v600 = vsel %vm295, %v591, %v593
  %v601 = vsel %vm295, %v593, %v595
  %v602 = vsel %vm295, %v595, %v597
  %v603 = vsel %vm295, %v597, %v599
  %608 = vrot.lane.b32.xlu0 %v550, 64
  %v609 = vpop.permute.xlu0 %608
  %v610 = vsel %vm295, %v599, %v609
  %612 = vmatprep.subr.mxu0 %v503
  %613 = vmatpush1.msra.mxu0 %v502
  %614 = vmatprep.subr.mxu0 %v601
  %615 = vmatpush1.msra.mxu0 %v600
  %616 = vmatprep.subr.mxu0 %v525
  %617 = vmatpush1.msra.mxu0 %v524
  %618 = vmatprep.subr.mxu0 %v547
  %619 = vmatpush1.msra.mxu0 %v546
  %620 = vmatprep.subr.mxu0 %v476
  %621 = vmatpush1.msra.mxu0 %v475
  %622 = vmatprep.subr.mxu0 %v571
  %623 = vmatpush1.msra.mxu0 %v570
  %624 = vmatprep.subr.mxu0 %v579
  %625 = vmatpush1.msra.mxu0 %v578
  %626 = vmatprep.subr.mxu0 %v602
  %627 = vmatpush1.msra.mxu0 %v601
  %628 = vmatprep.subr.mxu0 %v587
  %629 = vmatpush1.msra.mxu0 %v586
  %630 = vmatprep.subr.mxu0 0.0
  %631 = vmatpush1.msra.mxu0 0.0
  %632 = vmatprep.subr.mxu0 0.0
  %633 = vmatpush1.msra.mxu0 0.0
  %634 = vmatprep.subr.mxu0 0.0
  %635 = vmatpush1.msra.mxu0 0.0
  %636 = vmatprep.subr.mxu0 0.0
  %637 = vmatpush1.msra.mxu0 0.0
  %638 = vmatprep.subr.mxu0 0.0
  %639 = vmatpush1.msra.mxu0 0.0
  %640 = vmatprep.subr.mxu0 0.0
  %641 = vmatpush1.msra.mxu0 0.0
  %642 = vmatprep.subr.mxu0 0.0
  %643 = vmatpush1.msra.mxu0 0.0
  %644 = vmatprep.subr.mxu0 0.0
  %645 = vmatpush1.msra.mxu0 0.0
  %646 = vmatprep.subr.mxu0 0.0
  %647 = vmatpush1.msra.mxu0 0.0
  %648 = vmatprep.subr.mxu0 0.0
  %649 = vmatpush1.msra.mxu0 0.0
  %650 = vmatprep.subr.mxu0 0.0
  %651 = vmatpush1.msra.mxu0 0.0
  %652 = vmatprep.subr.mxu0 0.0
  %653 = vmatpush1.msra.mxu0 0.0
  %654 = vmatprep.subr.mxu0 0.0
  %655 = vmatpush1.msra.mxu0 0.0
  %656 = vmatprep.subr.mxu0 0.0
  %657 = vmatpush1.msra.mxu0 0.0
  %658 = vmatprep.subr.mxu0 0.0
  %659 = vmatpush1.msra.mxu0 0.0
  %660 = vmatprep.subr.mxu0 0.0
  %661 = vmatpush1.msra.mxu0 0.0
  %662 = vmatprep.subr.mxu0 0.0
  %663 = vmatpush1.msra.mxu0 0.0
  %664 = vmatprep.subr.mxu0 0.0
  %665 = vmatpush1.msra.mxu0 0.0
  %666 = vmatprep.subr.mxu0 0.0
  %667 = vmatpush1.msra.mxu0 0.0
  %668 = vmatprep.subr.mxu0 0.0
  %669 = vmatpush1.msra.mxu0 0.0
  %670 = vmatprep.subr.mxu0 0.0
  %671 = vmatpush1.msra.mxu0 0.0
  %672 = vmatprep.subr.mxu0 0.0
  %673 = vmatpush1.msra.mxu0 0.0
  %674 = vmatprep.subr.mxu0 0.0
  %675 = vmatpush1.msra.mxu0 0.0
  %676 = vmatprep.mubr.f32.mxu0 0.0
  %677 = vmatmul.mubr.f32.gmra.mrb[0].mxu0 %v310
  %v678 = vpop.f32.mrb[0].mxu0
  %v679 = vadd.f32 0.0, %v678
  %v680 = vpop.f32.mrb[0].mxu0
  %v681 = vadd.f32 0.0, %v680
  %682 = vdwg.mxu0
  %683 = vmatprep.subr.mxu0 %v505
  %684 = vmatpush1.msra.mxu0 %v504
  %685 = vmatprep.subr.mxu0 %v603
  %686 = vmatpush1.msra.mxu0 %v602
  %687 = vmatprep.subr.mxu0 %v527
  %688 = vmatpush1.msra.mxu0 %v526
  %689 = vmatprep.subr.mxu0 %v549
  %690 = vmatpush1.msra.mxu0 %v548
  %691 = vmatprep.subr.mxu0 %v478
  %692 = vmatpush1.msra.mxu0 %v477
  %693 = vmatprep.subr.mxu0 %v573
  %694 = vmatpush1.msra.mxu0 %v572
  %695 = vmatprep.subr.mxu0 %v581
  %696 = vmatpush1.msra.mxu0 %v580
  %697 = vmatprep.subr.mxu0 %v610
  %698 = vmatpush1.msra.mxu0 %v603
  %699 = vmatprep.subr.mxu0 %v589
  %700 = vmatpush1.msra.mxu0 %v588
  %701 = vmatprep.subr.mxu0 0.0
  %702 = vmatpush1.msra.mxu0 0.0
  %703 = vmatprep.subr.mxu0 0.0
  %704 = vmatpush1.msra.mxu0 0.0
  %705 = vmatprep.subr.mxu0 0.0
  %706 = vmatpush1.msra.mxu0 0.0
  %707 = vmatprep.subr.mxu0 0.0
  %708 = vmatpush1.msra.mxu0 0.0
  %709 = vmatprep.subr.mxu0 0.0
  %710 = vmatpush1.msra.mxu0 0.0
  %711 = vmatprep.subr.mxu0 0.0
  %712 = vmatpush1.msra.mxu0 0.0
  %713 = vmatprep.subr.mxu0 0.0
  %714 = vmatpush1.msra.mxu0 0.0
  %715 = vmatprep.subr.mxu0 0.0
  %716 = vmatpush1.msra.mxu0 0.0
  %717 = vmatprep.subr.mxu0 0.0
  %718 = vmatpush1.msra.mxu0 0.0
  %719 = vmatprep.subr.mxu0 0.0
  %720 = vmatpush1.msra.mxu0 0.0
  %721 = vmatprep.subr.mxu0 0.0
  %722 = vmatpush1.msra.mxu0 0.0
  %723 = vmatprep.subr.mxu0 0.0
  %724 = vmatpush1.msra.mxu0 0.0
  %725 = vmatprep.subr.mxu0 0.0
  %726 = vmatpush1.msra.mxu0 0.0
  %727 = vmatprep.subr.mxu0 0.0
  %728 = vmatpush1.msra.mxu0 0.0
  %729 = vmatprep.subr.mxu0 0.0
  %730 = vmatpush1.msra.mxu0 0.0
  %731 = vmatprep.subr.mxu0 0.0
  %732 = vmatpush1.msra.mxu0 0.0
  %733 = vmatprep.subr.mxu0 0.0
  %734 = vmatpush1.msra.mxu0 0.0
  %735 = vmatprep.subr.mxu0 0.0
  %736 = vmatpush1.msra.mxu0 0.0
  %737 = vmatprep.subr.mxu0 0.0
  %738 = vmatpush1.msra.mxu0 0.0
  %739 = vmatprep.subr.mxu0 0.0
  %740 = vmatpush1.msra.mxu0 0.0
  %741 = vmatprep.subr.mxu0 0.0
  %742 = vmatpush1.msra.mxu0 0.0
  %743 = vmatprep.subr.mxu0 0.0
  %744 = vmatpush1.msra.mxu0 0.0
  %745 = vmatprep.subr.mxu0 0.0
  %746 = vmatpush1.msra.mxu0 0.0
  %747 = vmatprep.mubr.f32.mxu0 0.0
  %748 = vmatmul.mubr.f32.gmra.mrb[0].mxu0 %v310
  %v749 = vpop.f32.mrb[0].mxu0
  %v750 = vadd.f32 0.0, %v749
  %v751 = vpop.f32.mrb[0].mxu0
  %v752 = vadd.f32 0.0, %v751
  %753 = vdwg.mxu0
  %v754 = vadd.f32 %v679, %v681
  %v755 = vadd.f32 %v754, %v750
  %v756 = vadd.f32 %v755, %v752
  %757 = vadd.xlane.f32.xlu0 %v756
  %v758 = vpop.xlane.xlu0 %757
  %v759 = vadd.f32 %v459, %v758
  %v760 = vmul.f32 %v679, %v679
  %v761 = vmul.f32 %v681, %v681
  %v762 = vmul.f32 %v750, %v750
  %v763 = vmul.f32 %v752, %v752
  %v764 = vadd.f32 %v760, %v761
  %v765 = vadd.f32 %v764, %v762
  %v766 = vadd.f32 %v765, %v763
  %767 = vadd.xlane.f32.xlu0 %v766
  %v768 = vpop.xlane.xlu0 %767
  %v769 = vadd.f32 %v469, %v768
  %770 = vst [vmem:[%s4 + $0x20] sm:$0xff] %v679
  %771 = vst [vmem:[%s4 + $0x28] sm:$0xff] %v681
  %772 = vst [vmem:[%s4 + $0x30] sm:$0xff] %v750
  %773 = vst [vmem:[%s4 + $0x38] sm:$0xff] %v752
  %v774 = vld [vmem:[#allocation2 + $0x40] sm:$0xff]
  %v775 = vld [vmem:[#allocation2 + $0x48] sm:$0xff]
  %v776 = vld [vmem:[#allocation2 + $0x50] sm:$0xff]
  %v777 = vld [vmem:[#allocation2 + $0x58] sm:$0xff]
  %v778 = vld [vmem:[#allocation2 + $0x60] sm:$0xff]
  %784 = vrot.lane.b32.xlu0 %v774, 65
  %v785 = vpop.permute.xlu0 %784
  %786 = vrot.lane.b32.xlu0 %v775, 65
  %v787 = vpop.permute.xlu0 %786
  %788 = vrot.lane.b32.xlu0 %v776, 65
  %v789 = vpop.permute.xlu0 %788
  %790 = vrot.lane.b32.xlu0 %v777, 65
  %v791 = vpop.permute.xlu0 %790
  %792 = vrot.lane.b32.xlu0 %v778, 65
  %v793 = vpop.permute.xlu0 %792
  %v794 = vsel %vm185, %v785, %v787
  %v795 = vsel %vm185, %v787, %v789
  %v796 = vsel %vm185, %v789, %v791
  %v797 = vsel %vm185, %v791, %v793
  %v802 = vsel %vm156, %v794, 0.0
  %v803 = vsel %vm157, %v795, 0.0
  %v804 = vsel %vm158, %v796, 0.0
  %v805 = vsel %vm159, %v797, 0.0
  %806 = vrot.lane.b32.xlu0 %v774, 63
  %v807 = vpop.permute.xlu0 %806
  %808 = vrot.lane.b32.xlu0 %v775, 63
  %v809 = vpop.permute.xlu0 %808
  %810 = vrot.lane.b32.xlu0 %v776, 63
  %v811 = vpop.permute.xlu0 %810
  %812 = vrot.lane.b32.xlu0 %v777, 63
  %v813 = vpop.permute.xlu0 %812
  %814 = vrot.lane.b32.xlu0 %v778, 63
  %v815 = vpop.permute.xlu0 %814
  %v816 = vsel %vm208, %v807, %v809
  %v817 = vsel %vm208, %v809, %v811
  %v818 = vsel %vm208, %v811, %v813
  %v819 = vsel %vm208, %v813, %v815
  %v824 = vsel %vm160, %v816, 0.0
  %v825 = vsel %vm161, %v817, 0.0
  %v826 = vsel %vm162, %v818, 0.0
  %v827 = vsel %vm163, %v819, 0.0
  %828 = vrot.lane.b32.xlu0 %v774, 1
  %v829 = vpop.permute.xlu0 %828
  %830 = vrot.lane.b32.xlu0 %v775, 1
  %v831 = vpop.permute.xlu0 %830
  %832 = vrot.lane.b32.xlu0 %v776, 1
  %v833 = vpop.permute.xlu0 %832
  %834 = vrot.lane.b32.xlu0 %v777, 1
  %v835 = vpop.permute.xlu0 %834
  %836 = vrot.lane.b32.xlu0 %v778, 1
  %v837 = vpop.permute.xlu0 %836
  %v838 = vsel %vm231, %v829, %v831
  %v839 = vsel %vm231, %v831, %v833
  %v840 = vsel %vm231, %v833, %v835
  %v841 = vsel %vm231, %v835, %v837
  %v846 = vsel %vm156, %v838, 0.0
  %v847 = vsel %vm157, %v839, 0.0
  %v848 = vsel %vm158, %v840, 0.0
  %v849 = vsel %vm159, %v841, 0.0
  %v850 = vld [vmem:[#allocation2 + $0x68] sm:$0xff]
  %852 = vrot.lane.b32.xlu0 %v775, 127
  %v853 = vpop.permute.xlu0 %852
  %854 = vrot.lane.b32.xlu0 %v776, 127
  %v855 = vpop.permute.xlu0 %854
  %856 = vrot.lane.b32.xlu0 %v777, 127
  %v857 = vpop.permute.xlu0 %856
  %858 = vrot.lane.b32.xlu0 %v778, 127
  %v859 = vpop.permute.xlu0 %858
  %860 = vrot.lane.b32.xlu0 %v850, 127
  %v861 = vpop.permute.xlu0 %860
  %v862 = vsel %vm256, %v853, %v855
  %v863 = vsel %vm256, %v855, %v857
  %v864 = vsel %vm256, %v857, %v859
  %v865 = vsel %vm256, %v859, %v861
  %v870 = vsel %vm160, %v862, 0.0
  %v871 = vsel %vm161, %v863, 0.0
  %v872 = vsel %vm162, %v864, 0.0
  %v873 = vsel %vm163, %v865, 0.0
  %874 = vrot.lane.b32.xlu0 %v850, 65
  %v875 = vpop.permute.xlu0 %874
  %v876 = vsel %vm185, %v793, %v875
  %v878 = vsel %vm156, %v795, 0.0
  %v879 = vsel %vm157, %v796, 0.0
  %v880 = vsel %vm158, %v797, 0.0
  %v881 = vsel %vm159, %v876, 0.0
  %882 = vrot.lane.b32.xlu0 %v850, 63
  %v883 = vpop.permute.xlu0 %882
  %v884 = vsel %vm208, %v815, %v883
  %v886 = vsel %vm160, %v817, 0.0
  %v887 = vsel %vm161, %v818, 0.0
  %v888 = vsel %vm162, %v819, 0.0
  %v889 = vsel %vm163, %v884, 0.0
  %890 = vrot.lane.b32.xlu0 %v774, 64
  %v891 = vpop.permute.xlu0 %890
  %892 = vrot.lane.b32.xlu0 %v775, 64
  %v893 = vpop.permute.xlu0 %892
  %894 = vrot.lane.b32.xlu0 %v776, 64
  %v895 = vpop.permute.xlu0 %894
  %896 = vrot.lane.b32.xlu0 %v777, 64
  %v897 = vpop.permute.xlu0 %896
  %898 = vrot.lane.b32.xlu0 %v778, 64
  %v899 = vpop.permute.xlu0 %898
  %v900 = vsel %vm295, %v891, %v893
  %v901 = vsel %vm295, %v893, %v895
  %v902 = vsel %vm295, %v895, %v897
  %v903 = vsel %vm295, %v897, %v899
  %908 = vrot.lane.b32.xlu0 %v850, 64
  %v909 = vpop.permute.xlu0 %908
  %v910 = vsel %vm295, %v899, %v909
  %912 = vmatprep.subr.mxu0 %v803
  %913 = vmatpush1.msra.mxu0 %v802
  %914 = vmatprep.subr.mxu0 %v901
  %915 = vmatpush1.msra.mxu0 %v900
  %916 = vmatprep.subr.mxu0 %v825
  %917 = vmatpush1.msra.mxu0 %v824
  %918 = vmatprep.subr.mxu0 %v847
  %919 = vmatpush1.msra.mxu0 %v846
  %920 = vmatprep.subr.mxu0 %v776
  %921 = vmatpush1.msra.mxu0 %v775
  %922 = vmatprep.subr.mxu0 %v871
  %923 = vmatpush1.msra.mxu0 %v870
  %924 = vmatprep.subr.mxu0 %v879
  %925 = vmatpush1.msra.mxu0 %v878
  %926 = vmatprep.subr.mxu0 %v902
  %927 = vmatpush1.msra.mxu0 %v901
  %928 = vmatprep.subr.mxu0 %v887
  %929 = vmatpush1.msra.mxu0 %v886
  %930 = vmatprep.subr.mxu0 0.0
  %931 = vmatpush1.msra.mxu0 0.0
  %932 = vmatprep.subr.mxu0 0.0
  %933 = vmatpush1.msra.mxu0 0.0
  %934 = vmatprep.subr.mxu0 0.0
  %935 = vmatpush1.msra.mxu0 0.0
  %936 = vmatprep.subr.mxu0 0.0
  %937 = vmatpush1.msra.mxu0 0.0
  %938 = vmatprep.subr.mxu0 0.0
  %939 = vmatpush1.msra.mxu0 0.0
  %940 = vmatprep.subr.mxu0 0.0
  %941 = vmatpush1.msra.mxu0 0.0
  %942 = vmatprep.subr.mxu0 0.0
  %943 = vmatpush1.msra.mxu0 0.0
  %944 = vmatprep.subr.mxu0 0.0
  %945 = vmatpush1.msra.mxu0 0.0
  %946 = vmatprep.subr.mxu0 0.0
  %947 = vmatpush1.msra.mxu0 0.0
  %948 = vmatprep.subr.mxu0 0.0
  %949 = vmatpush1.msra.mxu0 0.0
  %950 = vmatprep.subr.mxu0 0.0
  %951 = vmatpush1.msra.mxu0 0.0
  %952 = vmatprep.subr.mxu0 0.0
  %953 = vmatpush1.msra.mxu0 0.0
  %954 = vmatprep.subr.mxu0 0.0
  %955 = vmatpush1.msra.mxu0 0.0
  %956 = vmatprep.subr.mxu0 0.0
  %957 = vmatpush1.msra.mxu0 0.0
  %958 = vmatprep.subr.mxu0 0.0
  %959 = vmatpush1.msra.mxu0 0.0
  %960 = vmatprep.subr.mxu0 0.0
  %961 = vmatpush1.msra.mxu0 0.0
  %962 = vmatprep.subr.mxu0 0.0
  %963 = vmatpush1.msra.mxu0 0.0
  %964 = vmatprep.subr.mxu0 0.0
  %965 = vmatpush1.msra.mxu0 0.0
  %966 = vmatprep.subr.mxu0 0.0
  %967 = vmatpush1.msra.mxu0 0.0
  %968 = vmatprep.subr.mxu0 0.0
  %969 = vmatpush1.msra.mxu0 0.0
  %970 = vmatprep.subr.mxu0 0.0
  %971 = vmatpush1.msra.mxu0 0.0
  %972 = vmatprep.subr.mxu0 0.0
  %973 = vmatpush1.msra.mxu0 0.0
  %974 = vmatprep.subr.mxu0 0.0
  %975 = vmatpush1.msra.mxu0 0.0
  %976 = vmatprep.mubr.f32.mxu0 0.0
  %977 = vmatmul.mubr.f32.gmra.mrb[0].mxu0 %v310
  %v978 = vpop.f32.mrb[0].mxu0
  %v979 = vadd.f32 0.0, %v978
  %v980 = vpop.f32.mrb[0].mxu0
  %v981 = vadd.f32 0.0, %v980
  %982 = vdwg.mxu0
  %983 = vmatprep.subr.mxu0 %v805
  %984 = vmatpush1.msra.mxu0 %v804
  %985 = vmatprep.subr.mxu0 %v903
  %986 = vmatpush1.msra.mxu0 %v902
  %987 = vmatprep.subr.mxu0 %v827
  %988 = vmatpush1.msra.mxu0 %v826
  %989 = vmatprep.subr.mxu0 %v849
  %990 = vmatpush1.msra.mxu0 %v848
  %991 = vmatprep.subr.mxu0 %v778
  %992 = vmatpush1.msra.mxu0 %v777
  %993 = vmatprep.subr.mxu0 %v873
  %994 = vmatpush1.msra.mxu0 %v872
  %995 = vmatprep.subr.mxu0 %v881
  %996 = vmatpush1.msra.mxu0 %v880
  %997 = vmatprep.subr.mxu0 %v910
  %998 = vmatpush1.msra.mxu0 %v903
  %999 = vmatprep.subr.mxu0 %v889
  %1000 = vmatpush1.msra.mxu0 %v888
  %1001 = vmatprep.subr.mxu0 0.0
  %1002 = vmatpush1.msra.mxu0 0.0
  %1003 = vmatprep.subr.mxu0 0.0
  %1004 = vmatpush1.msra.mxu0 0.0
  %1005 = vmatprep.subr.mxu0 0.0
  %1006 = vmatpush1.msra.mxu0 0.0
  %1007 = vmatprep.subr.mxu0 0.0
  %1008 = vmatpush1.msra.mxu0 0.0
  %1009 = vmatprep.subr.mxu0 0.0
  %1010 = vmatpush1.msra.mxu0 0.0
  %1011 = vmatprep.subr.mxu0 0.0
  %1012 = vmatpush1.msra.mxu0 0.0
  %1013 = vmatprep.subr.mxu0 0.0
  %1014 = vmatpush1.msra.mxu0 0.0
  %1015 = vmatprep.subr.mxu0 0.0
  %1016 = vmatpush1.msra.mxu0 0.0
  %1017 = vmatprep.subr.mxu0 0.0
  %1018 = vmatpush1.msra.mxu0 0.0
  %1019 = vmatprep.subr.mxu0 0.0
  %1020 = vmatpush1.msra.mxu0 0.0
  %1021 = vmatprep.subr.mxu0 0.0
  %1022 = vmatpush1.msra.mxu0 0.0
  %1023 = vmatprep.subr.mxu0 0.0
  %1024 = vmatpush1.msra.mxu0 0.0
  %1025 = vmatprep.subr.mxu0 0.0
  %1026 = vmatpush1.msra.mxu0 0.0
  %1027 = vmatprep.subr.mxu0 0.0
  %1028 = vmatpush1.msra.mxu0 0.0
  %1029 = vmatprep.subr.mxu0 0.0
  %1030 = vmatpush1.msra.mxu0 0.0
  %1031 = vmatprep.subr.mxu0 0.0
  %1032 = vmatpush1.msra.mxu0 0.0
  %1033 = vmatprep.subr.mxu0 0.0
  %1034 = vmatpush1.msra.mxu0 0.0
  %1035 = vmatprep.subr.mxu0 0.0
  %1036 = vmatpush1.msra.mxu0 0.0
  %1037 = vmatprep.subr.mxu0 0.0
  %1038 = vmatpush1.msra.mxu0 0.0
  %1039 = vmatprep.subr.mxu0 0.0
  %1040 = vmatpush1.msra.mxu0 0.0
  %1041 = vmatprep.subr.mxu0 0.0
  %1042 = vmatpush1.msra.mxu0 0.0
  %1043 = vmatprep.subr.mxu0 0.0
  %1044 = vmatpush1.msra.mxu0 0.0
  %1045 = vmatprep.subr.mxu0 0.0
  %1046 = vmatpush1.msra.mxu0 0.0
  %1047 = vmatprep.mubr.f32.mxu0 0.0
  %1048 = vmatmul.mubr.f32.gmra.mrb[0].mxu0 %v310
  %v1049 = vpop.f32.mrb[0].mxu0
  %v1050 = vadd.f32 0.0, %v1049
  %v1051 = vpop.f32.mrb[0].mxu0
  %v1052 = vadd.f32 0.0, %v1051
  %1053 = vdwg.mxu0
  %v1054 = vadd.f32 %v979, %v981
  %v1055 = vadd.f32 %v1054, %v1050
  %v1056 = vadd.f32 %v1055, %v1052
  %1057 = vadd.xlane.f32.xlu0 %v1056
  %v1058 = vpop.xlane.xlu0 %1057
  %v1059 = vadd.f32 %v759, %v1058
  %v1060 = vmul.f32 %v979, %v979
  %v1061 = vmul.f32 %v981, %v981
  %v1062 = vmul.f32 %v1050, %v1050
  %v1063 = vmul.f32 %v1052, %v1052
  %v1064 = vadd.f32 %v1060, %v1061
  %v1065 = vadd.f32 %v1064, %v1062
  %v1066 = vadd.f32 %v1065, %v1063
  %1067 = vadd.xlane.f32.xlu0 %v1066
  %v1068 = vpop.xlane.xlu0 %1067
  %v1069 = vadd.f32 %v769, %v1068
  %1070 = vst [vmem:[%s4 + $0x40] sm:$0xff] %v979
  %1071 = vst [vmem:[%s4 + $0x48] sm:$0xff] %v981
  %1072 = vst [vmem:[%s4 + $0x50] sm:$0xff] %v1050
  %1073 = vst [vmem:[%s4 + $0x58] sm:$0xff] %v1052
  %v1074 = vld [vmem:[#allocation2 + $0x60] sm:$0xff]
  %v1075 = vld [vmem:[#allocation2 + $0x68] sm:$0xff]
  %v1076 = vld [vmem:[#allocation2 + $0x70] sm:$0xff]
  %v1077 = vld [vmem:[#allocation2 + $0x78] sm:$0xff]
  %v1078 = vld [vmem:[#allocation2 + $0x80] sm:$0xff]
  %1084 = vrot.lane.b32.xlu0 %v1074, 65
  %v1085 = vpop.permute.xlu0 %1084
  %1086 = vrot.lane.b32.xlu0 %v1075, 65
  %v1087 = vpop.permute.xlu0 %1086
  %1088 = vrot.lane.b32.xlu0 %v1076, 65
  %v1089 = vpop.permute.xlu0 %1088
  %1090 = vrot.lane.b32.xlu0 %v1077, 65
  %v1091 = vpop.permute.xlu0 %1090
  %1092 = vrot.lane.b32.xlu0 %v1078, 65
  %v1093 = vpop.permute.xlu0 %1092
  %v1094 = vsel %vm185, %v1085, %v1087
  %v1095 = vsel %vm185, %v1087, %v1089
  %v1096 = vsel %vm185, %v1089, %v1091
  %v1097 = vsel %vm185, %v1091, %v1093
  %v1102 = vsel %vm156, %v1094, 0.0
  %v1103 = vsel %vm157, %v1095, 0.0
  %v1104 = vsel %vm158, %v1096, 0.0
  %v1105 = vsel %vm159, %v1097, 0.0
  %1106 = vrot.lane.b32.xlu0 %v1074, 63
  %v1107 = vpop.permute.xlu0 %1106
  %1108 = vrot.lane.b32.xlu0 %v1075, 63
  %v1109 = vpop.permute.xlu0 %1108
  %1110 = vrot.lane.b32.xlu0 %v1076, 63
  %v1111 = vpop.permute.xlu0 %1110
  %1112 = vrot.lane.b32.xlu0 %v1077, 63
  %v1113 = vpop.permute.xlu0 %1112
  %1114 = vrot.lane.b32.xlu0 %v1078, 63
  %v1115 = vpop.permute.xlu0 %1114
  %v1116 = vsel %vm208, %v1107, %v1109
  %v1117 = vsel %vm208, %v1109, %v1111
  %v1118 = vsel %vm208, %v1111, %v1113
  %v1119 = vsel %vm208, %v1113, %v1115
  %v1124 = vsel %vm160, %v1116, 0.0
  %v1125 = vsel %vm161, %v1117, 0.0
  %v1126 = vsel %vm162, %v1118, 0.0
  %v1127 = vsel %vm163, %v1119, 0.0
  %1128 = vrot.lane.b32.xlu0 %v1074, 1
  %v1129 = vpop.permute.xlu0 %1128
  %1130 = vrot.lane.b32.xlu0 %v1075, 1
  %v1131 = vpop.permute.xlu0 %1130
  %1132 = vrot.lane.b32.xlu0 %v1076, 1
  %v1133 = vpop.permute.xlu0 %1132
  %1134 = vrot.lane.b32.xlu0 %v1077, 1
  %v1135 = vpop.permute.xlu0 %1134
  %1136 = vrot.lane.b32.xlu0 %v1078, 1
  %v1137 = vpop.permute.xlu0 %1136
  %v1138 = vsel %vm231, %v1129, %v1131
  %v1139 = vsel %vm231, %v1131, %v1133
  %v1140 = vsel %vm231, %v1133, %v1135
  %v1141 = vsel %vm231, %v1135, %v1137
  %v1146 = vsel %vm156, %v1138, 0.0
  %v1147 = vsel %vm157, %v1139, 0.0
  %v1148 = vsel %vm158, %v1140, 0.0
  %v1149 = vsel %vm159, %v1141, 0.0
  %v1150 = vld [vmem:[#allocation2 + $0x88] sm:$0xff]
  %1152 = vrot.lane.b32.xlu0 %v1075, 127
  %v1153 = vpop.permute.xlu0 %1152
  %1154 = vrot.lane.b32.xlu0 %v1076, 127
  %v1155 = vpop.permute.xlu0 %1154
  %1156 = vrot.lane.b32.xlu0 %v1077, 127
  %v1157 = vpop.permute.xlu0 %1156
  %1158 = vrot.lane.b32.xlu0 %v1078, 127
  %v1159 = vpop.permute.xlu0 %1158
  %1160 = vrot.lane.b32.xlu0 %v1150, 127
  %v1161 = vpop.permute.xlu0 %1160
  %v1162 = vsel %vm256, %v1153, %v1155
  %v1163 = vsel %vm256, %v1155, %v1157
  %v1164 = vsel %vm256, %v1157, %v1159
  %v1165 = vsel %vm256, %v1159, %v1161
  %v1170 = vsel %vm160, %v1162, 0.0
  %v1171 = vsel %vm161, %v1163, 0.0
  %v1172 = vsel %vm162, %v1164, 0.0
  %v1173 = vsel %vm163, %v1165, 0.0
  %1174 = vrot.lane.b32.xlu0 %v1150, 65
  %v1175 = vpop.permute.xlu0 %1174
  %v1176 = vsel %vm185, %v1093, %v1175
  %v1178 = vsel %vm156, %v1095, 0.0
  %v1179 = vsel %vm157, %v1096, 0.0
  %v1180 = vsel %vm158, %v1097, 0.0
  %v1181 = vsel %vm159, %v1176, 0.0
  %1182 = vrot.lane.b32.xlu0 %v1150, 63
  %v1183 = vpop.permute.xlu0 %1182
  %v1184 = vsel %vm208, %v1115, %v1183
  %v1186 = vsel %vm160, %v1117, 0.0
  %v1187 = vsel %vm161, %v1118, 0.0
  %v1188 = vsel %vm162, %v1119, 0.0
  %v1189 = vsel %vm163, %v1184, 0.0
  %1190 = vrot.lane.b32.xlu0 %v1074, 64
  %v1191 = vpop.permute.xlu0 %1190
  %1192 = vrot.lane.b32.xlu0 %v1075, 64
  %v1193 = vpop.permute.xlu0 %1192
  %1194 = vrot.lane.b32.xlu0 %v1076, 64
  %v1195 = vpop.permute.xlu0 %1194
  %1196 = vrot.lane.b32.xlu0 %v1077, 64
  %v1197 = vpop.permute.xlu0 %1196
  %1198 = vrot.lane.b32.xlu0 %v1078, 64
  %v1199 = vpop.permute.xlu0 %1198
  %v1200 = vsel %vm295, %v1191, %v1193
  %v1201 = vsel %vm295, %v1193, %v1195
  %v1202 = vsel %vm295, %v1195, %v1197
  %v1203 = vsel %vm295, %v1197, %v1199
  %1208 = vrot.lane.b32.xlu0 %v1150, 64
  %v1209 = vpop.permute.xlu0 %1208
  %v1210 = vsel %vm295, %v1199, %v1209
  %1212 = vmatprep.subr.mxu0 %v1103
  %1213 = vmatpush1.msra.mxu0 %v1102
  %1214 = vmatprep.subr.mxu0 %v1201
  %1215 = vmatpush1.msra.mxu0 %v1200
  %1216 = vmatprep.subr.mxu0 %v1125
  %1217 = vmatpush1.msra.mxu0 %v1124
  %1218 = vmatprep.subr.mxu0 %v1147
  %1219 = vmatpush1.msra.mxu0 %v1146
  %1220 = vmatprep.subr.mxu0 %v1076
  %1221 = vmatpush1.msra.mxu0 %v1075
  %1222 = vmatprep.subr.mxu0 %v1171
  %1223 = vmatpush1.msra.mxu0 %v1170
  %1224 = vmatprep.subr.mxu0 %v1179
  %1225 = vmatpush1.msra.mxu0 %v1178
  %1226 = vmatprep.subr.mxu0 %v1202
  %1227 = vmatpush1.msra.mxu0 %v1201
  %1228 = vmatprep.subr.mxu0 %v1187
  %1229 = vmatpush1.msra.mxu0 %v1186
  %1230 = vmatprep.subr.mxu0 0.0
  %1231 = vmatpush1.msra.mxu0 0.0
  %1232 = vmatprep.subr.mxu0 0.0
  %1233 = vmatpush1.msra.mxu0 0.0
  %1234 = vmatprep.subr.mxu0 0.0
  %1235 = vmatpush1.msra.mxu0 0.0
  %1236 = vmatprep.subr.mxu0 0.0
  %1237 = vmatpush1.msra.mxu0 0.0
  %1238 = vmatprep.subr.mxu0 0.0
  %1239 = vmatpush1.msra.mxu0 0.0
  %1240 = vmatprep.subr.mxu0 0.0
  %1241 = vmatpush1.msra.mxu0 0.0
  %1242 = vmatprep.subr.mxu0 0.0
  %1243 = vmatpush1.msra.mxu0 0.0
  %1244 = vmatprep.subr.mxu0 0.0
  %1245 = vmatpush1.msra.mxu0 0.0
  %1246 = vmatprep.subr.mxu0 0.0
  %1247 = vmatpush1.msra.mxu0 0.0
  %1248 = vmatprep.subr.mxu0 0.0
  %1249 = vmatpush1.msra.mxu0 0.0
  %1250 = vmatprep.subr.mxu0 0.0
  %1251 = vmatpush1.msra.mxu0 0.0
  %1252 = vmatprep.subr.mxu0 0.0
  %1253 = vmatpush1.msra.mxu0 0.0
  %1254 = vmatprep.subr.mxu0 0.0
  %1255 = vmatpush1.msra.mxu0 0.0
  %1256 = vmatprep.subr.mxu0 0.0
  %1257 = vmatpush1.msra.mxu0 0.0
  %1258 = vmatprep.subr.mxu0 0.0
  %1259 = vmatpush1.msra.mxu0 0.0
  %1260 = vmatprep.subr.mxu0 0.0
  %1261 = vmatpush1.msra.mxu0 0.0
  %1262 = vmatprep.subr.mxu0 0.0
  %1263 = vmatpush1.msra.mxu0 0.0
  %1264 = vmatprep.subr.mxu0 0.0
  %1265 = vmatpush1.msra.mxu0 0.0
  %1266 = vmatprep.subr.mxu0 0.0
  %1267 = vmatpush1.msra.mxu0 0.0
  %1268 = vmatprep.subr.mxu0 0.0
  %1269 = vmatpush1.msra.mxu0 0.0
  %1270 = vmatprep.subr.mxu0 0.0
  %1271 = vmatpush1.msra.mxu0 0.0
  %1272 = vmatprep.subr.mxu0 0.0
  %1273 = vmatpush1.msra.mxu0 0.0
  %1274 = vmatprep.subr.mxu0 0.0
  %1275 = vmatpush1.msra.mxu0 0.0
  %1276 = vmatprep.mubr.f32.mxu0 0.0
  %1277 = vmatmul.mubr.f32.gmra.mrb[0].mxu0 %v310
  %v1278 = vpop.f32.mrb[0].mxu0
  %v1279 = vadd.f32 0.0, %v1278
  %v1280 = vpop.f32.mrb[0].mxu0
  %v1281 = vadd.f32 0.0, %v1280
  %1282 = vdwg.mxu0
  %1283 = vmatprep.subr.mxu0 %v1105
  %1284 = vmatpush1.msra.mxu0 %v1104
  %1285 = vmatprep.subr.mxu0 %v1203
  %1286 = vmatpush1.msra.mxu0 %v1202
  %1287 = vmatprep.subr.mxu0 %v1127
  %1288 = vmatpush1.msra.mxu0 %v1126
  %1289 = vmatprep.subr.mxu0 %v1149
  %1290 = vmatpush1.msra.mxu0 %v1148
  %1291 = vmatprep.subr.mxu0 %v1078
  %1292 = vmatpush1.msra.mxu0 %v1077
  %1293 = vmatprep.subr.mxu0 %v1173
  %1294 = vmatpush1.msra.mxu0 %v1172
  %1295 = vmatprep.subr.mxu0 %v1181
  %1296 = vmatpush1.msra.mxu0 %v1180
  %1297 = vmatprep.subr.mxu0 %v1210
  %1298 = vmatpush1.msra.mxu0 %v1203
  %1299 = vmatprep.subr.mxu0 %v1189
  %1300 = vmatpush1.msra.mxu0 %v1188
  %1301 = vmatprep.subr.mxu0 0.0
  %1302 = vmatpush1.msra.mxu0 0.0
  %1303 = vmatprep.subr.mxu0 0.0
  %1304 = vmatpush1.msra.mxu0 0.0
  %1305 = vmatprep.subr.mxu0 0.0
  %1306 = vmatpush1.msra.mxu0 0.0
  %1307 = vmatprep.subr.mxu0 0.0
  %1308 = vmatpush1.msra.mxu0 0.0
  %1309 = vmatprep.subr.mxu0 0.0
  %1310 = vmatpush1.msra.mxu0 0.0
  %1311 = vmatprep.subr.mxu0 0.0
  %1312 = vmatpush1.msra.mxu0 0.0
  %1313 = vmatprep.subr.mxu0 0.0
  %1314 = vmatpush1.msra.mxu0 0.0
  %1315 = vmatprep.subr.mxu0 0.0
  %1316 = vmatpush1.msra.mxu0 0.0
  %1317 = vmatprep.subr.mxu0 0.0
  %1318 = vmatpush1.msra.mxu0 0.0
  %1319 = vmatprep.subr.mxu0 0.0
  %1320 = vmatpush1.msra.mxu0 0.0
  %1321 = vmatprep.subr.mxu0 0.0
  %1322 = vmatpush1.msra.mxu0 0.0
  %1323 = vmatprep.subr.mxu0 0.0
  %1324 = vmatpush1.msra.mxu0 0.0
  %1325 = vmatprep.subr.mxu0 0.0
  %1326 = vmatpush1.msra.mxu0 0.0
  %1327 = vmatprep.subr.mxu0 0.0
  %1328 = vmatpush1.msra.mxu0 0.0
  %1329 = vmatprep.subr.mxu0 0.0
  %1330 = vmatpush1.msra.mxu0 0.0
  %1331 = vmatprep.subr.mxu0 0.0
  %1332 = vmatpush1.msra.mxu0 0.0
  %1333 = vmatprep.subr.mxu0 0.0
  %1334 = vmatpush1.msra.mxu0 0.0
  %1335 = vmatprep.subr.mxu0 0.0
  %1336 = vmatpush1.msra.mxu0 0.0
  %1337 = vmatprep.subr.mxu0 0.0
  %1338 = vmatpush1.msra.mxu0 0.0
  %1339 = vmatprep.subr.mxu0 0.0
  %1340 = vmatpush1.msra.mxu0 0.0
  %1341 = vmatprep.subr.mxu0 0.0
  %1342 = vmatpush1.msra.mxu0 0.0
  %1343 = vmatprep.subr.mxu0 0.0
  %1344 = vmatpush1.msra.mxu0 0.0
  %1345 = vmatprep.subr.mxu0 0.0
  %1346 = vmatpush1.msra.mxu0 0.0
  %1347 = vmatprep.mubr.f32.mxu0 0.0
  %1348 = vmatmul.mubr.f32.gmra.mrb[0].mxu0 %v310
  %v1349 = vpop.f32.mrb[0].mxu0
  %v1350 = vadd.f32 0.0, %v1349
  %v1351 = vpop.f32.mrb[0].mxu0
  %v1352 = vadd.f32 0.0, %v1351
  %1353 = vdwg.mxu0
  %v1354 = vadd.f32 %v1279, %v1281
  %v1355 = vadd.f32 %v1354, %v1350
  %v1356 = vadd.f32 %v1355, %v1352
  %1357 = vadd.xlane.f32.xlu0 %v1356
  %v1358 = vpop.xlane.xlu0 %1357
  %v1359 = vadd.f32 %v1059, %v1358
  %v1360 = vmul.f32 %v1279, %v1279
  %v1361 = vmul.f32 %v1281, %v1281
  %v1362 = vmul.f32 %v1350, %v1350
  %v1363 = vmul.f32 %v1352, %v1352
  %v1364 = vadd.f32 %v1360, %v1361
  %v1365 = vadd.f32 %v1364, %v1362
  %v1366 = vadd.f32 %v1365, %v1363
  %1367 = vadd.xlane.f32.xlu0 %v1366
  %v1368 = vpop.xlane.xlu0 %1367
  %v1369 = vadd.f32 %v1069, %v1368
  %1370 = vst [vmem:[%s4 + $0x60] sm:$0xff] %v1279
  %1371 = vst [vmem:[%s4 + $0x68] sm:$0xff] %v1281
  %1372 = vst [vmem:[%s4 + $0x70] sm:$0xff] %v1350
  %1373 = vst [vmem:[%s4 + $0x78] sm:$0xff] %v1352
  %v1374 = vld [vmem:[#allocation2 + $0x80] sm:$0xff]
  %v1375 = vld [vmem:[#allocation2 + $0x88] sm:$0xff]
  %v1376 = vld [vmem:[#allocation2 + $0x90] sm:$0xff]
  %v1377 = vld [vmem:[#allocation2 + $0x98] sm:$0xff]
  %v1378 = vld [vmem:[#allocation2 + $0xa0] sm:$0xff]
  %1384 = vrot.lane.b32.xlu0 %v1374, 65
  %v1385 = vpop.permute.xlu0 %1384
  %1386 = vrot.lane.b32.xlu0 %v1375, 65
  %v1387 = vpop.permute.xlu0 %1386
  %1388 = vrot.lane.b32.xlu0 %v1376, 65
  %v1389 = vpop.permute.xlu0 %1388
  %1390 = vrot.lane.b32.xlu0 %v1377, 65
  %v1391 = vpop.permute.xlu0 %1390
  %1392 = vrot.lane.b32.xlu0 %v1378, 65
  %v1393 = vpop.permute.xlu0 %1392
  %v1394 = vsel %vm185, %v1385, %v1387
  %v1395 = vsel %vm185, %v1387, %v1389
  %v1396 = vsel %vm185, %v1389, %v1391
  %v1397 = vsel %vm185, %v1391, %v1393
  %v1402 = vsel %vm156, %v1394, 0.0
  %v1403 = vsel %vm157, %v1395, 0.0
  %v1404 = vsel %vm158, %v1396, 0.0
  %v1405 = vsel %vm159, %v1397, 0.0
  %1406 = vrot.lane.b32.xlu0 %v1374, 63
  %v1407 = vpop.permute.xlu0 %1406
  %1408 = vrot.lane.b32.xlu0 %v1375, 63
  %v1409 = vpop.permute.xlu0 %1408
  %1410 = vrot.lane.b32.xlu0 %v1376, 63
  %v1411 = vpop.permute.xlu0 %1410
  %1412 = vrot.lane.b32.xlu0 %v1377, 63
  %v1413 = vpop.permute.xlu0 %1412
  %1414 = vrot.lane.b32.xlu0 %v1378, 63
  %v1415 = vpop.permute.xlu0 %1414
  %v1416 = vsel %vm208, %v1407, %v1409
  %v1417 = vsel %vm208, %v1409, %v1411
  %v1418 = vsel %vm208, %v1411, %v1413
  %v1419 = vsel %vm208, %v1413, %v1415
  %v1424 = vsel %vm160, %v1416, 0.0
  %v1425 = vsel %vm161, %v1417, 0.0
  %v1426 = vsel %vm162, %v1418, 0.0
  %v1427 = vsel %vm163, %v1419, 0.0
  %1428 = vrot.lane.b32.xlu0 %v1374, 1
  %v1429 = vpop.permute.xlu0 %1428
  %1430 = vrot.lane.b32.xlu0 %v1375, 1
  %v1431 = vpop.permute.xlu0 %1430
  %1432 = vrot.lane.b32.xlu0 %v1376, 1
  %v1433 = vpop.permute.xlu0 %1432
  %1434 = vrot.lane.b32.xlu0 %v1377, 1
  %v1435 = vpop.permute.xlu0 %1434
  %1436 = vrot.lane.b32.xlu0 %v1378, 1
  %v1437 = vpop.permute.xlu0 %1436
  %v1438 = vsel %vm231, %v1429, %v1431
  %v1439 = vsel %vm231, %v1431, %v1433
  %v1440 = vsel %vm231, %v1433, %v1435
  %v1441 = vsel %vm231, %v1435, %v1437
  %v1446 = vsel %vm156, %v1438, 0.0
  %v1447 = vsel %vm157, %v1439, 0.0
  %v1448 = vsel %vm158, %v1440, 0.0
  %v1449 = vsel %vm159, %v1441, 0.0
  %v1450 = vld [vmem:[#allocation2 + $0xa8] sm:$0xff]
  %1452 = vrot.lane.b32.xlu0 %v1375, 127
  %v1453 = vpop.permute.xlu0 %1452
  %1454 = vrot.lane.b32.xlu0 %v1376, 127
  %v1455 = vpop.permute.xlu0 %1454
  %1456 = vrot.lane.b32.xlu0 %v1377, 127
  %v1457 = vpop.permute.xlu0 %1456
  %1458 = vrot.lane.b32.xlu0 %v1378, 127
  %v1459 = vpop.permute.xlu0 %1458
  %1460 = vrot.lane.b32.xlu0 %v1450, 127
  %v1461 = vpop.permute.xlu0 %1460
  %v1462 = vsel %vm256, %v1453, %v1455
  %v1463 = vsel %vm256, %v1455, %v1457
  %v1464 = vsel %vm256, %v1457, %v1459
  %v1465 = vsel %vm256, %v1459, %v1461
  %v1470 = vsel %vm160, %v1462, 0.0
  %v1471 = vsel %vm161, %v1463, 0.0
  %v1472 = vsel %vm162, %v1464, 0.0
  %v1473 = vsel %vm163, %v1465, 0.0
  %1474 = vrot.lane.b32.xlu0 %v1450, 65
  %v1475 = vpop.permute.xlu0 %1474
  %v1476 = vsel %vm185, %v1393, %v1475
  %v1478 = vsel %vm156, %v1395, 0.0
  %v1479 = vsel %vm157, %v1396, 0.0
  %v1480 = vsel %vm158, %v1397, 0.0
  %v1481 = vsel %vm159, %v1476, 0.0
  %1482 = vrot.lane.b32.xlu0 %v1450, 63
  %v1483 = vpop.permute.xlu0 %1482
  %v1484 = vsel %vm208, %v1415, %v1483
  %v1486 = vsel %vm160, %v1417, 0.0
  %v1487 = vsel %vm161, %v1418, 0.0
  %v1488 = vsel %vm162, %v1419, 0.0
  %v1489 = vsel %vm163, %v1484, 0.0
  %1490 = vrot.lane.b32.xlu0 %v1374, 64
  %v1491 = vpop.permute.xlu0 %1490
  %1492 = vrot.lane.b32.xlu0 %v1375, 64
  %v1493 = vpop.permute.xlu0 %1492
  %1494 = vrot.lane.b32.xlu0 %v1376, 64
  %v1495 = vpop.permute.xlu0 %1494
  %1496 = vrot.lane.b32.xlu0 %v1377, 64
  %v1497 = vpop.permute.xlu0 %1496
  %1498 = vrot.lane.b32.xlu0 %v1378, 64
  %v1499 = vpop.permute.xlu0 %1498
  %v1500 = vsel %vm295, %v1491, %v1493
  %v1501 = vsel %vm295, %v1493, %v1495
  %v1502 = vsel %vm295, %v1495, %v1497
  %v1503 = vsel %vm295, %v1497, %v1499
  %1508 = vrot.lane.b32.xlu0 %v1450, 64
  %v1509 = vpop.permute.xlu0 %1508
  %v1510 = vsel %vm295, %v1499, %v1509
  %1512 = vmatprep.subr.mxu0 %v1403
  %1513 = vmatpush1.msra.mxu0 %v1402
  %1514 = vmatprep.subr.mxu0 %v1501
  %1515 = vmatpush1.msra.mxu0 %v1500
  %1516 = vmatprep.subr.mxu0 %v1425
  %1517 = vmatpush1.msra.mxu0 %v1424
  %1518 = vmatprep.subr.mxu0 %v1447
  %1519 = vmatpush1.msra.mxu0 %v1446
  %1520 = vmatprep.subr.mxu0 %v1376
  %1521 = vmatpush1.msra.mxu0 %v1375
  %1522 = vmatprep.subr.mxu0 %v1471
  %1523 = vmatpush1.msra.mxu0 %v1470
  %1524 = vmatprep.subr.mxu0 %v1479
  %1525 = vmatpush1.msra.mxu0 %v1478
  %1526 = vmatprep.subr.mxu0 %v1502
  %1527 = vmatpush1.msra.mxu0 %v1501
  %1528 = vmatprep.subr.mxu0 %v1487
  %1529 = vmatpush1.msra.mxu0 %v1486
  %1530 = vmatprep.subr.mxu0 0.0
  %1531 = vmatpush1.msra.mxu0 0.0
  %1532 = vmatprep.subr.mxu0 0.0
  %1533 = vmatpush1.msra.mxu0 0.0
  %1534 = vmatprep.subr.mxu0 0.0
  %1535 = vmatpush1.msra.mxu0 0.0
  %1536 = vmatprep.subr.mxu0 0.0
  %1537 = vmatpush1.msra.mxu0 0.0
  %1538 = vmatprep.subr.mxu0 0.0
  %1539 = vmatpush1.msra.mxu0 0.0
  %1540 = vmatprep.subr.mxu0 0.0
  %1541 = vmatpush1.msra.mxu0 0.0
  %1542 = vmatprep.subr.mxu0 0.0
  %1543 = vmatpush1.msra.mxu0 0.0
  %1544 = vmatprep.subr.mxu0 0.0
  %1545 = vmatpush1.msra.mxu0 0.0
  %1546 = vmatprep.subr.mxu0 0.0
  %1547 = vmatpush1.msra.mxu0 0.0
  %1548 = vmatprep.subr.mxu0 0.0
  %1549 = vmatpush1.msra.mxu0 0.0
  %1550 = vmatprep.subr.mxu0 0.0
  %1551 = vmatpush1.msra.mxu0 0.0
  %1552 = vmatprep.subr.mxu0 0.0
  %1553 = vmatpush1.msra.mxu0 0.0
  %1554 = vmatprep.subr.mxu0 0.0
  %1555 = vmatpush1.msra.mxu0 0.0
  %1556 = vmatprep.subr.mxu0 0.0
  %1557 = vmatpush1.msra.mxu0 0.0
  %1558 = vmatprep.subr.mxu0 0.0
  %1559 = vmatpush1.msra.mxu0 0.0
  %1560 = vmatprep.subr.mxu0 0.0
  %1561 = vmatpush1.msra.mxu0 0.0
  %1562 = vmatprep.subr.mxu0 0.0
  %1563 = vmatpush1.msra.mxu0 0.0
  %1564 = vmatprep.subr.mxu0 0.0
  %1565 = vmatpush1.msra.mxu0 0.0
  %1566 = vmatprep.subr.mxu0 0.0
  %1567 = vmatpush1.msra.mxu0 0.0
  %1568 = vmatprep.subr.mxu0 0.0
  %1569 = vmatpush1.msra.mxu0 0.0
  %1570 = vmatprep.subr.mxu0 0.0
  %1571 = vmatpush1.msra.mxu0 0.0
  %1572 = vmatprep.subr.mxu0 0.0
  %1573 = vmatpush1.msra.mxu0 0.0
  %1574 = vmatprep.subr.mxu0 0.0
  %1575 = vmatpush1.msra.mxu0 0.0
  %1576 = vmatprep.mubr.f32.mxu0 0.0
  %1577 = vmatmul.mubr.f32.gmra.mrb[0].mxu0 %v310
  %v1578 = vpop.f32.mrb[0].mxu0
  %v1579 = vadd.f32 0.0, %v1578
  %v1580 = vpop.f32.mrb[0].mxu0
  %v1581 = vadd.f32 0.0, %v1580
  %1582 = vdwg.mxu0
  %1583 = vmatprep.subr.mxu0 %v1405
  %1584 = vmatpush1.msra.mxu0 %v1404
  %1585 = vmatprep.subr.mxu0 %v1503
  %1586 = vmatpush1.msra.mxu0 %v1502
  %1587 = vmatprep.subr.mxu0 %v1427
  %1588 = vmatpush1.msra.mxu0 %v1426
  %1589 = vmatprep.subr.mxu0 %v1449
  %1590 = vmatpush1.msra.mxu0 %v1448
  %1591 = vmatprep.subr.mxu0 %v1378
  %1592 = vmatpush1.msra.mxu0 %v1377
  %1593 = vmatprep.subr.mxu0 %v1473
  %1594 = vmatpush1.msra.mxu0 %v1472
  %1595 = vmatprep.subr.mxu0 %v1481
  %1596 = vmatpush1.msra.mxu0 %v1480
  %1597 = vmatprep.subr.mxu0 %v1510
  %1598 = vmatpush1.msra.mxu0 %v1503
  %1599 = vmatprep.subr.mxu0 %v1489
  %1600 = vmatpush1.msra.mxu0 %v1488
  %1601 = vmatprep.subr.mxu0 0.0
  %1602 = vmatpush1.msra.mxu0 0.0
  %1603 = vmatprep.subr.mxu0 0.0
  %1604 = vmatpush1.msra.mxu0 0.0
  %1605 = vmatprep.subr.mxu0 0.0
  %1606 = vmatpush1.msra.mxu0 0.0
  %1607 = vmatprep.subr.mxu0 0.0
  %1608 = vmatpush1.msra.mxu0 0.0
  %1609 = vmatprep.subr.mxu0 0.0
  %1610 = vmatpush1.msra.mxu0 0.0
  %1611 = vmatprep.subr.mxu0 0.0
  %1612 = vmatpush1.msra.mxu0 0.0
  %1613 = vmatprep.subr.mxu0 0.0
  %1614 = vmatpush1.msra.mxu0 0.0
  %1615 = vmatprep.subr.mxu0 0.0
  %1616 = vmatpush1.msra.mxu0 0.0
  %1617 = vmatprep.subr.mxu0 0.0
  %1618 = vmatpush1.msra.mxu0 0.0
  %1619 = vmatprep.subr.mxu0 0.0
  %1620 = vmatpush1.msra.mxu0 0.0
  %1621 = vmatprep.subr.mxu0 0.0
  %1622 = vmatpush1.msra.mxu0 0.0
  %1623 = vmatprep.subr.mxu0 0.0
  %1624 = vmatpush1.msra.mxu0 0.0
  %1625 = vmatprep.subr.mxu0 0.0
  %1626 = vmatpush1.msra.mxu0 0.0
  %1627 = vmatprep.subr.mxu0 0.0
  %1628 = vmatpush1.msra.mxu0 0.0
  %1629 = vmatprep.subr.mxu0 0.0
  %1630 = vmatpush1.msra.mxu0 0.0
  %1631 = vmatprep.subr.mxu0 0.0
  %1632 = vmatpush1.msra.mxu0 0.0
  %1633 = vmatprep.subr.mxu0 0.0
  %1634 = vmatpush1.msra.mxu0 0.0
  %1635 = vmatprep.subr.mxu0 0.0
  %1636 = vmatpush1.msra.mxu0 0.0
  %1637 = vmatprep.subr.mxu0 0.0
  %1638 = vmatpush1.msra.mxu0 0.0
  %1639 = vmatprep.subr.mxu0 0.0
  %1640 = vmatpush1.msra.mxu0 0.0
  %1641 = vmatprep.subr.mxu0 0.0
  %1642 = vmatpush1.msra.mxu0 0.0
  %1643 = vmatprep.subr.mxu0 0.0
  %1644 = vmatpush1.msra.mxu0 0.0
  %1645 = vmatprep.subr.mxu0 0.0
  %1646 = vmatpush1.msra.mxu0 0.0
  %1647 = vmatprep.mubr.f32.mxu0 0.0
  %1648 = vmatmul.mubr.f32.gmra.mrb[0].mxu0 %v310
  %v1649 = vpop.f32.mrb[0].mxu0
  %v1650 = vadd.f32 0.0, %v1649
  %v1651 = vpop.f32.mrb[0].mxu0
  %v1652 = vadd.f32 0.0, %v1651
  %1653 = vdwg.mxu0
  %v1654 = vadd.f32 %v1579, %v1581
  %v1655 = vadd.f32 %v1654, %v1650
  %v1656 = vadd.f32 %v1655, %v1652
  %1657 = vadd.xlane.f32.xlu0 %v1656
  %v1658 = vpop.xlane.xlu0 %1657
  %v1659 = vadd.f32 %v1359, %v1658
  %v1660 = vmul.f32 %v1579, %v1579
  %v1661 = vmul.f32 %v1581, %v1581
  %v1662 = vmul.f32 %v1650, %v1650
  %v1663 = vmul.f32 %v1652, %v1652
  %v1664 = vadd.f32 %v1660, %v1661
  %v1665 = vadd.f32 %v1664, %v1662
  %v1666 = vadd.f32 %v1665, %v1663
  %1667 = vadd.xlane.f32.xlu0 %v1666
  %v1668 = vpop.xlane.xlu0 %1667
  %v1669 = vadd.f32 %v1369, %v1668
  %1670 = vst [vmem:[%s4 + $0x80] sm:$0xff] %v1579
  %1671 = vst [vmem:[%s4 + $0x88] sm:$0xff] %v1581
  %1672 = vst [vmem:[%s4 + $0x90] sm:$0xff] %v1650
  %1673 = vst [vmem:[%s4 + $0x98] sm:$0xff] %v1652
  %v1674 = vld [vmem:[#allocation2 + $0xa0] sm:$0xff]
  %v1675 = vld [vmem:[#allocation2 + $0xa8] sm:$0xff]
  %v1676 = vld [vmem:[#allocation2 + $0xb0] sm:$0xff]
  %v1677 = vld [vmem:[#allocation2 + $0xb8] sm:$0xff]
  %v1678 = vld [vmem:[#allocation2 + $0xc0] sm:$0xff]
  %1684 = vrot.lane.b32.xlu0 %v1674, 65
  %v1685 = vpop.permute.xlu0 %1684
  %1686 = vrot.lane.b32.xlu0 %v1675, 65
  %v1687 = vpop.permute.xlu0 %1686
  %1688 = vrot.lane.b32.xlu0 %v1676, 65
  %v1689 = vpop.permute.xlu0 %1688
  %1690 = vrot.lane.b32.xlu0 %v1677, 65
  %v1691 = vpop.permute.xlu0 %1690
  %1692 = vrot.lane.b32.xlu0 %v1678, 65
  %v1693 = vpop.permute.xlu0 %1692
  %v1694 = vsel %vm185, %v1685, %v1687
  %v1695 = vsel %vm185, %v1687, %v1689
  %v1696 = vsel %vm185, %v1689, %v1691
  %v1697 = vsel %vm185, %v1691, %v1693
  %v1702 = vsel %vm156, %v1694, 0.0
  %v1703 = vsel %vm157, %v1695, 0.0
  %v1704 = vsel %vm158, %v1696, 0.0
  %v1705 = vsel %vm159, %v1697, 0.0
  %1706 = vrot.lane.b32.xlu0 %v1674, 63
  %v1707 = vpop.permute.xlu0 %1706
  %1708 = vrot.lane.b32.xlu0 %v1675, 63
  %v1709 = vpop.permute.xlu0 %1708
  %1710 = vrot.lane.b32.xlu0 %v1676, 63
  %v1711 = vpop.permute.xlu0 %1710
  %1712 = vrot.lane.b32.xlu0 %v1677, 63
  %v1713 = vpop.permute.xlu0 %1712
  %1714 = vrot.lane.b32.xlu0 %v1678, 63
  %v1715 = vpop.permute.xlu0 %1714
  %v1716 = vsel %vm208, %v1707, %v1709
  %v1717 = vsel %vm208, %v1709, %v1711
  %v1718 = vsel %vm208, %v1711, %v1713
  %v1719 = vsel %vm208, %v1713, %v1715
  %v1724 = vsel %vm160, %v1716, 0.0
  %v1725 = vsel %vm161, %v1717, 0.0
  %v1726 = vsel %vm162, %v1718, 0.0
  %v1727 = vsel %vm163, %v1719, 0.0
  %1728 = vrot.lane.b32.xlu0 %v1674, 1
  %v1729 = vpop.permute.xlu0 %1728
  %1730 = vrot.lane.b32.xlu0 %v1675, 1
  %v1731 = vpop.permute.xlu0 %1730
  %1732 = vrot.lane.b32.xlu0 %v1676, 1
  %v1733 = vpop.permute.xlu0 %1732
  %1734 = vrot.lane.b32.xlu0 %v1677, 1
  %v1735 = vpop.permute.xlu0 %1734
  %1736 = vrot.lane.b32.xlu0 %v1678, 1
  %v1737 = vpop.permute.xlu0 %1736
  %v1738 = vsel %vm231, %v1729, %v1731
  %v1739 = vsel %vm231, %v1731, %v1733
  %v1740 = vsel %vm231, %v1733, %v1735
  %v1741 = vsel %vm231, %v1735, %v1737
  %v1746 = vsel %vm156, %v1738, 0.0
  %v1747 = vsel %vm157, %v1739, 0.0
  %v1748 = vsel %vm158, %v1740, 0.0
  %v1749 = vsel %vm159, %v1741, 0.0
  %v1750 = vld [vmem:[#allocation2 + $0xc8] sm:$0xff]
  %1752 = vrot.lane.b32.xlu0 %v1675, 127
  %v1753 = vpop.permute.xlu0 %1752
  %1754 = vrot.lane.b32.xlu0 %v1676, 127
  %v1755 = vpop.permute.xlu0 %1754
  %1756 = vrot.lane.b32.xlu0 %v1677, 127
  %v1757 = vpop.permute.xlu0 %1756
  %1758 = vrot.lane.b32.xlu0 %v1678, 127
  %v1759 = vpop.permute.xlu0 %1758
  %1760 = vrot.lane.b32.xlu0 %v1750, 127
  %v1761 = vpop.permute.xlu0 %1760
  %v1762 = vsel %vm256, %v1753, %v1755
  %v1763 = vsel %vm256, %v1755, %v1757
  %v1764 = vsel %vm256, %v1757, %v1759
  %v1765 = vsel %vm256, %v1759, %v1761
  %v1770 = vsel %vm160, %v1762, 0.0
  %v1771 = vsel %vm161, %v1763, 0.0
  %v1772 = vsel %vm162, %v1764, 0.0
  %v1773 = vsel %vm163, %v1765, 0.0
  %1774 = vrot.lane.b32.xlu0 %v1750, 65
  %v1775 = vpop.permute.xlu0 %1774
  %v1776 = vsel %vm185, %v1693, %v1775
  %v1778 = vsel %vm156, %v1695, 0.0
  %v1779 = vsel %vm157, %v1696, 0.0
  %v1780 = vsel %vm158, %v1697, 0.0
  %v1781 = vsel %vm159, %v1776, 0.0
  %1782 = vrot.lane.b32.xlu0 %v1750, 63
  %v1783 = vpop.permute.xlu0 %1782
  %v1784 = vsel %vm208, %v1715, %v1783
  %v1786 = vsel %vm160, %v1717, 0.0
  %v1787 = vsel %vm161, %v1718, 0.0
  %v1788 = vsel %vm162, %v1719, 0.0
  %v1789 = vsel %vm163, %v1784, 0.0
  %1790 = vrot.lane.b32.xlu0 %v1674, 64
  %v1791 = vpop.permute.xlu0 %1790
  %1792 = vrot.lane.b32.xlu0 %v1675, 64
  %v1793 = vpop.permute.xlu0 %1792
  %1794 = vrot.lane.b32.xlu0 %v1676, 64
  %v1795 = vpop.permute.xlu0 %1794
  %1796 = vrot.lane.b32.xlu0 %v1677, 64
  %v1797 = vpop.permute.xlu0 %1796
  %1798 = vrot.lane.b32.xlu0 %v1678, 64
  %v1799 = vpop.permute.xlu0 %1798
  %v1800 = vsel %vm295, %v1791, %v1793
  %v1801 = vsel %vm295, %v1793, %v1795
  %v1802 = vsel %vm295, %v1795, %v1797
  %v1803 = vsel %vm295, %v1797, %v1799
  %1808 = vrot.lane.b32.xlu0 %v1750, 64
  %v1809 = vpop.permute.xlu0 %1808
  %v1810 = vsel %vm295, %v1799, %v1809
  %1812 = vmatprep.subr.mxu0 %v1703
  %1813 = vmatpush1.msra.mxu0 %v1702
  %1814 = vmatprep.subr.mxu0 %v1801
  %1815 = vmatpush1.msra.mxu0 %v1800
  %1816 = vmatprep.subr.mxu0 %v1725
  %1817 = vmatpush1.msra.mxu0 %v1724
  %1818 = vmatprep.subr.mxu0 %v1747
  %1819 = vmatpush1.msra.mxu0 %v1746
  %1820 = vmatprep.subr.mxu0 %v1676
  %1821 = vmatpush1.msra.mxu0 %v1675
  %1822 = vmatprep.subr.mxu0 %v1771
  %1823 = vmatpush1.msra.mxu0 %v1770
  %1824 = vmatprep.subr.mxu0 %v1779
  %1825 = vmatpush1.msra.mxu0 %v1778
  %1826 = vmatprep.subr.mxu0 %v1802
  %1827 = vmatpush1.msra.mxu0 %v1801
  %1828 = vmatprep.subr.mxu0 %v1787
  %1829 = vmatpush1.msra.mxu0 %v1786
  %1830 = vmatprep.subr.mxu0 0.0
  %1831 = vmatpush1.msra.mxu0 0.0
  %1832 = vmatprep.subr.mxu0 0.0
  %1833 = vmatpush1.msra.mxu0 0.0
  %1834 = vmatprep.subr.mxu0 0.0
  %1835 = vmatpush1.msra.mxu0 0.0
  %1836 = vmatprep.subr.mxu0 0.0
  %1837 = vmatpush1.msra.mxu0 0.0
  %1838 = vmatprep.subr.mxu0 0.0
  %1839 = vmatpush1.msra.mxu0 0.0
  %1840 = vmatprep.subr.mxu0 0.0
  %1841 = vmatpush1.msra.mxu0 0.0
  %1842 = vmatprep.subr.mxu0 0.0
  %1843 = vmatpush1.msra.mxu0 0.0
  %1844 = vmatprep.subr.mxu0 0.0
  %1845 = vmatpush1.msra.mxu0 0.0
  %1846 = vmatprep.subr.mxu0 0.0
  %1847 = vmatpush1.msra.mxu0 0.0
  %1848 = vmatprep.subr.mxu0 0.0
  %1849 = vmatpush1.msra.mxu0 0.0
  %1850 = vmatprep.subr.mxu0 0.0
  %1851 = vmatpush1.msra.mxu0 0.0
  %1852 = vmatprep.subr.mxu0 0.0
  %1853 = vmatpush1.msra.mxu0 0.0
  %1854 = vmatprep.subr.mxu0 0.0
  %1855 = vmatpush1.msra.mxu0 0.0
  %1856 = vmatprep.subr.mxu0 0.0
  %1857 = vmatpush1.msra.mxu0 0.0
  %1858 = vmatprep.subr.mxu0 0.0
  %1859 = vmatpush1.msra.mxu0 0.0
  %1860 = vmatprep.subr.mxu0 0.0
  %1861 = vmatpush1.msra.mxu0 0.0
  %1862 = vmatprep.subr.mxu0 0.0
  %1863 = vmatpush1.msra.mxu0 0.0
  %1864 = vmatprep.subr.mxu0 0.0
  %1865 = vmatpush1.msra.mxu0 0.0
  %1866 = vmatprep.subr.mxu0 0.0
  %1867 = vmatpush1.msra.mxu0 0.0
  %1868 = vmatprep.subr.mxu0 0.0
  %1869 = vmatpush1.msra.mxu0 0.0
  %1870 = vmatprep.subr.mxu0 0.0
  %1871 = vmatpush1.msra.mxu0 0.0
  %1872 = vmatprep.subr.mxu0 0.0
  %1873 = vmatpush1.msra.mxu0 0.0
  %1874 = vmatprep.subr.mxu0 0.0
  %1875 = vmatpush1.msra.mxu0 0.0
  %1876 = vmatprep.mubr.f32.mxu0 0.0
  %1877 = vmatmul.mubr.f32.gmra.mrb[0].mxu0 %v310
  %v1878 = vpop.f32.mrb[0].mxu0
  %v1879 = vadd.f32 0.0, %v1878
  %v1880 = vpop.f32.mrb[0].mxu0
  %v1881 = vadd.f32 0.0, %v1880
  %1882 = vdwg.mxu0
  %1883 = vmatprep.subr.mxu0 %v1705
  %1884 = vmatpush1.msra.mxu0 %v1704
  %1885 = vmatprep.subr.mxu0 %v1803
  %1886 = vmatpush1.msra.mxu0 %v1802
  %1887 = vmatprep.subr.mxu0 %v1727
  %1888 = vmatpush1.msra.mxu0 %v1726
  %1889 = vmatprep.subr.mxu0 %v1749
  %1890 = vmatpush1.msra.mxu0 %v1748
  %1891 = vmatprep.subr.mxu0 %v1678
  %1892 = vmatpush1.msra.mxu0 %v1677
  %1893 = vmatprep.subr.mxu0 %v1773
  %1894 = vmatpush1.msra.mxu0 %v1772
  %1895 = vmatprep.subr.mxu0 %v1781
  %1896 = vmatpush1.msra.mxu0 %v1780
  %1897 = vmatprep.subr.mxu0 %v1810
  %1898 = vmatpush1.msra.mxu0 %v1803
  %1899 = vmatprep.subr.mxu0 %v1789
  %1900 = vmatpush1.msra.mxu0 %v1788
  %1901 = vmatprep.subr.mxu0 0.0
  %1902 = vmatpush1.msra.mxu0 0.0
  %1903 = vmatprep.subr.mxu0 0.0
  %1904 = vmatpush1.msra.mxu0 0.0
  %1905 = vmatprep.subr.mxu0 0.0
  %1906 = vmatpush1.msra.mxu0 0.0
  %1907 = vmatprep.subr.mxu0 0.0
  %1908 = vmatpush1.msra.mxu0 0.0
  %1909 = vmatprep.subr.mxu0 0.0
  %1910 = vmatpush1.msra.mxu0 0.0
  %1911 = vmatprep.subr.mxu0 0.0
  %1912 = vmatpush1.msra.mxu0 0.0
  %1913 = vmatprep.subr.mxu0 0.0
  %1914 = vmatpush1.msra.mxu0 0.0
  %1915 = vmatprep.subr.mxu0 0.0
  %1916 = vmatpush1.msra.mxu0 0.0
  %1917 = vmatprep.subr.mxu0 0.0
  %1918 = vmatpush1.msra.mxu0 0.0
  %1919 = vmatprep.subr.mxu0 0.0
  %1920 = vmatpush1.msra.mxu0 0.0
  %1921 = vmatprep.subr.mxu0 0.0
  %1922 = vmatpush1.msra.mxu0 0.0
  %1923 = vmatprep.subr.mxu0 0.0
  %1924 = vmatpush1.msra.mxu0 0.0
  %1925 = vmatprep.subr.mxu0 0.0
  %1926 = vmatpush1.msra.mxu0 0.0
  %1927 = vmatprep.subr.mxu0 0.0
  %1928 = vmatpush1.msra.mxu0 0.0
  %1929 = vmatprep.subr.mxu0 0.0
  %1930 = vmatpush1.msra.mxu0 0.0
  %1931 = vmatprep.subr.mxu0 0.0
  %1932 = vmatpush1.msra.mxu0 0.0
  %1933 = vmatprep.subr.mxu0 0.0
  %1934 = vmatpush1.msra.mxu0 0.0
  %1935 = vmatprep.subr.mxu0 0.0
  %1936 = vmatpush1.msra.mxu0 0.0
  %1937 = vmatprep.subr.mxu0 0.0
  %1938 = vmatpush1.msra.mxu0 0.0
  %1939 = vmatprep.subr.mxu0 0.0
  %1940 = vmatpush1.msra.mxu0 0.0
  %1941 = vmatprep.subr.mxu0 0.0
  %1942 = vmatpush1.msra.mxu0 0.0
  %1943 = vmatprep.subr.mxu0 0.0
  %1944 = vmatpush1.msra.mxu0 0.0
  %1945 = vmatprep.subr.mxu0 0.0
  %1946 = vmatpush1.msra.mxu0 0.0
  %1947 = vmatprep.mubr.f32.mxu0 0.0
  %1948 = vmatmul.mubr.f32.gmra.mrb[0].mxu0 %v310
  %v1949 = vpop.f32.mrb[0].mxu0
  %v1950 = vadd.f32 0.0, %v1949
  %v1951 = vpop.f32.mrb[0].mxu0
  %v1952 = vadd.f32 0.0, %v1951
  %1953 = vdwg.mxu0
  %v1954 = vadd.f32 %v1879, %v1881
  %v1955 = vadd.f32 %v1954, %v1950
  %v1956 = vadd.f32 %v1955, %v1952
  %1957 = vadd.xlane.f32.xlu0 %v1956
  %v1958 = vpop.xlane.xlu0 %1957
  %v1959 = vadd.f32 %v1659, %v1958
  %v1960 = vmul.f32 %v1879, %v1879
  %v1961 = vmul.f32 %v1881, %v1881
  %v1962 = vmul.f32 %v1950, %v1950
  %v1963 = vmul.f32 %v1952, %v1952
  %v1964 = vadd.f32 %v1960, %v1961
  %v1965 = vadd.f32 %v1964, %v1962
  %v1966 = vadd.f32 %v1965, %v1963
  %1967 = vadd.xlane.f32.xlu0 %v1966
  %v1968 = vpop.xlane.xlu0 %1967
  %v1969 = vadd.f32 %v1669, %v1968
  %1970 = vst [vmem:[%s4 + $0xa0] sm:$0xff] %v1879
  %1971 = vst [vmem:[%s4 + $0xa8] sm:$0xff] %v1881
  %1972 = vst [vmem:[%s4 + $0xb0] sm:$0xff] %v1950
  %1973 = vst [vmem:[%s4 + $0xb8] sm:$0xff] %v1952
  %v1974 = vld [vmem:[#allocation2 + $0xc0] sm:$0xff]
  %v1975 = vld [vmem:[#allocation2 + $0xc8] sm:$0xff]
  %v1976 = vld [vmem:[#allocation2 + $0xd0] sm:$0xff]
  %v1977 = vld [vmem:[#allocation2 + $0xd8] sm:$0xff]
  %v1978 = vld [vmem:[#allocation2 + $0xe0] sm:$0xff]
  %1984 = vrot.lane.b32.xlu0 %v1974, 65
  %v1985 = vpop.permute.xlu0 %1984
  %1986 = vrot.lane.b32.xlu0 %v1975, 65
  %v1987 = vpop.permute.xlu0 %1986
  %1988 = vrot.lane.b32.xlu0 %v1976, 65
  %v1989 = vpop.permute.xlu0 %1988
  %1990 = vrot.lane.b32.xlu0 %v1977, 65
  %v1991 = vpop.permute.xlu0 %1990
  %1992 = vrot.lane.b32.xlu0 %v1978, 65
  %v1993 = vpop.permute.xlu0 %1992
  %v1994 = vsel %vm185, %v1985, %v1987
  %v1995 = vsel %vm185, %v1987, %v1989
  %v1996 = vsel %vm185, %v1989, %v1991
  %v1997 = vsel %vm185, %v1991, %v1993
  %v2002 = vsel %vm156, %v1994, 0.0
  %v2003 = vsel %vm157, %v1995, 0.0
  %v2004 = vsel %vm158, %v1996, 0.0
  %v2005 = vsel %vm159, %v1997, 0.0
  %2006 = vrot.lane.b32.xlu0 %v1974, 63
  %v2007 = vpop.permute.xlu0 %2006
  %2008 = vrot.lane.b32.xlu0 %v1975, 63
  %v2009 = vpop.permute.xlu0 %2008
  %2010 = vrot.lane.b32.xlu0 %v1976, 63
  %v2011 = vpop.permute.xlu0 %2010
  %2012 = vrot.lane.b32.xlu0 %v1977, 63
  %v2013 = vpop.permute.xlu0 %2012
  %2014 = vrot.lane.b32.xlu0 %v1978, 63
  %v2015 = vpop.permute.xlu0 %2014
  %v2016 = vsel %vm208, %v2007, %v2009
  %v2017 = vsel %vm208, %v2009, %v2011
  %v2018 = vsel %vm208, %v2011, %v2013
  %v2019 = vsel %vm208, %v2013, %v2015
  %v2024 = vsel %vm160, %v2016, 0.0
  %v2025 = vsel %vm161, %v2017, 0.0
  %v2026 = vsel %vm162, %v2018, 0.0
  %v2027 = vsel %vm163, %v2019, 0.0
  %2028 = vrot.lane.b32.xlu0 %v1974, 1
  %v2029 = vpop.permute.xlu0 %2028
  %2030 = vrot.lane.b32.xlu0 %v1975, 1
  %v2031 = vpop.permute.xlu0 %2030
  %2032 = vrot.lane.b32.xlu0 %v1976, 1
  %v2033 = vpop.permute.xlu0 %2032
  %2034 = vrot.lane.b32.xlu0 %v1977, 1
  %v2035 = vpop.permute.xlu0 %2034
  %2036 = vrot.lane.b32.xlu0 %v1978, 1
  %v2037 = vpop.permute.xlu0 %2036
  %v2038 = vsel %vm231, %v2029, %v2031
  %v2039 = vsel %vm231, %v2031, %v2033
  %v2040 = vsel %vm231, %v2033, %v2035
  %v2041 = vsel %vm231, %v2035, %v2037
  %v2046 = vsel %vm156, %v2038, 0.0
  %v2047 = vsel %vm157, %v2039, 0.0
  %v2048 = vsel %vm158, %v2040, 0.0
  %v2049 = vsel %vm159, %v2041, 0.0
  %v2050 = vld [vmem:[#allocation2 + $0xe8] sm:$0xff]
  %2052 = vrot.lane.b32.xlu0 %v1975, 127
  %v2053 = vpop.permute.xlu0 %2052
  %2054 = vrot.lane.b32.xlu0 %v1976, 127
  %v2055 = vpop.permute.xlu0 %2054
  %2056 = vrot.lane.b32.xlu0 %v1977, 127
  %v2057 = vpop.permute.xlu0 %2056
  %2058 = vrot.lane.b32.xlu0 %v1978, 127
  %v2059 = vpop.permute.xlu0 %2058
  %2060 = vrot.lane.b32.xlu0 %v2050, 127
  %v2061 = vpop.permute.xlu0 %2060
  %v2062 = vsel %vm256, %v2053, %v2055
  %v2063 = vsel %vm256, %v2055, %v2057
  %v2064 = vsel %vm256, %v2057, %v2059
  %v2065 = vsel %vm256, %v2059, %v2061
  %v2070 = vsel %vm160, %v2062, 0.0
  %v2071 = vsel %vm161, %v2063, 0.0
  %v2072 = vsel %vm162, %v2064, 0.0
  %v2073 = vsel %vm163, %v2065, 0.0
  %2074 = vrot.lane.b32.xlu0 %v2050, 65
  %v2075 = vpop.permute.xlu0 %2074
  %v2076 = vsel %vm185, %v1993, %v2075
  %v2078 = vsel %vm156, %v1995, 0.0
  %v2079 = vsel %vm157, %v1996, 0.0
  %v2080 = vsel %vm158, %v1997, 0.0
  %v2081 = vsel %vm159, %v2076, 0.0
  %2082 = vrot.lane.b32.xlu0 %v2050, 63
  %v2083 = vpop.permute.xlu0 %2082
  %v2084 = vsel %vm208, %v2015, %v2083
  %v2086 = vsel %vm160, %v2017, 0.0
  %v2087 = vsel %vm161, %v2018, 0.0
  %v2088 = vsel %vm162, %v2019, 0.0
  %v2089 = vsel %vm163, %v2084, 0.0
  %2090 = vrot.lane.b32.xlu0 %v1974, 64
  %v2091 = vpop.permute.xlu0 %2090
  %2092 = vrot.lane.b32.xlu0 %v1975, 64
  %v2093 = vpop.permute.xlu0 %2092
  %2094 = vrot.lane.b32.xlu0 %v1976, 64
  %v2095 = vpop.permute.xlu0 %2094
  %2096 = vrot.lane.b32.xlu0 %v1977, 64
  %v2097 = vpop.permute.xlu0 %2096
  %2098 = vrot.lane.b32.xlu0 %v1978, 64
  %v2099 = vpop.permute.xlu0 %2098
  %v2100 = vsel %vm295, %v2091, %v2093
  %v2101 = vsel %vm295, %v2093, %v2095
  %v2102 = vsel %vm295, %v2095, %v2097
  %v2103 = vsel %vm295, %v2097, %v2099
  %2108 = vrot.lane.b32.xlu0 %v2050, 64
  %v2109 = vpop.permute.xlu0 %2108
  %v2110 = vsel %vm295, %v2099, %v2109
  %2112 = vmatprep.subr.mxu0 %v2003
  %2113 = vmatpush1.msra.mxu0 %v2002
  %2114 = vmatprep.subr.mxu0 %v2101
  %2115 = vmatpush1.msra.mxu0 %v2100
  %2116 = vmatprep.subr.mxu0 %v2025
  %2117 = vmatpush1.msra.mxu0 %v2024
  %2118 = vmatprep.subr.mxu0 %v2047
  %2119 = vmatpush1.msra.mxu0 %v2046
  %2120 = vmatprep.subr.mxu0 %v1976
  %2121 = vmatpush1.msra.mxu0 %v1975
  %2122 = vmatprep.subr.mxu0 %v2071
  %2123 = vmatpush1.msra.mxu0 %v2070
  %2124 = vmatprep.subr.mxu0 %v2079
  %2125 = vmatpush1.msra.mxu0 %v2078
  %2126 = vmatprep.subr.mxu0 %v2102
  %2127 = vmatpush1.msra.mxu0 %v2101
  %2128 = vmatprep.subr.mxu0 %v2087
  %2129 = vmatpush1.msra.mxu0 %v2086
  %2130 = vmatprep.subr.mxu0 0.0
  %2131 = vmatpush1.msra.mxu0 0.0
  %2132 = vmatprep.subr.mxu0 0.0
  %2133 = vmatpush1.msra.mxu0 0.0
  %2134 = vmatprep.subr.mxu0 0.0
  %2135 = vmatpush1.msra.mxu0 0.0
  %2136 = vmatprep.subr.mxu0 0.0
  %2137 = vmatpush1.msra.mxu0 0.0
  %2138 = vmatprep.subr.mxu0 0.0
  %2139 = vmatpush1.msra.mxu0 0.0
  %2140 = vmatprep.subr.mxu0 0.0
  %2141 = vmatpush1.msra.mxu0 0.0
  %2142 = vmatprep.subr.mxu0 0.0
  %2143 = vmatpush1.msra.mxu0 0.0
  %2144 = vmatprep.subr.mxu0 0.0
  %2145 = vmatpush1.msra.mxu0 0.0
  %2146 = vmatprep.subr.mxu0 0.0
  %2147 = vmatpush1.msra.mxu0 0.0
  %2148 = vmatprep.subr.mxu0 0.0
  %2149 = vmatpush1.msra.mxu0 0.0
  %2150 = vmatprep.subr.mxu0 0.0
  %2151 = vmatpush1.msra.mxu0 0.0
  %2152 = vmatprep.subr.mxu0 0.0
  %2153 = vmatpush1.msra.mxu0 0.0
  %2154 = vmatprep.subr.mxu0 0.0
  %2155 = vmatpush1.msra.mxu0 0.0
  %2156 = vmatprep.subr.mxu0 0.0
  %2157 = vmatpush1.msra.mxu0 0.0
  %2158 = vmatprep.subr.mxu0 0.0
  %2159 = vmatpush1.msra.mxu0 0.0
  %2160 = vmatprep.subr.mxu0 0.0
  %2161 = vmatpush1.msra.mxu0 0.0
  %2162 = vmatprep.subr.mxu0 0.0
  %2163 = vmatpush1.msra.mxu0 0.0
  %2164 = vmatprep.subr.mxu0 0.0
  %2165 = vmatpush1.msra.mxu0 0.0
  %2166 = vmatprep.subr.mxu0 0.0
  %2167 = vmatpush1.msra.mxu0 0.0
  %2168 = vmatprep.subr.mxu0 0.0
  %2169 = vmatpush1.msra.mxu0 0.0
  %2170 = vmatprep.subr.mxu0 0.0
  %2171 = vmatpush1.msra.mxu0 0.0
  %2172 = vmatprep.subr.mxu0 0.0
  %2173 = vmatpush1.msra.mxu0 0.0
  %2174 = vmatprep.subr.mxu0 0.0
  %2175 = vmatpush1.msra.mxu0 0.0
  %2176 = vmatprep.mubr.f32.mxu0 0.0
  %2177 = vmatmul.mubr.f32.gmra.mrb[0].mxu0 %v310
  %v2178 = vpop.f32.mrb[0].mxu0
  %v2179 = vadd.f32 0.0, %v2178
  %v2180 = vpop.f32.mrb[0].mxu0
  %v2181 = vadd.f32 0.0, %v2180
  %2182 = vdwg.mxu0
  %2183 = vmatprep.subr.mxu0 %v2005
  %2184 = vmatpush1.msra.mxu0 %v2004
  %2185 = vmatprep.subr.mxu0 %v2103
  %2186 = vmatpush1.msra.mxu0 %v2102
  %2187 = vmatprep.subr.mxu0 %v2027
  %2188 = vmatpush1.msra.mxu0 %v2026
  %2189 = vmatprep.subr.mxu0 %v2049
  %2190 = vmatpush1.msra.mxu0 %v2048
  %2191 = vmatprep.subr.mxu0 %v1978
  %2192 = vmatpush1.msra.mxu0 %v1977
  %2193 = vmatprep.subr.mxu0 %v2073
  %2194 = vmatpush1.msra.mxu0 %v2072
  %2195 = vmatprep.subr.mxu0 %v2081
  %2196 = vmatpush1.msra.mxu0 %v2080
  %2197 = vmatprep.subr.mxu0 %v2110
  %2198 = vmatpush1.msra.mxu0 %v2103
  %2199 = vmatprep.subr.mxu0 %v2089
  %2200 = vmatpush1.msra.mxu0 %v2088
  %2201 = vmatprep.subr.mxu0 0.0
  %2202 = vmatpush1.msra.mxu0 0.0
  %2203 = vmatprep.subr.mxu0 0.0
  %2204 = vmatpush1.msra.mxu0 0.0
  %2205 = vmatprep.subr.mxu0 0.0
  %2206 = vmatpush1.msra.mxu0 0.0
  %2207 = vmatprep.subr.mxu0 0.0
  %2208 = vmatpush1.msra.mxu0 0.0
  %2209 = vmatprep.subr.mxu0 0.0
  %2210 = vmatpush1.msra.mxu0 0.0
  %2211 = vmatprep.subr.mxu0 0.0
  %2212 = vmatpush1.msra.mxu0 0.0
  %2213 = vmatprep.subr.mxu0 0.0
  %2214 = vmatpush1.msra.mxu0 0.0
  %2215 = vmatprep.subr.mxu0 0.0
  %2216 = vmatpush1.msra.mxu0 0.0
  %2217 = vmatprep.subr.mxu0 0.0
  %2218 = vmatpush1.msra.mxu0 0.0
  %2219 = vmatprep.subr.mxu0 0.0
  %2220 = vmatpush1.msra.mxu0 0.0
  %2221 = vmatprep.subr.mxu0 0.0
  %2222 = vmatpush1.msra.mxu0 0.0
  %2223 = vmatprep.subr.mxu0 0.0
  %2224 = vmatpush1.msra.mxu0 0.0
  %2225 = vmatprep.subr.mxu0 0.0
  %2226 = vmatpush1.msra.mxu0 0.0
  %2227 = vmatprep.subr.mxu0 0.0
  %2228 = vmatpush1.msra.mxu0 0.0
  %2229 = vmatprep.subr.mxu0 0.0
  %2230 = vmatpush1.msra.mxu0 0.0
  %2231 = vmatprep.subr.mxu0 0.0
  %2232 = vmatpush1.msra.mxu0 0.0
  %2233 = vmatprep.subr.mxu0 0.0
  %2234 = vmatpush1.msra.mxu0 0.0
  %2235 = vmatprep.subr.mxu0 0.0
  %2236 = vmatpush1.msra.mxu0 0.0
  %2237 = vmatprep.subr.mxu0 0.0
  %2238 = vmatpush1.msra.mxu0 0.0
  %2239 = vmatprep.subr.mxu0 0.0
  %2240 = vmatpush1.msra.mxu0 0.0
  %2241 = vmatprep.subr.mxu0 0.0
  %2242 = vmatpush1.msra.mxu0 0.0
  %2243 = vmatprep.subr.mxu0 0.0
  %2244 = vmatpush1.msra.mxu0 0.0
  %2245 = vmatprep.subr.mxu0 0.0
  %2246 = vmatpush1.msra.mxu0 0.0
  %2247 = vmatprep.mubr.f32.mxu0 0.0
  %2248 = vmatmul.mubr.f32.gmra.mrb[0].mxu0 %v310
  %v2249 = vpop.f32.mrb[0].mxu0
  %v2250 = vadd.f32 0.0, %v2249
  %v2251 = vpop.f32.mrb[0].mxu0
  %v2252 = vadd.f32 0.0, %v2251
  %2253 = vdwg.mxu0
  %v2254 = vadd.f32 %v2179, %v2181
  %v2255 = vadd.f32 %v2254, %v2250
  %v2256 = vadd.f32 %v2255, %v2252
  %2257 = vadd.xlane.f32.xlu0 %v2256
  %v2258 = vpop.xlane.xlu0 %2257
  %v2259 = vadd.f32 %v1959, %v2258
  %v2260 = vmul.f32 %v2179, %v2179
  %v2261 = vmul.f32 %v2181, %v2181
  %v2262 = vmul.f32 %v2250, %v2250
  %v2263 = vmul.f32 %v2252, %v2252
  %v2264 = vadd.f32 %v2260, %v2261
  %v2265 = vadd.f32 %v2264, %v2262
  %v2266 = vadd.f32 %v2265, %v2263
  %2267 = vadd.xlane.f32.xlu0 %v2266
  %v2268 = vpop.xlane.xlu0 %2267
  %v2269 = vadd.f32 %v1969, %v2268
  %2270 = vst [vmem:[%s4 + $0xc0] sm:$0xff] %v2179
  %2271 = vst [vmem:[%s4 + $0xc8] sm:$0xff] %v2181
  %2272 = vst [vmem:[%s4 + $0xd0] sm:$0xff] %v2250
  %2273 = vst [vmem:[%s4 + $0xd8] sm:$0xff] %v2252
  %v2274 = vld [vmem:[#allocation2 + $0xe0] sm:$0xff]
  %v2275 = vld [vmem:[#allocation2 + $0xe8] sm:$0xff]
  %v2276 = vld [vmem:[#allocation2 + $0xf0] sm:$0xff]
  %v2277 = vld [vmem:[#allocation2 + $0xf8] sm:$0xff]
  %v2278 = vld [vmem:[#allocation2 + $0x100] sm:$0xff]
  %2284 = vrot.lane.b32.xlu0 %v2274, 65
  %v2285 = vpop.permute.xlu0 %2284
  %2286 = vrot.lane.b32.xlu0 %v2275, 65
  %v2287 = vpop.permute.xlu0 %2286
  %2288 = vrot.lane.b32.xlu0 %v2276, 65
  %v2289 = vpop.permute.xlu0 %2288
  %2290 = vrot.lane.b32.xlu0 %v2277, 65
  %v2291 = vpop.permute.xlu0 %2290
  %2292 = vrot.lane.b32.xlu0 %v2278, 65
  %v2293 = vpop.permute.xlu0 %2292
  %v2294 = vsel %vm185, %v2285, %v2287
  %v2295 = vsel %vm185, %v2287, %v2289
  %v2296 = vsel %vm185, %v2289, %v2291
  %v2297 = vsel %vm185, %v2291, %v2293
  %v2302 = vsel %vm156, %v2294, 0.0
  %v2303 = vsel %vm157, %v2295, 0.0
  %v2304 = vsel %vm158, %v2296, 0.0
  %v2305 = vsel %vm159, %v2297, 0.0
  %2306 = vrot.lane.b32.xlu0 %v2274, 63
  %v2307 = vpop.permute.xlu0 %2306
  %2308 = vrot.lane.b32.xlu0 %v2275, 63
  %v2309 = vpop.permute.xlu0 %2308
  %2310 = vrot.lane.b32.xlu0 %v2276, 63
  %v2311 = vpop.permute.xlu0 %2310
  %2312 = vrot.lane.b32.xlu0 %v2277, 63
  %v2313 = vpop.permute.xlu0 %2312
  %2314 = vrot.lane.b32.xlu0 %v2278, 63
  %v2315 = vpop.permute.xlu0 %2314
  %v2316 = vsel %vm208, %v2307, %v2309
  %v2317 = vsel %vm208, %v2309, %v2311
  %v2318 = vsel %vm208, %v2311, %v2313
  %v2319 = vsel %vm208, %v2313, %v2315
  %v2324 = vsel %vm160, %v2316, 0.0
  %v2325 = vsel %vm161, %v2317, 0.0
  %v2326 = vsel %vm162, %v2318, 0.0
  %v2327 = vsel %vm163, %v2319, 0.0
  %2328 = vrot.lane.b32.xlu0 %v2274, 1
  %v2329 = vpop.permute.xlu0 %2328
  %2330 = vrot.lane.b32.xlu0 %v2275, 1
  %v2331 = vpop.permute.xlu0 %2330
  %2332 = vrot.lane.b32.xlu0 %v2276, 1
  %v2333 = vpop.permute.xlu0 %2332
  %2334 = vrot.lane.b32.xlu0 %v2277, 1
  %v2335 = vpop.permute.xlu0 %2334
  %2336 = vrot.lane.b32.xlu0 %v2278, 1
  %v2337 = vpop.permute.xlu0 %2336
  %v2338 = vsel %vm231, %v2329, %v2331
  %v2339 = vsel %vm231, %v2331, %v2333
  %v2340 = vsel %vm231, %v2333, %v2335
  %v2341 = vsel %vm231, %v2335, %v2337
  %v2346 = vsel %vm156, %v2338, 0.0
  %v2347 = vsel %vm157, %v2339, 0.0
  %v2348 = vsel %vm158, %v2340, 0.0
  %v2349 = vsel %vm159, %v2341, 0.0
  %v2350 = vld [vmem:[#allocation2 + $0xe8] sm:$0xff]
  %v2351 = vld [vmem:[#allocation2 + $0xf0] sm:$0xff]
  %v2352 = vld [vmem:[#allocation2 + $0xf8] sm:$0xff]
  %v2353 = vld [vmem:[#allocation2 + $0x100] sm:$0xff]
  %v2354 = vld [vmem:[#allocation2 + $0x108] sm:$0xff]
  %2360 = vrot.lane.b32.xlu0 %v2350, 127
  %v2361 = vpop.permute.xlu0 %2360
  %2362 = vrot.lane.b32.xlu0 %v2351, 127
  %v2363 = vpop.permute.xlu0 %2362
  %2364 = vrot.lane.b32.xlu0 %v2352, 127
  %v2365 = vpop.permute.xlu0 %2364
  %2366 = vrot.lane.b32.xlu0 %v2353, 127
  %v2367 = vpop.permute.xlu0 %2366
  %2368 = vrot.lane.b32.xlu0 %v2354, 127
  %v2369 = vpop.permute.xlu0 %2368
  %v2370 = vsel %vm256, %v2361, %v2363
  %v2371 = vsel %vm256, %v2363, %v2365
  %v2372 = vsel %vm256, %v2365, %v2367
  %v2373 = vsel %vm256, %v2367, %v2369
  %v2378 = vsel %vm160, %v2370, 0.0
  %v2379 = vsel %vm161, %v2371, 0.0
  %v2380 = vsel %vm162, %v2372, 0.0
  %v2381 = vsel %vm163, %v2373, 0.0
  %2382 = vrot.lane.b32.xlu0 %v2350, 65
  %v2383 = vpop.permute.xlu0 %2382
  %2384 = vrot.lane.b32.xlu0 %v2351, 65
  %v2385 = vpop.permute.xlu0 %2384
  %2386 = vrot.lane.b32.xlu0 %v2352, 65
  %v2387 = vpop.permute.xlu0 %2386
  %2388 = vrot.lane.b32.xlu0 %v2353, 65
  %v2389 = vpop.permute.xlu0 %2388
  %2390 = vrot.lane.b32.xlu0 %v2354, 65
  %v2391 = vpop.permute.xlu0 %2390
  %v2392 = vsel %vm185, %v2383, %v2385
  %v2393 = vsel %vm185, %v2385, %v2387
  %v2394 = vsel %vm185, %v2387, %v2389
  %v2395 = vsel %vm185, %v2389, %v2391
  %v2400 = vsel %vm156, %v2392, 0.0
  %v2401 = vsel %vm157, %v2393, 0.0
  %v2402 = vsel %vm158, %v2394, 0.0
  %v2403 = vsel %vm159, %v2395, 0.0
  %2404 = vrot.lane.b32.xlu0 %v2350, 63
  %v2405 = vpop.permute.xlu0 %2404
  %2406 = vrot.lane.b32.xlu0 %v2351, 63
  %v2407 = vpop.permute.xlu0 %2406
  %2408 = vrot.lane.b32.xlu0 %v2352, 63
  %v2409 = vpop.permute.xlu0 %2408
  %2410 = vrot.lane.b32.xlu0 %v2353, 63
  %v2411 = vpop.permute.xlu0 %2410
  %2412 = vrot.lane.b32.xlu0 %v2354, 63
  %v2413 = vpop.permute.xlu0 %2412
  %v2414 = vsel %vm208, %v2405, %v2407
  %v2415 = vsel %vm208, %v2407, %v2409
  %v2416 = vsel %vm208, %v2409, %v2411
  %v2417 = vsel %vm208, %v2411, %v2413
  %v2422 = vsel %vm160, %v2414, 0.0
  %v2423 = vsel %vm161, %v2415, 0.0
  %v2424 = vsel %vm162, %v2416, 0.0
  %v2425 = vsel %vm163, %v2417, 0.0
  %2426 = vrot.lane.b32.xlu0 %v2274, 64
  %v2427 = vpop.permute.xlu0 %2426
  %2428 = vrot.lane.b32.xlu0 %v2275, 64
  %v2429 = vpop.permute.xlu0 %2428
  %2430 = vrot.lane.b32.xlu0 %v2276, 64
  %v2431 = vpop.permute.xlu0 %2430
  %2432 = vrot.lane.b32.xlu0 %v2277, 64
  %v2433 = vpop.permute.xlu0 %2432
  %2434 = vrot.lane.b32.xlu0 %v2278, 64
  %v2435 = vpop.permute.xlu0 %2434
  %v2436 = vsel %vm295, %v2427, %v2429
  %v2437 = vsel %vm295, %v2429, %v2431
  %v2438 = vsel %vm295, %v2431, %v2433
  %v2439 = vsel %vm295, %v2433, %v2435
  %2444 = vrot.lane.b32.xlu0 %v2350, 64
  %v2445 = vpop.permute.xlu0 %2444
  %2446 = vrot.lane.b32.xlu0 %v2351, 64
  %v2447 = vpop.permute.xlu0 %2446
  %2448 = vrot.lane.b32.xlu0 %v2352, 64
  %v2449 = vpop.permute.xlu0 %2448
  %2450 = vrot.lane.b32.xlu0 %v2353, 64
  %v2451 = vpop.permute.xlu0 %2450
  %2452 = vrot.lane.b32.xlu0 %v2354, 64
  %v2453 = vpop.permute.xlu0 %2452
  %v2454 = vsel %vm295, %v2445, %v2447
  %v2455 = vsel %vm295, %v2447, %v2449
  %v2456 = vsel %vm295, %v2449, %v2451
  %v2457 = vsel %vm295, %v2451, %v2453
  %2462 = vmatprep.subr.mxu0 %v2303
  %2463 = vmatpush1.msra.mxu0 %v2302
  %2464 = vmatprep.subr.mxu0 %v2437
  %2465 = vmatpush1.msra.mxu0 %v2436
  %2466 = vmatprep.subr.mxu0 %v2325
  %2467 = vmatpush1.msra.mxu0 %v2324
  %2468 = vmatprep.subr.mxu0 %v2347
  %2469 = vmatpush1.msra.mxu0 %v2346
  %2470 = vmatprep.subr.mxu0 %v2276
  %2471 = vmatpush1.msra.mxu0 %v2275
  %2472 = vmatprep.subr.mxu0 %v2379
  %2473 = vmatpush1.msra.mxu0 %v2378
  %2474 = vmatprep.subr.mxu0 %v2401
  %2475 = vmatpush1.msra.mxu0 %v2400
  %2476 = vmatprep.subr.mxu0 %v2455
  %2477 = vmatpush1.msra.mxu0 %v2454
  %2478 = vmatprep.subr.mxu0 %v2423
  %2479 = vmatpush1.msra.mxu0 %v2422
  %2480 = vmatprep.subr.mxu0 0.0
  %2481 = vmatpush1.msra.mxu0 0.0
  %2482 = vmatprep.subr.mxu0 0.0
  %2483 = vmatpush1.msra.mxu0 0.0
  %2484 = vmatprep.subr.mxu0 0.0
  %2485 = vmatpush1.msra.mxu0 0.0
  %2486 = vmatprep.subr.mxu0 0.0
  %2487 = vmatpush1.msra.mxu0 0.0
  %2488 = vmatprep.subr.mxu0 0.0
  %2489 = vmatpush1.msra.mxu0 0.0
  %2490 = vmatprep.subr.mxu0 0.0
  %2491 = vmatpush1.msra.mxu0 0.0
  %2492 = vmatprep.subr.mxu0 0.0
  %2493 = vmatpush1.msra.mxu0 0.0
  %2494 = vmatprep.subr.mxu0 0.0
  %2495 = vmatpush1.msra.mxu0 0.0
  %2496 = vmatprep.subr.mxu0 0.0
  %2497 = vmatpush1.msra.mxu0 0.0
  %2498 = vmatprep.subr.mxu0 0.0
  %2499 = vmatpush1.msra.mxu0 0.0
  %2500 = vmatprep.subr.mxu0 0.0
  %2501 = vmatpush1.msra.mxu0 0.0
  %2502 = vmatprep.subr.mxu0 0.0
  %2503 = vmatpush1.msra.mxu0 0.0
  %2504 = vmatprep.subr.mxu0 0.0
  %2505 = vmatpush1.msra.mxu0 0.0
  %2506 = vmatprep.subr.mxu0 0.0
  %2507 = vmatpush1.msra.mxu0 0.0
  %2508 = vmatprep.subr.mxu0 0.0
  %2509 = vmatpush1.msra.mxu0 0.0
  %2510 = vmatprep.subr.mxu0 0.0
  %2511 = vmatpush1.msra.mxu0 0.0
  %2512 = vmatprep.subr.mxu0 0.0
  %2513 = vmatpush1.msra.mxu0 0.0
  %2514 = vmatprep.subr.mxu0 0.0
  %2515 = vmatpush1.msra.mxu0 0.0
  %2516 = vmatprep.subr.mxu0 0.0
  %2517 = vmatpush1.msra.mxu0 0.0
  %2518 = vmatprep.subr.mxu0 0.0
  %2519 = vmatpush1.msra.mxu0 0.0
  %2520 = vmatprep.subr.mxu0 0.0
  %2521 = vmatpush1.msra.mxu0 0.0
  %2522 = vmatprep.subr.mxu0 0.0
  %2523 = vmatpush1.msra.mxu0 0.0
  %2524 = vmatprep.subr.mxu0 0.0
  %2525 = vmatpush1.msra.mxu0 0.0
  %2526 = vmatprep.mubr.f32.mxu0 0.0
  %2527 = vmatmul.mubr.f32.gmra.mrb[0].mxu0 %v310
  %v2528 = vpop.f32.mrb[0].mxu0
  %v2529 = vadd.f32 0.0, %v2528
  %v2530 = vpop.f32.mrb[0].mxu0
  %v2531 = vadd.f32 0.0, %v2530
  %2532 = vdwg.mxu0
  %2533 = vmatprep.subr.mxu0 %v2305
  %2534 = vmatpush1.msra.mxu0 %v2304
  %2535 = vmatprep.subr.mxu0 %v2439
  %2536 = vmatpush1.msra.mxu0 %v2438
  %2537 = vmatprep.subr.mxu0 %v2327
  %2538 = vmatpush1.msra.mxu0 %v2326
  %2539 = vmatprep.subr.mxu0 %v2349
  %2540 = vmatpush1.msra.mxu0 %v2348
  %2541 = vmatprep.subr.mxu0 %v2278
  %2542 = vmatpush1.msra.mxu0 %v2277
  %2543 = vmatprep.subr.mxu0 %v2381
  %2544 = vmatpush1.msra.mxu0 %v2380
  %2545 = vmatprep.subr.mxu0 %v2403
  %2546 = vmatpush1.msra.mxu0 %v2402
  %2547 = vmatprep.subr.mxu0 %v2457
  %2548 = vmatpush1.msra.mxu0 %v2456
  %2549 = vmatprep.subr.mxu0 %v2425
  %2550 = vmatpush1.msra.mxu0 %v2424
  %2551 = vmatprep.subr.mxu0 0.0
  %2552 = vmatpush1.msra.mxu0 0.0
  %2553 = vmatprep.subr.mxu0 0.0
  %2554 = vmatpush1.msra.mxu0 0.0
  %2555 = vmatprep.subr.mxu0 0.0
  %2556 = vmatpush1.msra.mxu0 0.0
  %2557 = vmatprep.subr.mxu0 0.0
  %2558 = vmatpush1.msra.mxu0 0.0
  %2559 = vmatprep.subr.mxu0 0.0
  %2560 = vmatpush1.msra.mxu0 0.0
  %2561 = vmatprep.subr.mxu0 0.0
  %2562 = vmatpush1.msra.mxu0 0.0
  %2563 = vmatprep.subr.mxu0 0.0
  %2564 = vmatpush1.msra.mxu0 0.0
  %2565 = vmatprep.subr.mxu0 0.0
  %2566 = vmatpush1.msra.mxu0 0.0
  %2567 = vmatprep.subr.mxu0 0.0
  %2568 = vmatpush1.msra.mxu0 0.0
  %2569 = vmatprep.subr.mxu0 0.0
  %2570 = vmatpush1.msra.mxu0 0.0
  %2571 = vmatprep.subr.mxu0 0.0
  %2572 = vmatpush1.msra.mxu0 0.0
  %2573 = vmatprep.subr.mxu0 0.0
  %2574 = vmatpush1.msra.mxu0 0.0
  %2575 = vmatprep.subr.mxu0 0.0
  %2576 = vmatpush1.msra.mxu0 0.0
  %2577 = vmatprep.subr.mxu0 0.0
  %2578 = vmatpush1.msra.mxu0 0.0
  %2579 = vmatprep.subr.mxu0 0.0
  %2580 = vmatpush1.msra.mxu0 0.0
  %2581 = vmatprep.subr.mxu0 0.0
  %2582 = vmatpush1.msra.mxu0 0.0
  %2583 = vmatprep.subr.mxu0 0.0
  %2584 = vmatpush1.msra.mxu0 0.0
  %2585 = vmatprep.subr.mxu0 0.0
  %2586 = vmatpush1.msra.mxu0 0.0
  %2587 = vmatprep.subr.mxu0 0.0
  %2588 = vmatpush1.msra.mxu0 0.0
  %2589 = vmatprep.subr.mxu0 0.0
  %2590 = vmatpush1.msra.mxu0 0.0
  %2591 = vmatprep.subr.mxu0 0.0
  %2592 = vmatpush1.msra.mxu0 0.0
  %2593 = vmatprep.subr.mxu0 0.0
  %2594 = vmatpush1.msra.mxu0 0.0
  %2595 = vmatprep.subr.mxu0 0.0
  %2596 = vmatpush1.msra.mxu0 0.0
  %2597 = vmatprep.mubr.f32.mxu0 0.0
  %2598 = vmatmul.mubr.f32.gmra.mrb[0].mxu0 %v310
  %v2599 = vpop.f32.mrb[0].mxu0
  %v2600 = vadd.f32 0.0, %v2599
  %v2601 = vpop.f32.mrb[0].mxu0
  %v2602 = vadd.f32 0.0, %v2601
  %2603 = vdwg.mxu0
  %v2604 = vadd.f32 %v2529, %v2531
  %v2605 = vadd.f32 %v2604, %v2600
  %v2606 = vadd.f32 %v2605, %v2602
  %2607 = vadd.xlane.f32.xlu0 %v2606
  %v2608 = vpop.xlane.xlu0 %2607
  %v2609 = vadd.f32 %v2259, %v2608
  %v2610 = vmul.f32 %v2529, %v2529
  %v2611 = vmul.f32 %v2531, %v2531
  %v2612 = vmul.f32 %v2600, %v2600
  %v2613 = vmul.f32 %v2602, %v2602
  %v2614 = vadd.f32 %v2610, %v2611
  %v2615 = vadd.f32 %v2614, %v2612
  %v2616 = vadd.f32 %v2615, %v2613
  %2617 = vadd.xlane.f32.xlu0 %v2616
  %v2618 = vpop.xlane.xlu0 %2617
  %v2619 = vadd.f32 %v2269, %v2618
  %2620 = vst [vmem:[%s4 + $0xe0] sm:$0xff] %v2529
  %2621 = vst [vmem:[%s4 + $0xe8] sm:$0xff] %v2531
  %2622 = vst [vmem:[%s4 + $0xf0] sm:$0xff] %v2600
  %2623 = vst [vmem:[%s4 + $0xf8] sm:$0xff] %v2602
  %v2624 = vmul.f32 %v2609, 0.00024414063
  %v2625 = vmul.f32 %v2619, 0.00024414063
  %v2626 = vmul.f32 %v2624, %v2624
  %v2627 = vsub.f32 %v2625, %v2626
  %v2628 = vld [vmem:[%s2] sm:$0xff]
  %v2629 = vadd.f32 %v2627, 1e-05
  %v2630 = vrsqrt.pop %v2629
  %v2631 = vmul.f32 %v2628, %v2630
  %v2632 = vld [vmem:[%s3] sm:$0xff]
  %v2633 = vsub.f32 %v2632, 2.0
  %v2634 = vmul.f32 %v2624, %v2631
  %v2635 = vsub.f32 %v2633, %v2634
  %2637 = vset.pattern.permute.xlu0 0
  %2638 = vperm.xlu0 %2637, %v2631
  %v2639 = vpop.permute.xlu0 %2638
  %2642 = vset.pattern.permute.xlu0 0
  %2643 = vperm.xlu0 %2642, %v2635
  %v2644 = vpop.permute.xlu0 %2643
  %v2646 = vld [vmem:[%s4] sm:$0xff]
  %v2647 = vld [vmem:[%s4 + $0x8] sm:$0xff]
  %v2648 = vld [vmem:[%s4 + $0x10] sm:$0xff]
  %v2649 = vld [vmem:[%s4 + $0x18] sm:$0xff]
  %v2650 = vmul.f32 %v2646, %v2639
  %v2651 = vmul.f32 %v2647, %v2639
  %v2652 = vmul.f32 %v2648, %v2639
  %v2653 = vmul.f32 %v2649, %v2639
  %v2654 = vadd.f32 %v2650, %v2644
  %v2655 = vadd.f32 %v2651, %v2644
  %v2656 = vadd.f32 %v2652, %v2644
  %v2657 = vadd.f32 %v2653, %v2644
  %v2658 = vmax.f32 %v2654, 0.0
  %v2659 = vmax.f32 %v2655, 0.0
  %v2660 = vmax.f32 %v2656, 0.0
  %v2661 = vmax.f32 %v2657, 0.0
  %2662 = vst [vmem:[%s4] sm:$0xff] %v2658
  %2663 = vst [vmem:[%s4 + $0x8] sm:$0xff] %v2659
  %2664 = vst [vmem:[%s4 + $0x10] sm:$0xff] %v2660
  %2665 = vst [vmem:[%s4 + $0x18] sm:$0xff] %v2661
  %v2666 = vld [vmem:[%s4 + $0x20] sm:$0xff]
  %v2667 = vld [vmem:[%s4 + $0x28] sm:$0xff]
  %v2668 = vld [vmem:[%s4 + $0x30] sm:$0xff]
  %v2669 = vld [vmem:[%s4 + $0x38] sm:$0xff]
  %v2670 = vmul.f32 %v2666, %v2639
  %v2671 = vmul.f32 %v2667, %v2639
  %v2672 = vmul.f32 %v2668, %v2639
  %v2673 = vmul.f32 %v2669, %v2639
  %v2674 = vadd.f32 %v2670, %v2644
  %v2675 = vadd.f32 %v2671, %v2644
  %v2676 = vadd.f32 %v2672, %v2644
  %v2677 = vadd.f32 %v2673, %v2644
  %v2678 = vmax.f32 %v2674, 0.0
  %v2679 = vmax.f32 %v2675, 0.0
  %v2680 = vmax.f32 %v2676, 0.0
  %v2681 = vmax.f32 %v2677, 0.0
  %2682 = vst [vmem:[%s4 + $0x20] sm:$0xff] %v2678
  %2683 = vst [vmem:[%s4 + $0x28] sm:$0xff] %v2679
  %2684 = vst [vmem:[%s4 + $0x30] sm:$0xff] %v2680
  %2685 = vst [vmem:[%s4 + $0x38] sm:$0xff] %v2681
  %v2686 = vld [vmem:[%s4 + $0x40] sm:$0xff]
  %v2687 = vld [vmem:[%s4 + $0x48] sm:$0xff]
  %v2688 = vld [vmem:[%s4 + $0x50] sm:$0xff]
  %v2689 = vld [vmem:[%s4 + $0x58] sm:$0xff]
  %v2690 = vmul.f32 %v2686, %v2639
  %v2691 = vmul.f32 %v2687, %v2639
  %v2692 = vmul.f32 %v2688, %v2639
  %v2693 = vmul.f32 %v2689, %v2639
  %v2694 = vadd.f32 %v2690, %v2644
  %v2695 = vadd.f32 %v2691, %v2644
  %v2696 = vadd.f32 %v2692, %v2644
  %v2697 = vadd.f32 %v2693, %v2644
  %v2698 = vmax.f32 %v2694, 0.0
  %v2699 = vmax.f32 %v2695, 0.0
  %v2700 = vmax.f32 %v2696, 0.0
  %v2701 = vmax.f32 %v2697, 0.0
  %2702 = vst [vmem:[%s4 + $0x40] sm:$0xff] %v2698
  %2703 = vst [vmem:[%s4 + $0x48] sm:$0xff] %v2699
  %2704 = vst [vmem:[%s4 + $0x50] sm:$0xff] %v2700
  %2705 = vst [vmem:[%s4 + $0x58] sm:$0xff] %v2701
  %v2706 = vld [vmem:[%s4 + $0x60] sm:$0xff]
  %v2707 = vld [vmem:[%s4 + $0x68] sm:$0xff]
  %v2708 = vld [vmem:[%s4 + $0x70] sm:$0xff]
  %v2709 = vld [vmem:[%s4 + $0x78] sm:$0xff]
  %v2710 = vmul.f32 %v2706, %v2639
  %v2711 = vmul.f32 %v2707, %v2639
  %v2712 = vmul.f32 %v2708, %v2639
  %v2713 = vmul.f32 %v2709, %v2639
  %v2714 = vadd.f32 %v2710, %v2644
  %v2715 = vadd.f32 %v2711, %v2644
  %v2716 = vadd.f32 %v2712, %v2644
  %v2717 = vadd.f32 %v2713, %v2644
  %v2718 = vmax.f32 %v2714, 0.0
  %v2719 = vmax.f32 %v2715, 0.0
  %v2720 = vmax.f32 %v2716, 0.0
  %v2721 = vmax.f32 %v2717, 0.0
  %2722 = vst [vmem:[%s4 + $0x60] sm:$0xff] %v2718
  %2723 = vst [vmem:[%s4 + $0x68] sm:$0xff] %v2719
  %2724 = vst [vmem:[%s4 + $0x70] sm:$0xff] %v2720
  %2725 = vst [vmem:[%s4 + $0x78] sm:$0xff] %v2721
  %v2726 = vld [vmem:[%s4 + $0x80] sm:$0xff]
  %v2727 = vld [vmem:[%s4 + $0x88] sm:$0xff]
  %v2728 = vld [vmem:[%s4 + $0x90] sm:$0xff]
  %v2729 = vld [vmem:[%s4 + $0x98] sm:$0xff]
  %v2730 = vmul.f32 %v2726, %v2639
  %v2731 = vmul.f32 %v2727, %v2639
  %v2732 = vmul.f32 %v2728, %v2639
  %v2733 = vmul.f32 %v2729, %v2639
  %v2734 = vadd.f32 %v2730, %v2644
  %v2735 = vadd.f32 %v2731, %v2644
  %v2736 = vadd.f32 %v2732, %v2644
  %v2737 = vadd.f32 %v2733, %v2644
  %v2738 = vmax.f32 %v2734, 0.0
  %v2739 = vmax.f32 %v2735, 0.0
  %v2740 = vmax.f32 %v2736, 0.0
  %v2741 = vmax.f32 %v2737, 0.0
  %2742 = vst [vmem:[%s4 + $0x80] sm:$0xff] %v2738
  %2743 = vst [vmem:[%s4 + $0x88] sm:$0xff] %v2739
  %2744 = vst [vmem:[%s4 + $0x90] sm:$0xff] %v2740
  %2745 = vst [vmem:[%s4 + $0x98] sm:$0xff] %v2741
  %v2746 = vld [vmem:[%s4 + $0xa0] sm:$0xff]
  %v2747 = vld [vmem:[%s4 + $0xa8] sm:$0xff]
  %v2748 = vld [vmem:[%s4 + $0xb0] sm:$0xff]
  %v2749 = vld [vmem:[%s4 + $0xb8] sm:$0xff]
  %v2750 = vmul.f32 %v2746, %v2639
  %v2751 = vmul.f32 %v2747, %v2639
  %v2752 = vmul.f32 %v2748, %v2639
  %v2753 = vmul.f32 %v2749, %v2639
  %v2754 = vadd.f32 %v2750, %v2644
  %v2755 = vadd.f32 %v2751, %v2644
  %v2756 = vadd.f32 %v2752, %v2644
  %v2757 = vadd.f32 %v2753, %v2644
  %v2758 = vmax.f32 %v2754, 0.0
  %v2759 = vmax.f32 %v2755, 0.0
  %v2760 = vmax.f32 %v2756, 0.0
  %v2761 = vmax.f32 %v2757, 0.0
  %2762 = vst [vmem:[%s4 + $0xa0] sm:$0xff] %v2758
  %2763 = vst [vmem:[%s4 + $0xa8] sm:$0xff] %v2759
  %2764 = vst [vmem:[%s4 + $0xb0] sm:$0xff] %v2760
  %2765 = vst [vmem:[%s4 + $0xb8] sm:$0xff] %v2761
  %v2766 = vld [vmem:[%s4 + $0xc0] sm:$0xff]
  %v2767 = vld [vmem:[%s4 + $0xc8] sm:$0xff]
  %v2768 = vld [vmem:[%s4 + $0xd0] sm:$0xff]
  %v2769 = vld [vmem:[%s4 + $0xd8] sm:$0xff]
  %v2770 = vmul.f32 %v2766, %v2639
  %v2771 = vmul.f32 %v2767, %v2639
  %v2772 = vmul.f32 %v2768, %v2639
  %v2773 = vmul.f32 %v2769, %v2639
  %v2774 = vadd.f32 %v2770, %v2644
  %v2775 = vadd.f32 %v2771, %v2644
  %v2776 = vadd.f32 %v2772, %v2644
  %v2777 = vadd.f32 %v2773, %v2644
  %v2778 = vmax.f32 %v2774, 0.0
  %v2779 = vmax.f32 %v2775, 0.0
  %v2780 = vmax.f32 %v2776, 0.0
  %v2781 = vmax.f32 %v2777, 0.0
  %2782 = vst [vmem:[%s4 + $0xc0] sm:$0xff] %v2778
  %2783 = vst [vmem:[%s4 + $0xc8] sm:$0xff] %v2779
  %2784 = vst [vmem:[%s4 + $0xd0] sm:$0xff] %v2780
  %2785 = vst [vmem:[%s4 + $0xd8] sm:$0xff] %v2781
  %v2786 = vld [vmem:[%s4 + $0xe0] sm:$0xff]
  %v2787 = vld [vmem:[%s4 + $0xe8] sm:$0xff]
  %v2788 = vld [vmem:[%s4 + $0xf0] sm:$0xff]
  %v2789 = vld [vmem:[%s4 + $0xf8] sm:$0xff]
  %v2790 = vmul.f32 %v2786, %v2639
  %v2791 = vmul.f32 %v2787, %v2639
  %v2792 = vmul.f32 %v2788, %v2639
  %v2793 = vmul.f32 %v2789, %v2639
  %v2794 = vadd.f32 %v2790, %v2644
  %v2795 = vadd.f32 %v2791, %v2644
  %v2796 = vadd.f32 %v2792, %v2644
  %v2797 = vadd.f32 %v2793, %v2644
  %v2798 = vmax.f32 %v2794, 0.0
  %v2799 = vmax.f32 %v2795, 0.0
  %v2800 = vmax.f32 %v2796, 0.0
  %v2801 = vmax.f32 %v2797, 0.0
  %2802 = vst [vmem:[%s4 + $0xe0] sm:$0xff] %v2798
  %2803 = vst [vmem:[%s4 + $0xe8] sm:$0xff] %v2799
  %2804 = vst [vmem:[%s4 + $0xf0] sm:$0xff] %v2800
  %2805 = vst [vmem:[%s4 + $0xf8] sm:$0xff] %v2801
  // Predicated region
  $region18: #{conv_bn_sub_relu.1} parent=0 // pred_check
    _
  $region19: #{conv_bn_sub_relu.1} parent=0 // pred_check_branch
    %2807 = sbr.rel (0) target = $region21
  $region20: #{conv_bn_sub_relu.1} parent=0 // pred_region
    _
  $region21: #{conv_bn_sub_relu.1} parent=0 // pred_fallthru
    _
  // Predicated region
  $region22: #{conv_bn_sub_relu.1} parent=0 // pred_check
    _
  $region23: #{conv_bn_sub_relu.1} parent=0 // pred_check_branch
    %2809 = sbr.rel (0) target = $region25
  $region24: #{conv_bn_sub_relu.1} parent=0 // pred_region
    _
  $region25: #{conv_bn_sub_relu.1} parent=0 // pred_fallthru
    _

</llo_original>
